<compile_context>
chip_gen: v7x
topology: tpu7x:2x2x1
jax: 0.10.0
libtpu: 0.0.40
codegen_flags: <defaults>
</compile_context>

<pallas_src>
import functools

import jax
import jax.numpy as jnp
from jax import lax
from jax.experimental import pallas as pl
from jax.experimental.pallas import tpu as pltpu


def _resblock_kernel(x_ref, col_ref, w1t_ref, b1_ref, w2t_ref, b2_ref,
                     out_ref, patch_ref, *, H, W, C, NB):
    """One block of NB images per grid step, channels-on-sublanes layout.

    x_ref    : (NB, C, H*W) f32   identity / conv input, spatial flattened on lanes
    col_ref  : (1, H*W)     i32   column-in-row index (p % W), precomputed in wrapper
    w*t_ref  : (C, 9*C)     bf16  conv weights, (ky, kx, ci) flattened on last dim
    b*_ref   : (C, 1)       f32   biases (broadcast along lanes)
    out_ref  : (NB, C, H*W)       lane-dense store
    patch_ref: (9*C, NB*H*W) bf16 VMEM scratch im2col patch (reused by both convs)
    """
    HW = H * W
    # Flat spatial position p = h*W + w and column index w, both (1, HW).
    pos = lax.broadcasted_iota(jnp.int32, (1, HW), 1)
    col = col_ref[...]
    # Validity masks for the 3x3 taps (None == always valid).
    h_masks = (pos >= W, None, pos < (H - 1) * W)      # dy = 0, 1, 2
    w_masks = (col >= 1, None, col <= W - 2)           # dx = 0, 1, 2

    def fill_patch(act_f32, img):
        # act_f32: (C, HW) f32. Writes the 9 shifted+masked taps into patch_ref.
        for dy in range(3):
            for dx in range(3):
                off = (dy - 1) * W + (dx - 1)           # flat-index tap offset
                if off == 0:
                    tap = act_f32
                else:
                    # tap[p] = act[(p + off) mod HW]  (XLU lane rotation; the
                    # wrapped / out-of-row positions are zeroed by the mask)
                    tap = pltpu.roll(act_f32, (-off) % HW, axis=1)
                hm, wm = h_masks[dy], w_masks[dx]
                mask = hm if wm is None else (wm if hm is None else hm & wm)
                if mask is not None:
                    tap = jnp.where(mask, tap, 0.0)
                t = dy * 3 + dx
                patch_ref[pl.ds(t * C, C), pl.ds(img * HW, HW)] = (
                    tap.astype(jnp.bfloat16))

    # ---- conv1: one (C, 9C) @ (9C, NB*HW) MXU matmul, f32 accumulation ----
    for img in range(NB):
        fill_patch(x_ref[img], img)
    a1 = jnp.dot(w1t_ref[...], patch_ref[...],
                 preferred_element_type=jnp.float32) + b1_ref[...]
    relu1 = jnp.maximum(a1, 0.0)                        # (C, NB*HW) f32, VPU

    # ---- conv2 on the ReLU activation ----
    for img in range(NB):
        fill_patch(relu1[:, img * HW:(img + 1) * HW], img)
    a2 = jnp.dot(w2t_ref[...], patch_ref[...],
                 preferred_element_type=jnp.float32) + b2_ref[...]

    # ---- residual add (f32 identity) + lane-dense store ----
    for img in range(NB):
        out_ref[img] = (x_ref[img] + a2[:, img * HW:(img + 1) * HW]
                        ).astype(out_ref.dtype)


def residual_block_nobn_nchw(x_nchw, w1_hwio, b1, w2_hwio, b2,
                             *, images_per_block=None):
    """PyTorch-facing entry: x in NCHW, conv weights in HWIO (see oihw_to_hwio)."""
    N, C, H, W = x_nchw.shape
    HW = H * W

    if images_per_block is None:
        # Tiny frames: fold images so the grid has at most ~2 steps (feeds both
        # v7x TensorCores, keeps ~0.35us/step overhead negligible on v5e/v6e),
        # while capping the patch scratch size.
        if N > 1 and C * HW * 4 <= (1 << 21):
            nb = max(1, min(N // 2, 4096 // HW if HW <= 4096 else 1))
            while N % nb:
                nb -= 1
        else:
            nb = 1
        images_per_block = nb
    NB = images_per_block
    assert N % NB == 0, "images_per_block must divide the batch"

    x_flat = x_nchw.reshape(N, C, HW)                   # free (contiguous) reshape
    # (ky, kx, ci, co) -> (co, ky*kx*ci): preserves the (ky, kx, ci) flatten order.
    w1t = jnp.transpose(w1_hwio, (3, 0, 1, 2)).reshape(C, 9 * C).astype(jnp.bfloat16)
    w2t = jnp.transpose(w2_hwio, (3, 0, 1, 2)).reshape(C, 9 * C).astype(jnp.bfloat16)
    b1c = b1.reshape(C, 1).astype(jnp.float32)
    b2c = b2.reshape(C, 1).astype(jnp.float32)
    col_idx = (jnp.arange(HW, dtype=jnp.int32) % W).reshape(1, HW)

    kernel = functools.partial(_resblock_kernel, H=H, W=W, C=C, NB=NB)
    out = pl.pallas_call(
        kernel,
        out_shape=jax.ShapeDtypeStruct((N, C, HW), x_nchw.dtype),
        grid_spec=pltpu.PrefetchScalarGridSpec(
            num_scalar_prefetch=0,
            grid=(N // NB,),
            in_specs=[
                pl.BlockSpec((NB, C, HW), lambda n: (n, 0, 0)),   # x
                pl.BlockSpec((1, HW), lambda n: (0, 0)),          # col_idx
                pl.BlockSpec((C, 9 * C), lambda n: (0, 0)),       # w1t
                pl.BlockSpec((C, 1), lambda n: (0, 0)),           # b1
                pl.BlockSpec((C, 9 * C), lambda n: (0, 0)),       # w2t
                pl.BlockSpec((C, 1), lambda n: (0, 0)),           # b2
            ],
            out_specs=pl.BlockSpec((NB, C, HW), lambda n: (n, 0, 0)),
            scratch_shapes=[pltpu.VMEM((9 * C, NB * HW), jnp.bfloat16)],
        ),
        compiler_params=pltpu.CompilerParams(
            dimension_semantics=("parallel",)),
    )(x_flat, col_idx, w1t, b1c, w2t, b2c)
    return out.reshape(N, C, H, W)                      # free reshape back to NCHW


def oihw_to_hwio(w_oihw):
    """Convert a raw PyTorch Conv2d weight (O, I, kH, kW) to HWIO for this kernel."""
    return jnp.transpose(w_oihw, (2, 3, 1, 0))


def _reference_nchw(x_nchw, w1, b1, w2, b2):
    """Pure-JAX f32 reference (lax.conv) matching the PyTorch forward."""
    x = jnp.transpose(x_nchw, (0, 2, 3, 1))
    dn = ("NHWC", "HWIO", "NHWC")
    out = lax.conv_general_dilated(x, w1, (1, 1), "SAME",
                                   dimension_numbers=dn) + b1
    out = jnp.maximum(out, 0.0)
    out = lax.conv_general_dilated(out, w2, (1, 1), "SAME",
                                   dimension_numbers=dn) + b2
    return jnp.transpose(x + out, (0, 3, 1, 2))


def _init_params(key, nf):
    """Kaiming-normal fan_in init (a=0) scaled by 0.1, zero bias — matches
    initialize_weights([conv1, conv2], 0.1). Weights stored as HWIO."""
    k1, k2 = jax.random.split(key)
    fan_in = nf * 3 * 3
    std = (2.0 / fan_in) ** 0.5
    w1 = jax.random.normal(k1, (3, 3, nf, nf), jnp.float32) * std * 0.1
    w2 = jax.random.normal(k2, (3, 3, nf, nf), jnp.float32) * std * 0.1
    b1 = jnp.zeros((nf,), jnp.float32)
    b2 = jnp.zeros((nf,), jnp.float32)
    return w1, b1, w2, b2


if __name__ == "__main__":
    key = jax.random.PRNGKey(0)
    kx, kp = jax.random.split(key)

    N, C, H, W = 2, 64, 16, 16          # nf=64 (module default), small spatial
    x_nchw = jax.random.normal(kx, (N, C, H, W), jnp.float32)
    w1, b1, w2, b2 = _init_params(kp, C)

    y = residual_block_nobn_nchw(x_nchw, w1, b1, w2, b2)
    y = jax.block_until_ready(y)

    # sanity check against the pure-f32 conv reference (kernel uses bf16 MXU
    # operands with f32 accumulation, hence the relaxed tolerance)
    y_ref = _reference_nchw(x_nchw, w1, b1, w2, b2)
    assert y.shape == (N, C, H, W)
    max_err = float(jnp.max(jnp.abs(y - y_ref)))
    assert max_err < 1e-2, f"max abs err {max_err}"

    print("KERNEL_OK")
</pallas_src>

<mosaic_0001>
module attributes {stable_mosaic.version = 11 : i64} {
  func.func @_resblock_kernel(%arg0: i32, %arg1: memref<1x64x256xf32, #tpu.memory_space<vmem>>, %arg2: memref<1x256xi32, #tpu.memory_space<vmem>>, %arg3: memref<64x576xbf16, #tpu.memory_space<vmem>>, %arg4: memref<64x1xf32, #tpu.memory_space<vmem>>, %arg5: memref<64x576xbf16, #tpu.memory_space<vmem>>, %arg6: memref<64x1xf32, #tpu.memory_space<vmem>>, %arg7: memref<1x64x256xf32, #tpu.memory_space<vmem>>, %arg8: memref<576x256xbf16, #tpu.memory_space<vmem>>) attributes {dimension_semantics = [#tpu.dimension_semantics<parallel>], iteration_bounds = array<i64: 2>, scalar_prefetch = 0 : i64, scratch_operands = 1 : i64, tpu.core_type = #tpu.core_type<tc>, window_params = [{transform_indices = @transform_0, window_bounds = array<i64: 1, 64, 256>}, {pipeline_mode = #tpu.pipeline_mode<synchronous>, transform_indices = @transform_1, window_bounds = array<i64: 1, 256>}, {pipeline_mode = #tpu.pipeline_mode<synchronous>, transform_indices = @transform_2, window_bounds = array<i64: 64, 576>}, {pipeline_mode = #tpu.pipeline_mode<synchronous>, transform_indices = @transform_3, window_bounds = array<i64: 64, 1>}, {pipeline_mode = #tpu.pipeline_mode<synchronous>, transform_indices = @transform_4, window_bounds = array<i64: 64, 576>}, {pipeline_mode = #tpu.pipeline_mode<synchronous>, transform_indices = @transform_5, window_bounds = array<i64: 64, 1>}, {transform_indices = @transform_6, window_bounds = array<i64: 1, 64, 256>}]} {
    %0 = tpu.iota {dimensions = array<i32: 1>} : vector<1x256xi32>
    %c0 = arith.constant 0 : index
    %c0_0 = arith.constant 0 : index
    %1 = vector.load %arg2[%c0, %c0_0] : memref<1x256xi32, #tpu.memory_space<vmem>>, vector<1x256xi32>
    %c16_i32 = arith.constant 16 : i32
    %2 = vector.broadcast %c16_i32 : i32 to vector<1x256xi32>
    %3 = arith.cmpi sge, %0, %2 : vector<1x256xi32>
    %c240_i32 = arith.constant 240 : i32
    %4 = vector.broadcast %c240_i32 : i32 to vector<1x256xi32>
    %5 = arith.cmpi slt, %0, %4 : vector<1x256xi32>
    %c1_i32 = arith.constant 1 : i32
    %6 = vector.broadcast %c1_i32 : i32 to vector<1x256xi32>
    %7 = arith.cmpi sge, %1, %6 : vector<1x256xi32>
    %c14_i32 = arith.constant 14 : i32
    %8 = vector.broadcast %c14_i32 : i32 to vector<1x256xi32>
    %9 = arith.cmpi sle, %1, %8 : vector<1x256xi32>
    %c0_1 = arith.constant 0 : index
    %c0_2 = arith.constant 0 : index
    %c0_3 = arith.constant 0 : index
    %10 = vector.load %arg1[%c0_1, %c0_2, %c0_3] : memref<1x64x256xf32, #tpu.memory_space<vmem>>, vector<1x64x256xf32>
    %11 = vector.shape_cast %10 : vector<1x64x256xf32> to vector<64x256xf32>
    %c17_i32 = arith.constant 17 : i32
    %12 = tpu.dynamic_rotate %11 by %c17_i32 dim 1 : vector<64x256xf32>, i32 -> vector<64x256xf32>
    %13 = arith.andi %3, %7 : vector<1x256xi1>
    %cst = arith.constant 0.000000e+00 : f32
    %14 = vector.shape_cast %13 : vector<1x256xi1> to vector<1x256xi1>
    %15 = vector.broadcast %14 : vector<1x256xi1> to vector<64x256xi1>
    %16 = vector.broadcast %cst : f32 to vector<64x256xf32>
    %17 = arith.select %15, %12, %16 : vector<64x256xi1>, vector<64x256xf32>
    %18 = arith.truncf %17 : vector<64x256xf32> to vector<64x256xbf16>
    %c0_4 = arith.constant 0 : index
    %c0_5 = arith.constant 0 : index
    %19 = vector.load %arg8[%c0_4, %c0_5] : memref<576x256xbf16, #tpu.memory_space<vmem>>, vector<64x256xbf16>
    tpu.vector_store %arg8[%c0_4, %c0_5], %18 {strides = array<i32>} : memref<576x256xbf16, #tpu.memory_space<vmem>>, vector<64x256xbf16>,
    %c16_i32_6 = arith.constant 16 : i32
    %20 = tpu.dynamic_rotate %11 by %c16_i32_6 dim 1 : vector<64x256xf32>, i32 -> vector<64x256xf32>
    %cst_7 = arith.constant 0.000000e+00 : f32
    %21 = vector.shape_cast %3 : vector<1x256xi1> to vector<1x256xi1>
    %22 = vector.broadcast %21 : vector<1x256xi1> to vector<64x256xi1>
    %23 = vector.broadcast %cst_7 : f32 to vector<64x256xf32>
    %24 = arith.select %22, %20, %23 : vector<64x256xi1>, vector<64x256xf32>
    %25 = arith.truncf %24 : vector<64x256xf32> to vector<64x256xbf16>
    %c64 = arith.constant 64 : index
    %c0_8 = arith.constant 0 : index
    %26 = vector.load %arg8[%c64, %c0_8] : memref<576x256xbf16, #tpu.memory_space<vmem>>, vector<64x256xbf16>
    tpu.vector_store %arg8[%c64, %c0_8], %25 {strides = array<i32>} : memref<576x256xbf16, #tpu.memory_space<vmem>>, vector<64x256xbf16>,
    %c15_i32 = arith.constant 15 : i32
    %27 = tpu.dynamic_rotate %11 by %c15_i32 dim 1 : vector<64x256xf32>, i32 -> vector<64x256xf32>
    %28 = arith.andi %3, %9 : vector<1x256xi1>
    %cst_9 = arith.constant 0.000000e+00 : f32
    %29 = vector.shape_cast %28 : vector<1x256xi1> to vector<1x256xi1>
    %30 = vector.broadcast %29 : vector<1x256xi1> to vector<64x256xi1>
    %31 = vector.broadcast %cst_9 : f32 to vector<64x256xf32>
    %32 = arith.select %30, %27, %31 : vector<64x256xi1>, vector<64x256xf32>
    %33 = arith.truncf %32 : vector<64x256xf32> to vector<64x256xbf16>
    %c128 = arith.constant 128 : index
    %c0_10 = arith.constant 0 : index
    %34 = vector.load %arg8[%c128, %c0_10] : memref<576x256xbf16, #tpu.memory_space<vmem>>, vector<64x256xbf16>
    tpu.vector_store %arg8[%c128, %c0_10], %33 {strides = array<i32>} : memref<576x256xbf16, #tpu.memory_space<vmem>>, vector<64x256xbf16>,
    %c1_i32_11 = arith.constant 1 : i32
    %35 = tpu.dynamic_rotate %11 by %c1_i32_11 dim 1 : vector<64x256xf32>, i32 -> vector<64x256xf32>
    %cst_12 = arith.constant 0.000000e+00 : f32
    %36 = vector.shape_cast %7 : vector<1x256xi1> to vector<1x256xi1>
    %37 = vector.broadcast %36 : vector<1x256xi1> to vector<64x256xi1>
    %38 = vector.broadcast %cst_12 : f32 to vector<64x256xf32>
    %39 = arith.select %37, %35, %38 : vector<64x256xi1>, vector<64x256xf32>
    %40 = arith.truncf %39 : vector<64x256xf32> to vector<64x256xbf16>
    %c192 = arith.constant 192 : index
    %c0_13 = arith.constant 0 : index
    %41 = vector.load %arg8[%c192, %c0_13] : memref<576x256xbf16, #tpu.memory_space<vmem>>, vector<64x256xbf16>
    tpu.vector_store %arg8[%c192, %c0_13], %40 {strides = array<i32>} : memref<576x256xbf16, #tpu.memory_space<vmem>>, vector<64x256xbf16>,
    %42 = arith.truncf %11 : vector<64x256xf32> to vector<64x256xbf16>
    %c256 = arith.constant 256 : index
    %c0_14 = arith.constant 0 : index
    %43 = vector.load %arg8[%c256, %c0_14] : memref<576x256xbf16, #tpu.memory_space<vmem>>, vector<64x256xbf16>
    tpu.vector_store %arg8[%c256, %c0_14], %42 {strides = array<i32>} : memref<576x256xbf16, #tpu.memory_space<vmem>>, vector<64x256xbf16>,
    %c255_i32 = arith.constant 255 : i32
    %44 = tpu.dynamic_rotate %11 by %c255_i32 dim 1 : vector<64x256xf32>, i32 -> vector<64x256xf32>
    %cst_15 = arith.constant 0.000000e+00 : f32
    %45 = vector.shape_cast %9 : vector<1x256xi1> to vector<1x256xi1>
    %46 = vector.broadcast %45 : vector<1x256xi1> to vector<64x256xi1>
    %47 = vector.broadcast %cst_15 : f32 to vector<64x256xf32>
    %48 = arith.select %46, %44, %47 : vector<64x256xi1>, vector<64x256xf32>
    %49 = arith.truncf %48 : vector<64x256xf32> to vector<64x256xbf16>
    %c320 = arith.constant 320 : index
    %c0_16 = arith.constant 0 : index
    %50 = vector.load %arg8[%c320, %c0_16] : memref<576x256xbf16, #tpu.memory_space<vmem>>, vector<64x256xbf16>
    tpu.vector_store %arg8[%c320, %c0_16], %49 {strides = array<i32>} : memref<576x256xbf16, #tpu.memory_space<vmem>>, vector<64x256xbf16>,
    %c241_i32 = arith.constant 241 : i32
    %51 = tpu.dynamic_rotate %11 by %c241_i32 dim 1 : vector<64x256xf32>, i32 -> vector<64x256xf32>
    %52 = arith.andi %5, %7 : vector<1x256xi1>
    %cst_17 = arith.constant 0.000000e+00 : f32
    %53 = vector.shape_cast %52 : vector<1x256xi1> to vector<1x256xi1>
    %54 = vector.broadcast %53 : vector<1x256xi1> to vector<64x256xi1>
    %55 = vector.broadcast %cst_17 : f32 to vector<64x256xf32>
    %56 = arith.select %54, %51, %55 : vector<64x256xi1>, vector<64x256xf32>
    %57 = arith.truncf %56 : vector<64x256xf32> to vector<64x256xbf16>
    %c384 = arith.constant 384 : index
    %c0_18 = arith.constant 0 : index
    %58 = vector.load %arg8[%c384, %c0_18] : memref<576x256xbf16, #tpu.memory_space<vmem>>, vector<64x256xbf16>
    tpu.vector_store %arg8[%c384, %c0_18], %57 {strides = array<i32>} : memref<576x256xbf16, #tpu.memory_space<vmem>>, vector<64x256xbf16>,
    %c240_i32_19 = arith.constant 240 : i32
    %59 = tpu.dynamic_rotate %11 by %c240_i32_19 dim 1 : vector<64x256xf32>, i32 -> vector<64x256xf32>
    %cst_20 = arith.constant 0.000000e+00 : f32
    %60 = vector.shape_cast %5 : vector<1x256xi1> to vector<1x256xi1>
    %61 = vector.broadcast %60 : vector<1x256xi1> to vector<64x256xi1>
    %62 = vector.broadcast %cst_20 : f32 to vector<64x256xf32>
    %63 = arith.select %61, %59, %62 : vector<64x256xi1>, vector<64x256xf32>
    %64 = arith.truncf %63 : vector<64x256xf32> to vector<64x256xbf16>
    %c448 = arith.constant 448 : index
    %c0_21 = arith.constant 0 : index
    %65 = vector.load %arg8[%c448, %c0_21] : memref<576x256xbf16, #tpu.memory_space<vmem>>, vector<64x256xbf16>
    tpu.vector_store %arg8[%c448, %c0_21], %64 {strides = array<i32>} : memref<576x256xbf16, #tpu.memory_space<vmem>>, vector<64x256xbf16>,
    %c239_i32 = arith.constant 239 : i32
    %66 = tpu.dynamic_rotate %11 by %c239_i32 dim 1 : vector<64x256xf32>, i32 -> vector<64x256xf32>
    %67 = arith.andi %5, %9 : vector<1x256xi1>
    %cst_22 = arith.constant 0.000000e+00 : f32
    %68 = vector.shape_cast %67 : vector<1x256xi1> to vector<1x256xi1>
    %69 = vector.broadcast %68 : vector<1x256xi1> to vector<64x256xi1>
    %70 = vector.broadcast %cst_22 : f32 to vector<64x256xf32>
    %71 = arith.select %69, %66, %70 : vector<64x256xi1>, vector<64x256xf32>
    %72 = arith.truncf %71 : vector<64x256xf32> to vector<64x256xbf16>
    %c512 = arith.constant 512 : index
    %c0_23 = arith.constant 0 : index
    %73 = vector.load %arg8[%c512, %c0_23] : memref<576x256xbf16, #tpu.memory_space<vmem>>, vector<64x256xbf16>
    tpu.vector_store %arg8[%c512, %c0_23], %72 {strides = array<i32>} : memref<576x256xbf16, #tpu.memory_space<vmem>>, vector<64x256xbf16>,
    %c0_24 = arith.constant 0 : index
    %c0_25 = arith.constant 0 : index
    %74 = vector.load %arg3[%c0_24, %c0_25] : memref<64x576xbf16, #tpu.memory_space<vmem>>, vector<64x576xbf16>
    %c0_26 = arith.constant 0 : index
    %c0_27 = arith.constant 0 : index
    %75 = vector.load %arg8[%c0_26, %c0_27] : memref<576x256xbf16, #tpu.memory_space<vmem>>, vector<576x256xbf16>
    %cst_28 = arith.constant dense<0.000000e+00> : vector<64x256xf32>
    %76 = tpu.matmul %74, %75, %cst_28 {dimension_numbers = #tpu.dot_dimension_numbers<[1], [0], [0], [1], [0, 0, 1, 1], [], []>} : vector<64x576xbf16>, vector<576x256xbf16>, vector<64x256xf32> -> vector<64x256xf32>
    %c0_29 = arith.constant 0 : index
    %c0_30 = arith.constant 0 : index
    %77 = vector.load %arg4[%c0_29, %c0_30] : memref<64x1xf32, #tpu.memory_space<vmem>>, vector<64x1xf32>
    %78 = vector.broadcast %77 : vector<64x1xf32> to vector<64x256xf32>
    %79 = arith.addf %76, %78 : vector<64x256xf32>
    %cst_31 = arith.constant 0.000000e+00 : f32
    %80 = vector.broadcast %cst_31 : f32 to vector<64x256xf32>
    %81 = arith.maximumf %79, %80 : vector<64x256xf32>
    %c17_i32_32 = arith.constant 17 : i32
    %82 = tpu.dynamic_rotate %81 by %c17_i32_32 dim 1 : vector<64x256xf32>, i32 -> vector<64x256xf32>
    %83 = arith.andi %3, %7 : vector<1x256xi1>
    %cst_33 = arith.constant 0.000000e+00 : f32
    %84 = vector.shape_cast %83 : vector<1x256xi1> to vector<1x256xi1>
    %85 = vector.broadcast %84 : vector<1x256xi1> to vector<64x256xi1>
    %86 = vector.broadcast %cst_33 : f32 to vector<64x256xf32>
    %87 = arith.select %85, %82, %86 : vector<64x256xi1>, vector<64x256xf32>
    %88 = arith.truncf %87 : vector<64x256xf32> to vector<64x256xbf16>
    %c0_34 = arith.constant 0 : index
    %c0_35 = arith.constant 0 : index
    %89 = vector.load %arg8[%c0_34, %c0_35] : memref<576x256xbf16, #tpu.memory_space<vmem>>, vector<64x256xbf16>
    tpu.vector_store %arg8[%c0_34, %c0_35], %88 {strides = array<i32>} : memref<576x256xbf16, #tpu.memory_space<vmem>>, vector<64x256xbf16>,
    %c16_i32_36 = arith.constant 16 : i32
    %90 = tpu.dynamic_rotate %81 by %c16_i32_36 dim 1 : vector<64x256xf32>, i32 -> vector<64x256xf32>
    %cst_37 = arith.constant 0.000000e+00 : f32
    %91 = vector.shape_cast %3 : vector<1x256xi1> to vector<1x256xi1>
    %92 = vector.broadcast %91 : vector<1x256xi1> to vector<64x256xi1>
    %93 = vector.broadcast %cst_37 : f32 to vector<64x256xf32>
    %94 = arith.select %92, %90, %93 : vector<64x256xi1>, vector<64x256xf32>
    %95 = arith.truncf %94 : vector<64x256xf32> to vector<64x256xbf16>
    %c64_38 = arith.constant 64 : index
    %c0_39 = arith.constant 0 : index
    %96 = vector.load %arg8[%c64_38, %c0_39] : memref<576x256xbf16, #tpu.memory_space<vmem>>, vector<64x256xbf16>
    tpu.vector_store %arg8[%c64_38, %c0_39], %95 {strides = array<i32>} : memref<576x256xbf16, #tpu.memory_space<vmem>>, vector<64x256xbf16>,
    %c15_i32_40 = arith.constant 15 : i32
    %97 = tpu.dynamic_rotate %81 by %c15_i32_40 dim 1 : vector<64x256xf32>, i32 -> vector<64x256xf32>
    %98 = arith.andi %3, %9 : vector<1x256xi1>
    %cst_41 = arith.constant 0.000000e+00 : f32
    %99 = vector.shape_cast %98 : vector<1x256xi1> to vector<1x256xi1>
    %100 = vector.broadcast %99 : vector<1x256xi1> to vector<64x256xi1>
    %101 = vector.broadcast %cst_41 : f32 to vector<64x256xf32>
    %102 = arith.select %100, %97, %101 : vector<64x256xi1>, vector<64x256xf32>
    %103 = arith.truncf %102 : vector<64x256xf32> to vector<64x256xbf16>
    %c128_42 = arith.constant 128 : index
    %c0_43 = arith.constant 0 : index
    %104 = vector.load %arg8[%c128_42, %c0_43] : memref<576x256xbf16, #tpu.memory_space<vmem>>, vector<64x256xbf16>
    tpu.vector_store %arg8[%c128_42, %c0_43], %103 {strides = array<i32>} : memref<576x256xbf16, #tpu.memory_space<vmem>>, vector<64x256xbf16>,
    %c1_i32_44 = arith.constant 1 : i32
    %105 = tpu.dynamic_rotate %81 by %c1_i32_44 dim 1 : vector<64x256xf32>, i32 -> vector<64x256xf32>
    %cst_45 = arith.constant 0.000000e+00 : f32
    %106 = vector.shape_cast %7 : vector<1x256xi1> to vector<1x256xi1>
    %107 = vector.broadcast %106 : vector<1x256xi1> to vector<64x256xi1>
    %108 = vector.broadcast %cst_45 : f32 to vector<64x256xf32>
    %109 = arith.select %107, %105, %108 : vector<64x256xi1>, vector<64x256xf32>
    %110 = arith.truncf %109 : vector<64x256xf32> to vector<64x256xbf16>
    %c192_46 = arith.constant 192 : index
    %c0_47 = arith.constant 0 : index
    %111 = vector.load %arg8[%c192_46, %c0_47] : memref<576x256xbf16, #tpu.memory_space<vmem>>, vector<64x256xbf16>
    tpu.vector_store %arg8[%c192_46, %c0_47], %110 {strides = array<i32>} : memref<576x256xbf16, #tpu.memory_space<vmem>>, vector<64x256xbf16>,
    %112 = arith.truncf %81 : vector<64x256xf32> to vector<64x256xbf16>
    %c256_48 = arith.constant 256 : index
    %c0_49 = arith.constant 0 : index
    %113 = vector.load %arg8[%c256_48, %c0_49] : memref<576x256xbf16, #tpu.memory_space<vmem>>, vector<64x256xbf16>
    tpu.vector_store %arg8[%c256_48, %c0_49], %112 {strides = array<i32>} : memref<576x256xbf16, #tpu.memory_space<vmem>>, vector<64x256xbf16>,
    %c255_i32_50 = arith.constant 255 : i32
    %114 = tpu.dynamic_rotate %81 by %c255_i32_50 dim 1 : vector<64x256xf32>, i32 -> vector<64x256xf32>
    %cst_51 = arith.constant 0.000000e+00 : f32
    %115 = vector.shape_cast %9 : vector<1x256xi1> to vector<1x256xi1>
    %116 = vector.broadcast %115 : vector<1x256xi1> to vector<64x256xi1>
    %117 = vector.broadcast %cst_51 : f32 to vector<64x256xf32>
    %118 = arith.select %116, %114, %117 : vector<64x256xi1>, vector<64x256xf32>
    %119 = arith.truncf %118 : vector<64x256xf32> to vector<64x256xbf16>
    %c320_52 = arith.constant 320 : index
    %c0_53 = arith.constant 0 : index
    %120 = vector.load %arg8[%c320_52, %c0_53] : memref<576x256xbf16, #tpu.memory_space<vmem>>, vector<64x256xbf16>
    tpu.vector_store %arg8[%c320_52, %c0_53], %119 {strides = array<i32>} : memref<576x256xbf16, #tpu.memory_space<vmem>>, vector<64x256xbf16>,
    %c241_i32_54 = arith.constant 241 : i32
    %121 = tpu.dynamic_rotate %81 by %c241_i32_54 dim 1 : vector<64x256xf32>, i32 -> vector<64x256xf32>
    %122 = arith.andi %5, %7 : vector<1x256xi1>
    %cst_55 = arith.constant 0.000000e+00 : f32
    %123 = vector.shape_cast %122 : vector<1x256xi1> to vector<1x256xi1>
    %124 = vector.broadcast %123 : vector<1x256xi1> to vector<64x256xi1>
    %125 = vector.broadcast %cst_55 : f32 to vector<64x256xf32>
    %126 = arith.select %124, %121, %125 : vector<64x256xi1>, vector<64x256xf32>
    %127 = arith.truncf %126 : vector<64x256xf32> to vector<64x256xbf16>
    %c384_56 = arith.constant 384 : index
    %c0_57 = arith.constant 0 : index
    %128 = vector.load %arg8[%c384_56, %c0_57] : memref<576x256xbf16, #tpu.memory_space<vmem>>, vector<64x256xbf16>
    tpu.vector_store %arg8[%c384_56, %c0_57], %127 {strides = array<i32>} : memref<576x256xbf16, #tpu.memory_space<vmem>>, vector<64x256xbf16>,
    %c240_i32_58 = arith.constant 240 : i32
    %129 = tpu.dynamic_rotate %81 by %c240_i32_58 dim 1 : vector<64x256xf32>, i32 -> vector<64x256xf32>
    %cst_59 = arith.constant 0.000000e+00 : f32
    %130 = vector.shape_cast %5 : vector<1x256xi1> to vector<1x256xi1>
    %131 = vector.broadcast %130 : vector<1x256xi1> to vector<64x256xi1>
    %132 = vector.broadcast %cst_59 : f32 to vector<64x256xf32>
    %133 = arith.select %131, %129, %132 : vector<64x256xi1>, vector<64x256xf32>
    %134 = arith.truncf %133 : vector<64x256xf32> to vector<64x256xbf16>
    %c448_60 = arith.constant 448 : index
    %c0_61 = arith.constant 0 : index
    %135 = vector.load %arg8[%c448_60, %c0_61] : memref<576x256xbf16, #tpu.memory_space<vmem>>, vector<64x256xbf16>
    tpu.vector_store %arg8[%c448_60, %c0_61], %134 {strides = array<i32>} : memref<576x256xbf16, #tpu.memory_space<vmem>>, vector<64x256xbf16>,
    %c239_i32_62 = arith.constant 239 : i32
    %136 = tpu.dynamic_rotate %81 by %c239_i32_62 dim 1 : vector<64x256xf32>, i32 -> vector<64x256xf32>
    %137 = arith.andi %5, %9 : vector<1x256xi1>
    %cst_63 = arith.constant 0.000000e+00 : f32
    %138 = vector.shape_cast %137 : vector<1x256xi1> to vector<1x256xi1>
    %139 = vector.broadcast %138 : vector<1x256xi1> to vector<64x256xi1>
    %140 = vector.broadcast %cst_63 : f32 to vector<64x256xf32>
    %141 = arith.select %139, %136, %140 : vector<64x256xi1>, vector<64x256xf32>
    %142 = arith.truncf %141 : vector<64x256xf32> to vector<64x256xbf16>
    %c512_64 = arith.constant 512 : index
    %c0_65 = arith.constant 0 : index
    %143 = vector.load %arg8[%c512_64, %c0_65] : memref<576x256xbf16, #tpu.memory_space<vmem>>, vector<64x256xbf16>
    tpu.vector_store %arg8[%c512_64, %c0_65], %142 {strides = array<i32>} : memref<576x256xbf16, #tpu.memory_space<vmem>>, vector<64x256xbf16>,
    %c0_66 = arith.constant 0 : index
    %c0_67 = arith.constant 0 : index
    %144 = vector.load %arg5[%c0_66, %c0_67] : memref<64x576xbf16, #tpu.memory_space<vmem>>, vector<64x576xbf16>
    %c0_68 = arith.constant 0 : index
    %c0_69 = arith.constant 0 : index
    %145 = vector.load %arg8[%c0_68, %c0_69] : memref<576x256xbf16, #tpu.memory_space<vmem>>, vector<576x256xbf16>
    %cst_70 = arith.constant dense<0.000000e+00> : vector<64x256xf32>
    %146 = tpu.matmul %144, %145, %cst_70 {dimension_numbers = #tpu.dot_dimension_numbers<[1], [0], [0], [1], [0, 0, 1, 1], [], []>} : vector<64x576xbf16>, vector<576x256xbf16>, vector<64x256xf32> -> vector<64x256xf32>
    %c0_71 = arith.constant 0 : index
    %c0_72 = arith.constant 0 : index
    %147 = vector.load %arg6[%c0_71, %c0_72] : memref<64x1xf32, #tpu.memory_space<vmem>>, vector<64x1xf32>
    %148 = vector.broadcast %147 : vector<64x1xf32> to vector<64x256xf32>
    %149 = arith.addf %146, %148 : vector<64x256xf32>
    %c0_73 = arith.constant 0 : index
    %c0_74 = arith.constant 0 : index
    %c0_75 = arith.constant 0 : index
    %150 = vector.load %arg1[%c0_73, %c0_74, %c0_75] : memref<1x64x256xf32, #tpu.memory_space<vmem>>, vector<1x64x256xf32>
    %151 = vector.shape_cast %150 : vector<1x64x256xf32> to vector<64x256xf32>
    %152 = arith.addf %151, %149 : vector<64x256xf32>
    %c0_76 = arith.constant 0 : index
    %c0_77 = arith.constant 0 : index
    %c0_78 = arith.constant 0 : index
    %153 = vector.load %arg7[%c0_76, %c0_77, %c0_78] : memref<1x64x256xf32, #tpu.memory_space<vmem>>, vector<1x64x256xf32>
    %154 = vector.shape_cast %153 : vector<1x64x256xf32> to vector<64x256xf32>
    %155 = vector.shape_cast %152 : vector<64x256xf32> to vector<1x64x256xf32>
    tpu.vector_store %arg7[%c0_76, %c0_77, %c0_78], %155 {strides = array<i32>} : memref<1x64x256xf32, #tpu.memory_space<vmem>>, vector<1x64x256xf32>,
    return
  }
  func.func @transform_0(%arg0: i32) -> (i32, i32, i32) {
    %c0_i32 = arith.constant 0 : i32
    %c0_i32_0 = arith.constant 0 : i32
    %c0_i32_1 = arith.constant 0 : i32
    return %arg0, %c0_i32, %c0_i32_0 : i32, i32, i32
  }
  func.func @transform_1(%arg0: i32) -> (i32, i32) {
    %c0_i32 = arith.constant 0 : i32
    %c0_i32_0 = arith.constant 0 : i32
    %c0_i32_1 = arith.constant 0 : i32
    return %c0_i32, %c0_i32_0 : i32, i32
  }
  func.func @transform_2(%arg0: i32) -> (i32, i32) {
    %c0_i32 = arith.constant 0 : i32
    %c0_i32_0 = arith.constant 0 : i32
    %c0_i32_1 = arith.constant 0 : i32
    return %c0_i32, %c0_i32_0 : i32, i32
  }
  func.func @transform_3(%arg0: i32) -> (i32, i32) {
    %c0_i32 = arith.constant 0 : i32
    %c0_i32_0 = arith.constant 0 : i32
    %c0_i32_1 = arith.constant 0 : i32
    return %c0_i32, %c0_i32_0 : i32, i32
  }
  func.func @transform_4(%arg0: i32) -> (i32, i32) {
    %c0_i32 = arith.constant 0 : i32
    %c0_i32_0 = arith.constant 0 : i32
    %c0_i32_1 = arith.constant 0 : i32
    return %c0_i32, %c0_i32_0 : i32, i32
  }
  func.func @transform_5(%arg0: i32) -> (i32, i32) {
    %c0_i32 = arith.constant 0 : i32
    %c0_i32_0 = arith.constant 0 : i32
    %c0_i32_1 = arith.constant 0 : i32
    return %c0_i32, %c0_i32_0 : i32, i32
  }
  func.func @transform_6(%arg0: i32) -> (i32, i32, i32) {
    %c0_i32 = arith.constant 0 : i32
    %c0_i32_0 = arith.constant 0 : i32
    %c0_i32_1 = arith.constant 0 : i32
    return %arg0, %c0_i32, %c0_i32_0 : i32, i32, i32
  }
}

</mosaic_0001>

<llo_original>
// kernel: tpu_custom_call.1
$region0: #{tpu_custom_call.1}
  #allocation0 [shape = 'u32[]', space=smem, size = 0x4, offset = 0x4, fixed_abs, tag = 'smem constant byte address 0x4 - core index']
  #allocation1 [shape = 'u32[144,128]{1,0:T(1,128)}', space=vmem, size = 0x12000, scoped, tag = 'internal scratch']
  #allocation2 [shape = 'bf16[576,256]{1,0:T(16,128)(2,1)}', space=vmem, size = 0x48000, scoped, tag = 'scratch operand']
  %s0 = inlined_call_operand.hbm [shape: f32[2,64,256], index: 0, kind: input, shape index: {}]
  %s1 = inlined_call_operand.vmem [shape: s32[1,256], index: 1, kind: input, shape index: {}]
  %s2 = inlined_call_operand.hbm [shape: bf16[64,576], index: 2, kind: input, shape index: {}]
  %s3 = inlined_call_operand.vmem [shape: f32[64,1], index: 3, kind: input, shape index: {}]
  %s4 = inlined_call_operand.hbm [shape: bf16[64,576], index: 4, kind: input, shape index: {}]
  %s5 = inlined_call_operand.vmem [shape: f32[64,1], index: 5, kind: input, shape index: {}]
  %s6 = inlined_call_operand.hbm [shape: f32[2,64,256], index: 6, kind: output, shape index: {}]
  %s7 = sld [smem:[#allocation0]]
  $region69: #{tpu_custom_call.1} parent=0
    _
  %s9 = ssub.s32 1, %s7
  %s10 = scalar_select 0, %s9, %s7
  $region1: #{tpu_custom_call.1} parent=0
    #allocation3 [shape = 'u8[131072]{0}', space=vmem, size = 0x20000, scoped, tag = 'input window, operand 0']
    #allocation4 [shape = 's32[2]{0}', space=sflag, size = 0x8, scoped, tag = 'scoped memory for tpu_custom_call.1']
    #allocation5 [shape = 's32[2]{0}', space=sflag, size = 0x8, scoped, tag = 'scoped memory for tpu_custom_call.1']
    #allocation6 [shape = 'u8[81920]{0}', space=vmem, size = 0x14000, scoped, tag = 'input window, operand 2, single buffered']
    #allocation7 [shape = 's32[1]{0}', space=sflag, size = 0x4, scoped, tag = 'scoped memory for tpu_custom_call.1']
    #allocation8 [shape = 'u8[81920]{0}', space=vmem, size = 0x14000, scoped, tag = 'input window, operand 4, single buffered']
    #allocation9 [shape = 'u8[131072]{0}', space=vmem, size = 0x20000, scoped, tag = 'output window, operand 0']
    %11 = vsyncpa [#allocation4], 0
    %s12 = scalar_lea.sflag [#allocation4], 1
    %13 = vsyncpa %s12, 0
    %14 = vsyncpa [#allocation7], 0
    %15 = vsyncpa [#allocation5], 0
    %s16 = scalar_lea.sflag [#allocation5], 1
    %17 = vsyncpa %s16, 0
    loop: start=0, step=1, limit=4
    $region2: #{tpu_custom_call.1} parent=1 // loop_pre_header
      _
    $region3: #{tpu_custom_call.1} parent=1 // loop_header
      %s19 = sphi 0, %s23
      %p20 = scmp.ge.s32.totalorder %s19, 4
      %s29 = sphi 0, %s31
      %s32 = sphi 0, %s29
      %s33 = sphi 0, %s32
      %s49 = sphi 0, %s33
      %s53 = sphi 0, %s53
      %s55 = sphi 0, %s53
      %s56 = sphi 0, %s55
      %s70 = sphi 0, %s56
      %s74 = sphi 0, %s74
      %s76 = sphi 0, %s74
      %s77 = sphi 0, %s76
      %s91 = sphi 0, %s77
      %s95 = sphi 0, %s95
      %s97 = sphi 0, %s95
      %s98 = sphi 0, %s97
      %s112 = sphi 0, %s98
      %s116 = sphi 0, %s116
      %s118 = sphi 0, %s116
      %s119 = sphi 0, %s118
      %s133 = sphi 0, %s119
      %s137 = sphi 0, %s137
      %s139 = sphi 0, %s137
      %s140 = sphi 0, %s139
      %s154 = sphi 0, %s140
      %s160 = sphi 0, %s162
      %s163 = sphi 0, %s160
      %s164 = sphi 0, %s163
      %s180 = sphi 0, %s164
    $region4: #{tpu_custom_call.1} parent=1 // loop_header_branch
      %22 = sbr.rel (%p20) target = $region8
    $region5: #{tpu_custom_call.1} parent=1 // loop_body
      %s24 = ssub.s32 %s19, 1
      %s25 = ssub.s32 %s19, 2
      %s26 = sadd.s32 %s19, 1
      %s27 = ssub.s32 %s19, %s26
      %p28 = scmp.eq.s32.totalorder %s27, 0
      %s30 = sadd.s32 %s29, 1
      %s31 = scalar_select %p28, %s29, %s30
      %p34 = pneg %p28
      %p35 = scmp.eq.s32.totalorder %s19, 1
      %p36 = por %p34, %p35
      %p37 = scmp.ne.s32.totalorder %s29, %s32
      %p38 = scmp.eq.s32.totalorder %s19, 0
      %p39 = por %p37, %p38
      %p40 = scmp.ne.s32.totalorder %s29, %s32
      %p41 = scmp.eq.s32.totalorder %s24, 1
      %p42 = por %p40, %p41
      %p43 = scmp.ne.s32.totalorder %s32, %s33
      %p44 = scmp.eq.s32.totalorder %s24, 0
      %p45 = por %p43, %p44
      %p46 = scmp.ne.s32.totalorder %s32, %s33
      %p47 = scmp.eq.s32.totalorder %s25, 1
      %p48 = por %p46, %p47
      %p50 = scmp.ne.s32.totalorder %s33, %s49
      %p51 = scmp.eq.s32.totalorder %s25, 0
      %p52 = por %p50, %p51
      %s54 = sadd.s32 %s53, 1
      %p57 = scmp.eq.s32.totalorder %s19, 1
      %p58 = scmp.ne.s32.totalorder %s53, %s55
      %p59 = scmp.eq.s32.totalorder %s19, 0
      %p60 = por %p58, %p59
      %p61 = scmp.ne.s32.totalorder %s53, %s55
      %p62 = scmp.eq.s32.totalorder %s24, 1
      %p63 = por %p61, %p62
      %p64 = scmp.ne.s32.totalorder %s55, %s56
      %p65 = scmp.eq.s32.totalorder %s24, 0
      %p66 = por %p64, %p65
      %p67 = scmp.ne.s32.totalorder %s55, %s56
      %p68 = scmp.eq.s32.totalorder %s25, 1
      %p69 = por %p67, %p68
      %p71 = scmp.ne.s32.totalorder %s56, %s70
      %p72 = scmp.eq.s32.totalorder %s25, 0
      %p73 = por %p71, %p72
      %s75 = sadd.s32 %s74, 1
      %p78 = scmp.eq.s32.totalorder %s19, 1
      %p79 = scmp.ne.s32.totalorder %s74, %s76
      %p80 = scmp.eq.s32.totalorder %s19, 0
      %p81 = por %p79, %p80
      %p82 = scmp.ne.s32.totalorder %s74, %s76
      %p83 = scmp.eq.s32.totalorder %s24, 1
      %p84 = por %p82, %p83
      %p85 = scmp.ne.s32.totalorder %s76, %s77
      %p86 = scmp.eq.s32.totalorder %s24, 0
      %p87 = por %p85, %p86
      %p88 = scmp.ne.s32.totalorder %s76, %s77
      %p89 = scmp.eq.s32.totalorder %s25, 1
      %p90 = por %p88, %p89
      %p92 = scmp.ne.s32.totalorder %s77, %s91
      %p93 = scmp.eq.s32.totalorder %s25, 0
      %p94 = por %p92, %p93
      %s96 = sadd.s32 %s95, 1
      %p99 = scmp.eq.s32.totalorder %s19, 1
      %p100 = scmp.ne.s32.totalorder %s95, %s97
      %p101 = scmp.eq.s32.totalorder %s19, 0
      %p102 = por %p100, %p101
      %p103 = scmp.ne.s32.totalorder %s95, %s97
      %p104 = scmp.eq.s32.totalorder %s24, 1
      %p105 = por %p103, %p104
      %p106 = scmp.ne.s32.totalorder %s97, %s98
      %p107 = scmp.eq.s32.totalorder %s24, 0
      %p108 = por %p106, %p107
      %p109 = scmp.ne.s32.totalorder %s97, %s98
      %p110 = scmp.eq.s32.totalorder %s25, 1
      %p111 = por %p109, %p110
      %p113 = scmp.ne.s32.totalorder %s98, %s112
      %p114 = scmp.eq.s32.totalorder %s25, 0
      %p115 = por %p113, %p114
      %s117 = sadd.s32 %s116, 1
      %p120 = scmp.eq.s32.totalorder %s19, 1
      %p121 = scmp.ne.s32.totalorder %s116, %s118
      %p122 = scmp.eq.s32.totalorder %s19, 0
      %p123 = por %p121, %p122
      %p124 = scmp.ne.s32.totalorder %s116, %s118
      %p125 = scmp.eq.s32.totalorder %s24, 1
      %p126 = por %p124, %p125
      %p127 = scmp.ne.s32.totalorder %s118, %s119
      %p128 = scmp.eq.s32.totalorder %s24, 0
      %p129 = por %p127, %p128
      %p130 = scmp.ne.s32.totalorder %s118, %s119
      %p131 = scmp.eq.s32.totalorder %s25, 1
      %p132 = por %p130, %p131
      %p134 = scmp.ne.s32.totalorder %s119, %s133
      %p135 = scmp.eq.s32.totalorder %s25, 0
      %p136 = por %p134, %p135
      %s138 = sadd.s32 %s137, 1
      %p141 = scmp.eq.s32.totalorder %s19, 1
      %p142 = scmp.ne.s32.totalorder %s137, %s139
      %p143 = scmp.eq.s32.totalorder %s19, 0
      %p144 = por %p142, %p143
      %p145 = scmp.ne.s32.totalorder %s137, %s139
      %p146 = scmp.eq.s32.totalorder %s24, 1
      %p147 = por %p145, %p146
      %p148 = scmp.ne.s32.totalorder %s139, %s140
      %p149 = scmp.eq.s32.totalorder %s24, 0
      %p150 = por %p148, %p149
      %p151 = scmp.ne.s32.totalorder %s139, %s140
      %p152 = scmp.eq.s32.totalorder %s25, 1
      %p153 = por %p151, %p152
      %p155 = scmp.ne.s32.totalorder %s140, %s154
      %p156 = scmp.eq.s32.totalorder %s25, 0
      %p157 = por %p155, %p156
      %s158 = ssub.s32 %s19, %s26
      %p159 = scmp.eq.s32.totalorder %s158, 0
      %s161 = sadd.s32 %s160, 1
      %s162 = scalar_select %p159, %s160, %s161
      %p165 = pneg %p159
      %p166 = scmp.eq.s32.totalorder %s19, 1
      %p167 = por %p165, %p166
      %p168 = scmp.ne.s32.totalorder %s160, %s163
      %p169 = scmp.eq.s32.totalorder %s19, 0
      %p170 = por %p168, %p169
      %p171 = scmp.ne.s32.totalorder %s160, %s163
      %p172 = scmp.eq.s32.totalorder %s24, 1
      %p173 = por %p171, %p172
      %p174 = scmp.ne.s32.totalorder %s163, %s164
      %p175 = scmp.eq.s32.totalorder %s24, 0
      %p176 = por %p174, %p175
      %p177 = scmp.ne.s32.totalorder %s163, %s164
      %p178 = scmp.eq.s32.totalorder %s25, 1
      %p179 = por %p177, %p178
      %p181 = scmp.ne.s32.totalorder %s164, %s180
      %p182 = scmp.eq.s32.totalorder %s25, 0
      %p183 = por %p181, %p182
      %p184 = scmp.le.s32.totalorder 1, %s19
      %p185 = scmp.lt.s32.totalorder %s19, 3
      %p186 = pnand %p184, %p185
      %p187 = pneg %p186
      // Predicated region
      $region9: #{tpu_custom_call.1} parent=5 // pred_check
        _
      $region10: #{tpu_custom_call.1} parent=5 // pred_check_branch
        %189 = sbr.rel (%p186) target = $region12
      $region11: #{tpu_custom_call.1} parent=5 // pred_region
        %s190 = ssub.s32 %s19, 1
        // Predicated region
        $region13: #{tpu_custom_call.1} parent=11 // pred_check
          %p191 = pneg %p66
        $region14: #{tpu_custom_call.1} parent=11 // pred_check_branch
          %193 = sbr.rel (%p191) target = $region16
        $region15: #{tpu_custom_call.1} parent=11 // pred_region
          _
        $region16: #{tpu_custom_call.1} parent=11 // pred_fallthru
          _
        // Predicated region
        $region17: #{tpu_custom_call.1} parent=11 // pred_check
          %p194 = pneg %p87
        $region18: #{tpu_custom_call.1} parent=11 // pred_check_branch
          %196 = sbr.rel (%p194) target = $region20
        $region19: #{tpu_custom_call.1} parent=11 // pred_region
          %s198 = ssub.s32 2560, 2560
          %199 = vsyncadd [#allocation7], %s198
          %s200 = sshll.u32 [#allocation6], 4
          %s201 = int_to_ptr.vmem [resolvable:$true] %s200
          %206 = dma.hbm_to_vmem [thread:$0]  %s2, 2560, %s201, [#allocation7], 320, 320, 20
        $region20: #{tpu_custom_call.1} parent=11 // pred_fallthru
          _
        // Predicated region
        $region21: #{tpu_custom_call.1} parent=11 // pred_check
          %p207 = pneg %p108
        $region22: #{tpu_custom_call.1} parent=11 // pred_check_branch
          %209 = sbr.rel (%p207) target = $region24
        $region23: #{tpu_custom_call.1} parent=11 // pred_region
          _
        $region24: #{tpu_custom_call.1} parent=11 // pred_fallthru
          _
        // Predicated region
        $region25: #{tpu_custom_call.1} parent=11 // pred_check
          %p210 = pneg %p129
        $region26: #{tpu_custom_call.1} parent=11 // pred_check_branch
          %212 = sbr.rel (%p210) target = $region28
        $region27: #{tpu_custom_call.1} parent=11 // pred_region
          %s214 = ssub.s32 2560, 2560
          %215 = vsyncadd [#allocation7], %s214
          %s216 = sshll.u32 [#allocation8], 4
          %s217 = int_to_ptr.vmem [resolvable:$true] %s216
          %222 = dma.hbm_to_vmem [thread:$0]  %s4, 2560, %s217, [#allocation7], 320, 320, 20
        $region28: #{tpu_custom_call.1} parent=11 // pred_fallthru
          _
        // Predicated region
        $region29: #{tpu_custom_call.1} parent=11 // pred_check
          %p223 = pneg %p150
        $region30: #{tpu_custom_call.1} parent=11 // pred_check_branch
          %225 = sbr.rel (%p223) target = $region32
        $region31: #{tpu_custom_call.1} parent=11 // pred_region
          _
        $region32: #{tpu_custom_call.1} parent=11 // pred_fallthru
          _
      $region12: #{tpu_custom_call.1} parent=5 // pred_fallthru
        _
      %p226 = scmp.lt.s32.totalorder %s19, 2
      // Predicated region
      $region33: #{tpu_custom_call.1} parent=5 // pred_check
        %p227 = pneg %p226
      $region34: #{tpu_custom_call.1} parent=5 // pred_check_branch
        %229 = sbr.rel (%p227) target = $region36
      $region35: #{tpu_custom_call.1} parent=5 // pred_region
        // Predicated region
        $region37: #{tpu_custom_call.1} parent=35 // pred_check
          %p230 = pneg %p39
        $region38: #{tpu_custom_call.1} parent=35 // pred_check_branch
          %232 = sbr.rel (%p230) target = $region40
        $region39: #{tpu_custom_call.1} parent=35 // pred_region
          %s233 = sand.u32 %s29, 1
          %s234 = scalar_lea.sflag [#allocation4], %s233
          %s235 = sand.u32 %s29, 1
          %s236 = smul.addr %s235, 128
          %s237 = scalar_lea.vmem [#allocation3], %s236
          %s239 = ssub.s32 2048, 2048
          %240 = vsyncadd %s234, %s239
          %s241 = smul.addr %s19, 16
          %s242 = smul.addr %s241, 128
          %s243 = scalar_lea.hbm %s0, %s242
          %s244 = sshll.u32 %s237, 4
          %s245 = int_to_ptr.vmem [resolvable:$true] %s244
          %250 = dma.hbm_to_vmem [thread:$0]  %s243, 2048, %s245, %s234, 256, 256, 16
        $region40: #{tpu_custom_call.1} parent=35 // pred_fallthru
          _
      $region36: #{tpu_custom_call.1} parent=5 // pred_fallthru
        _
      %p251 = scmp.le.s32.totalorder 1, %s19
      %p252 = scmp.lt.s32.totalorder %s19, 3
      %p253 = pnand %p251, %p252
      %p254 = pneg %p253
      // Predicated region
      $region41: #{tpu_custom_call.1} parent=5 // pred_check
        _
      $region42: #{tpu_custom_call.1} parent=5 // pred_check_branch
        %256 = sbr.rel (%p253) target = $region44
      $region43: #{tpu_custom_call.1} parent=5 // pred_region
        %s257 = ssub.s32 %s19, 1
        %s258 = sand.u32 %s32, 1
        %s259 = scalar_lea.sflag [#allocation4], %s258
        %s260 = sand.u32 %s32, 1
        %s261 = smul.addr %s260, 128
        %s262 = scalar_lea.vmem [#allocation3], %s261
        // Predicated region
        $region45: #{tpu_custom_call.1} parent=43 // pred_check
          %p263 = pneg %p45
        $region46: #{tpu_custom_call.1} parent=43 // pred_check_branch
          %265 = sbr.rel (%p263) target = $region48
        $region47: #{tpu_custom_call.1} parent=43 // pred_region
          %266 = dma.done %s259, 2048
        $region48: #{tpu_custom_call.1} parent=43 // pred_fallthru
          _
        // Predicated region
        $region49: #{tpu_custom_call.1} parent=43 // pred_check
          %p267 = pneg %p87
        $region50: #{tpu_custom_call.1} parent=43 // pred_check_branch
          %269 = sbr.rel (%p267) target = $region52
        $region51: #{tpu_custom_call.1} parent=43 // pred_region
          %270 = dma.done [#allocation7], 2560
        $region52: #{tpu_custom_call.1} parent=43 // pred_fallthru
          _
        // Predicated region
        $region53: #{tpu_custom_call.1} parent=43 // pred_check
          %p271 = pneg %p129
        $region54: #{tpu_custom_call.1} parent=43 // pred_check_branch
          %273 = sbr.rel (%p271) target = $region56
        $region55: #{tpu_custom_call.1} parent=43 // pred_region
          %274 = dma.done [#allocation7], 2560
        $region56: #{tpu_custom_call.1} parent=43 // pred_fallthru
          _
        %s275 = sand.u32 %s32, 1
        %s276 = scalar_lea.sflag [#allocation4], %s275
        %s277 = sand.u32 %s32, 1
        %s278 = smul.addr %s277, 128
        %s279 = scalar_lea.vmem [#allocation3], %s278
        %p280 = pneg %p45
        %p281 = pneg %p42
        %p282 = pneg %p66
        %p283 = pneg %p63
        %p284 = pneg %p87
        %p285 = pneg %p84
        %p286 = pneg %p108
        %p287 = pneg %p105
        %p288 = pneg %p129
        %p289 = pneg %p126
        %p290 = pneg %p150
        %p291 = pneg %p147
        %p292 = pneg %p176
        %p293 = pneg %p173
        %s294 = sand.u32 %s163, 1
        %s295 = scalar_lea.sflag [#allocation5], %s294
        %s296 = sand.u32 %s163, 1
        %s297 = smul.addr %s296, 128
        %s298 = scalar_lea.vmem [#allocation9], %s297
        %v300 = vlaneseq
        %v301 = vand.u32 %v300, 127
        %v302 = vadd.s32 %v301, 128
        %v303 = vld [vmem:[%s1] sm:$0x3]
        %vm304 = vcmp.ge.s32.totalorder %v301, 16
        %vm305 = vcmp.ge.s32.totalorder %v302, 16
        %vm306 = vcmp.lt.s32.totalorder %v301, 240
        %vm307 = vcmp.lt.s32.totalorder %v302, 240
        %vm308 = vcmp.ge.s32.totalorder %v303, 1
        %vm309 = vcmp.le.s32.totalorder %v303, 14
        %v310 = vld [vmem:[%s262] sm:$0xff]
        %v311 = vld [vmem:[%s262 + $0x8] sm:$0xff]
        %v312 = vld [vmem:[%s262 + $0x10] sm:$0xff]
        %v313 = vld [vmem:[%s262 + $0x18] sm:$0xff]
        %v314 = vld [vmem:[%s262 + $0x20] sm:$0xff]
        %v315 = vld [vmem:[%s262 + $0x28] sm:$0xff]
        %v316 = vld [vmem:[%s262 + $0x30] sm:$0xff]
        %v317 = vld [vmem:[%s262 + $0x38] sm:$0xff]
        %v318 = vld [vmem:[%s262 + $0x40] sm:$0xff]
        %v319 = vld [vmem:[%s262 + $0x48] sm:$0xff]
        %v320 = vld [vmem:[%s262 + $0x50] sm:$0xff]
        %v321 = vld [vmem:[%s262 + $0x58] sm:$0xff]
        %v322 = vld [vmem:[%s262 + $0x60] sm:$0xff]
        %v323 = vld [vmem:[%s262 + $0x68] sm:$0xff]
        %v324 = vld [vmem:[%s262 + $0x70] sm:$0xff]
        %v325 = vld [vmem:[%s262 + $0x78] sm:$0xff]
        %326 = vrot.lane.b32.xlu0 %v310, 17
        %v327 = vpop.permute.xlu0 %326
        %328 = vrot.lane.b32.xlu0 %v312, 17
        %v329 = vpop.permute.xlu0 %328
        %330 = vrot.lane.b32.xlu0 %v314, 17
        %v331 = vpop.permute.xlu0 %330
        %332 = vrot.lane.b32.xlu0 %v316, 17
        %v333 = vpop.permute.xlu0 %332
        %334 = vrot.lane.b32.xlu0 %v318, 17
        %v335 = vpop.permute.xlu0 %334
        %336 = vrot.lane.b32.xlu0 %v320, 17
        %v337 = vpop.permute.xlu0 %336
        %338 = vrot.lane.b32.xlu0 %v322, 17
        %v339 = vpop.permute.xlu0 %338
        %340 = vrot.lane.b32.xlu0 %v324, 17
        %v341 = vpop.permute.xlu0 %340
        %342 = vrot.lane.b32.xlu0 %v311, 17
        %v343 = vpop.permute.xlu0 %342
        %344 = vrot.lane.b32.xlu0 %v313, 17
        %v345 = vpop.permute.xlu0 %344
        %346 = vrot.lane.b32.xlu0 %v315, 17
        %v347 = vpop.permute.xlu0 %346
        %348 = vrot.lane.b32.xlu0 %v317, 17
        %v349 = vpop.permute.xlu0 %348
        %350 = vrot.lane.b32.xlu0 %v319, 17
        %v351 = vpop.permute.xlu0 %350
        %352 = vrot.lane.b32.xlu0 %v321, 17
        %v353 = vpop.permute.xlu0 %352
        %354 = vrot.lane.b32.xlu0 %v323, 17
        %v355 = vpop.permute.xlu0 %354
        %356 = vrot.lane.b32.xlu0 %v325, 17
        %v357 = vpop.permute.xlu0 %356
        %vm358 = vcmp.lt.s32.totalorder %v301, 17
        %v359 = vsel %vm358, %v327, %v343
        %v360 = vsel %vm358, %v329, %v345
        %v361 = vsel %vm358, %v331, %v347
        %v362 = vsel %vm358, %v333, %v349
        %v363 = vsel %vm358, %v335, %v351
        %v364 = vsel %vm358, %v337, %v353
        %v365 = vsel %vm358, %v339, %v355
        %v366 = vsel %vm358, %v341, %v357
        %v367 = vsel %vm358, %v343, %v327
        %v368 = vsel %vm358, %v345, %v329
        %v369 = vsel %vm358, %v347, %v331
        %v370 = vsel %vm358, %v349, %v333
        %v371 = vsel %vm358, %v351, %v335
        %v372 = vsel %vm358, %v353, %v337
        %v373 = vsel %vm358, %v355, %v339
        %v374 = vsel %vm358, %v357, %v341
        %v375 = vsel %vm308, 1, 0
        %v376 = vlaneseq
        %v377 = vshrl.u32 %v376, 7
        %v378 = vsub.s32 0, %v377
        %v379 = vrot.slane %v375, %v378
        %v380 = vlaneseq
        %v381 = vshrl.u32 %v380, 7
        %v382 = vsub.s32 1, %v381
        %v383 = vrot.slane %v375, %v382
        %vm384 = vcmp.ne.s32.totalorder %v379, 0
        %vm385 = vcmp.ne.s32.totalorder %v383, 0
        %vm386 = vmand %vm304, %vm384
        %vm387 = vmand %vm305, %vm385
        %v388 = vsel %vm386, 1, 0
        %v389 = vsel %vm387, 1, 0
        %v390 = vlaneseq
        %v391 = vshrl.u32 %v390, 7
        %v392 = vsub.s32 0, %v391
        %v393 = vrot.slane %v388, %v392
        %v394 = vlaneseq
        %v395 = vshrl.u32 %v394, 7
        %v396 = vsub.s32 0, %v395
        %v397 = vrot.slane %v389, %v396
        %vm398 = vcmp.eq.s32.totalorder %v393, 1
        %vm399 = vcmp.eq.s32.totalorder %v397, 1
        %v400 = vsel %vm398, %v367, 0.0
        %v401 = vsel %vm399, %v359, 0.0
        %v402 = vsel %vm398, %v368, 0.0
        %v403 = vsel %vm399, %v360, 0.0
        %v404 = vsel %vm398, %v369, 0.0
        %v405 = vsel %vm399, %v361, 0.0
        %v406 = vsel %vm398, %v370, 0.0
        %v407 = vsel %vm399, %v362, 0.0
        %v408 = vsel %vm398, %v371, 0.0
        %v409 = vsel %vm399, %v363, 0.0
        %v410 = vsel %vm398, %v372, 0.0
        %v411 = vsel %vm399, %v364, 0.0
        %v412 = vsel %vm398, %v373, 0.0
        %v413 = vsel %vm399, %v365, 0.0
        %v414 = vsel %vm398, %v374, 0.0
        %v415 = vsel %vm399, %v366, 0.0
        %v416 = vpack.c.bf16 %v402, %v400
        %v417 = vpack.c.bf16 %v403, %v401
        %v418 = vpack.c.bf16 %v406, %v404
        %v419 = vpack.c.bf16 %v407, %v405
        %v420 = vpack.c.bf16 %v410, %v408
        %v421 = vpack.c.bf16 %v411, %v409
        %v422 = vpack.c.bf16 %v414, %v412
        %v423 = vpack.c.bf16 %v415, %v413
        %424 = vst [vmem:[#allocation2] sm:$0xff] %v416
        %425 = vst [vmem:[#allocation2 + $0x8] sm:$0xff] %v417
        %426 = vst [vmem:[#allocation2 + $0x10] sm:$0xff] %v418
        %427 = vst [vmem:[#allocation2 + $0x18] sm:$0xff] %v419
        %428 = vst [vmem:[#allocation2 + $0x20] sm:$0xff] %v420
        %429 = vst [vmem:[#allocation2 + $0x28] sm:$0xff] %v421
        %430 = vst [vmem:[#allocation2 + $0x30] sm:$0xff] %v422
        %431 = vst [vmem:[#allocation2 + $0x38] sm:$0xff] %v423
        %432 = vrot.lane.b32.xlu0 %v310, 16
        %v433 = vpop.permute.xlu0 %432
        %434 = vrot.lane.b32.xlu0 %v312, 16
        %v435 = vpop.permute.xlu0 %434
        %436 = vrot.lane.b32.xlu0 %v314, 16
        %v437 = vpop.permute.xlu0 %436
        %438 = vrot.lane.b32.xlu0 %v316, 16
        %v439 = vpop.permute.xlu0 %438
        %440 = vrot.lane.b32.xlu0 %v318, 16
        %v441 = vpop.permute.xlu0 %440
        %442 = vrot.lane.b32.xlu0 %v320, 16
        %v443 = vpop.permute.xlu0 %442
        %444 = vrot.lane.b32.xlu0 %v322, 16
        %v445 = vpop.permute.xlu0 %444
        %446 = vrot.lane.b32.xlu0 %v324, 16
        %v447 = vpop.permute.xlu0 %446
        %448 = vrot.lane.b32.xlu0 %v311, 16
        %v449 = vpop.permute.xlu0 %448
        %450 = vrot.lane.b32.xlu0 %v313, 16
        %v451 = vpop.permute.xlu0 %450
        %452 = vrot.lane.b32.xlu0 %v315, 16
        %v453 = vpop.permute.xlu0 %452
        %454 = vrot.lane.b32.xlu0 %v317, 16
        %v455 = vpop.permute.xlu0 %454
        %456 = vrot.lane.b32.xlu0 %v319, 16
        %v457 = vpop.permute.xlu0 %456
        %458 = vrot.lane.b32.xlu0 %v321, 16
        %v459 = vpop.permute.xlu0 %458
        %460 = vrot.lane.b32.xlu0 %v323, 16
        %v461 = vpop.permute.xlu0 %460
        %462 = vrot.lane.b32.xlu0 %v325, 16
        %v463 = vpop.permute.xlu0 %462
        %vm464 = vcmp.lt.s32.totalorder %v301, 16
        %v465 = vsel %vm464, %v433, %v449
        %v466 = vsel %vm464, %v435, %v451
        %v467 = vsel %vm464, %v437, %v453
        %v468 = vsel %vm464, %v439, %v455
        %v469 = vsel %vm464, %v441, %v457
        %v470 = vsel %vm464, %v443, %v459
        %v471 = vsel %vm464, %v445, %v461
        %v472 = vsel %vm464, %v447, %v463
        %v473 = vsel %vm464, %v449, %v433
        %v474 = vsel %vm464, %v451, %v435
        %v475 = vsel %vm464, %v453, %v437
        %v476 = vsel %vm464, %v455, %v439
        %v477 = vsel %vm464, %v457, %v441
        %v478 = vsel %vm464, %v459, %v443
        %v479 = vsel %vm464, %v461, %v445
        %v480 = vsel %vm464, %v463, %v447
        %v481 = vsel %vm304, 1, 0
        %v482 = vsel %vm305, 1, 0
        %vm483 = vcmp.eq.s32.totalorder %v481, 1
        %vm484 = vcmp.eq.s32.totalorder %v482, 1
        %v485 = vsel %vm483, %v473, 0.0
        %v486 = vsel %vm484, %v465, 0.0
        %v487 = vsel %vm483, %v474, 0.0
        %v488 = vsel %vm484, %v466, 0.0
        %v489 = vsel %vm483, %v475, 0.0
        %v490 = vsel %vm484, %v467, 0.0
        %v491 = vsel %vm483, %v476, 0.0
        %v492 = vsel %vm484, %v468, 0.0
        %v493 = vsel %vm483, %v477, 0.0
        %v494 = vsel %vm484, %v469, 0.0
        %v495 = vsel %vm483, %v478, 0.0
        %v496 = vsel %vm484, %v470, 0.0
        %v497 = vsel %vm483, %v479, 0.0
        %v498 = vsel %vm484, %v471, 0.0
        %v499 = vsel %vm483, %v480, 0.0
        %v500 = vsel %vm484, %v472, 0.0
        %v501 = vpack.c.bf16 %v487, %v485
        %v502 = vpack.c.bf16 %v488, %v486
        %v503 = vpack.c.bf16 %v491, %v489
        %v504 = vpack.c.bf16 %v492, %v490
        %v505 = vpack.c.bf16 %v495, %v493
        %v506 = vpack.c.bf16 %v496, %v494
        %v507 = vpack.c.bf16 %v499, %v497
        %v508 = vpack.c.bf16 %v500, %v498
        %509 = vst [vmem:[#allocation2 + $0x40] sm:$0xff] %v501
        %510 = vst [vmem:[#allocation2 + $0x48] sm:$0xff] %v502
        %511 = vst [vmem:[#allocation2 + $0x50] sm:$0xff] %v503
        %512 = vst [vmem:[#allocation2 + $0x58] sm:$0xff] %v504
        %513 = vst [vmem:[#allocation2 + $0x60] sm:$0xff] %v505
        %514 = vst [vmem:[#allocation2 + $0x68] sm:$0xff] %v506
        %515 = vst [vmem:[#allocation2 + $0x70] sm:$0xff] %v507
        %516 = vst [vmem:[#allocation2 + $0x78] sm:$0xff] %v508
        %517 = vrot.lane.b32.xlu0 %v310, 15
        %v518 = vpop.permute.xlu0 %517
        %519 = vrot.lane.b32.xlu0 %v312, 15
        %v520 = vpop.permute.xlu0 %519
        %521 = vrot.lane.b32.xlu0 %v314, 15
        %v522 = vpop.permute.xlu0 %521
        %523 = vrot.lane.b32.xlu0 %v316, 15
        %v524 = vpop.permute.xlu0 %523
        %525 = vrot.lane.b32.xlu0 %v318, 15
        %v526 = vpop.permute.xlu0 %525
        %527 = vrot.lane.b32.xlu0 %v320, 15
        %v528 = vpop.permute.xlu0 %527
        %529 = vrot.lane.b32.xlu0 %v322, 15
        %v530 = vpop.permute.xlu0 %529
        %531 = vrot.lane.b32.xlu0 %v324, 15
        %v532 = vpop.permute.xlu0 %531
        %533 = vrot.lane.b32.xlu0 %v311, 15
        %v534 = vpop.permute.xlu0 %533
        %535 = vrot.lane.b32.xlu0 %v313, 15
        %v536 = vpop.permute.xlu0 %535
        %537 = vrot.lane.b32.xlu0 %v315, 15
        %v538 = vpop.permute.xlu0 %537
        %539 = vrot.lane.b32.xlu0 %v317, 15
        %v540 = vpop.permute.xlu0 %539
        %541 = vrot.lane.b32.xlu0 %v319, 15
        %v542 = vpop.permute.xlu0 %541
        %543 = vrot.lane.b32.xlu0 %v321, 15
        %v544 = vpop.permute.xlu0 %543
        %545 = vrot.lane.b32.xlu0 %v323, 15
        %v546 = vpop.permute.xlu0 %545
        %547 = vrot.lane.b32.xlu0 %v325, 15
        %v548 = vpop.permute.xlu0 %547
        %vm549 = vcmp.lt.s32.totalorder %v301, 15
        %v550 = vsel %vm549, %v518, %v534
        %v551 = vsel %vm549, %v520, %v536
        %v552 = vsel %vm549, %v522, %v538
        %v553 = vsel %vm549, %v524, %v540
        %v554 = vsel %vm549, %v526, %v542
        %v555 = vsel %vm549, %v528, %v544
        %v556 = vsel %vm549, %v530, %v546
        %v557 = vsel %vm549, %v532, %v548
        %v558 = vsel %vm549, %v534, %v518
        %v559 = vsel %vm549, %v536, %v520
        %v560 = vsel %vm549, %v538, %v522
        %v561 = vsel %vm549, %v540, %v524
        %v562 = vsel %vm549, %v542, %v526
        %v563 = vsel %vm549, %v544, %v528
        %v564 = vsel %vm549, %v546, %v530
        %v565 = vsel %vm549, %v548, %v532
        %v566 = vsel %vm309, 1, 0
        %v567 = vlaneseq
        %v568 = vshrl.u32 %v567, 7
        %v569 = vsub.s32 0, %v568
        %v570 = vrot.slane %v566, %v569
        %v571 = vlaneseq
        %v572 = vshrl.u32 %v571, 7
        %v573 = vsub.s32 1, %v572
        %v574 = vrot.slane %v566, %v573
        %vm575 = vcmp.ne.s32.totalorder %v570, 0
        %vm576 = vcmp.ne.s32.totalorder %v574, 0
        %vm577 = vmand %vm304, %vm575
        %vm578 = vmand %vm305, %vm576
        %v579 = vsel %vm577, 1, 0
        %v580 = vsel %vm578, 1, 0
        %v581 = vlaneseq
        %v582 = vshrl.u32 %v581, 7
        %v583 = vsub.s32 0, %v582
        %v584 = vrot.slane %v579, %v583
        %v585 = vlaneseq
        %v586 = vshrl.u32 %v585, 7
        %v587 = vsub.s32 0, %v586
        %v588 = vrot.slane %v580, %v587
        %vm589 = vcmp.eq.s32.totalorder %v584, 1
        %vm590 = vcmp.eq.s32.totalorder %v588, 1
        %v591 = vsel %vm589, %v558, 0.0
        %v592 = vsel %vm590, %v550, 0.0
        %v593 = vsel %vm589, %v559, 0.0
        %v594 = vsel %vm590, %v551, 0.0
        %v595 = vsel %vm589, %v560, 0.0
        %v596 = vsel %vm590, %v552, 0.0
        %v597 = vsel %vm589, %v561, 0.0
        %v598 = vsel %vm590, %v553, 0.0
        %v599 = vsel %vm589, %v562, 0.0
        %v600 = vsel %vm590, %v554, 0.0
        %v601 = vsel %vm589, %v563, 0.0
        %v602 = vsel %vm590, %v555, 0.0
        %v603 = vsel %vm589, %v564, 0.0
        %v604 = vsel %vm590, %v556, 0.0
        %v605 = vsel %vm589, %v565, 0.0
        %v606 = vsel %vm590, %v557, 0.0
        %v607 = vpack.c.bf16 %v593, %v591
        %v608 = vpack.c.bf16 %v594, %v592
        %v609 = vpack.c.bf16 %v597, %v595
        %v610 = vpack.c.bf16 %v598, %v596
        %v611 = vpack.c.bf16 %v601, %v599
        %v612 = vpack.c.bf16 %v602, %v600
        %v613 = vpack.c.bf16 %v605, %v603
        %v614 = vpack.c.bf16 %v606, %v604
        %615 = vst [vmem:[#allocation2 + $0x80] sm:$0xff] %v607
        %616 = vst [vmem:[#allocation2 + $0x88] sm:$0xff] %v608
        %617 = vst [vmem:[#allocation2 + $0x90] sm:$0xff] %v609
        %618 = vst [vmem:[#allocation2 + $0x98] sm:$0xff] %v610
        %619 = vst [vmem:[#allocation2 + $0xa0] sm:$0xff] %v611
        %620 = vst [vmem:[#allocation2 + $0xa8] sm:$0xff] %v612
        %621 = vst [vmem:[#allocation2 + $0xb0] sm:$0xff] %v613
        %622 = vst [vmem:[#allocation2 + $0xb8] sm:$0xff] %v614
        %623 = vrot.lane.b32.xlu0 %v310, 1
        %v624 = vpop.permute.xlu0 %623
        %625 = vrot.lane.b32.xlu0 %v312, 1
        %v626 = vpop.permute.xlu0 %625
        %627 = vrot.lane.b32.xlu0 %v314, 1
        %v628 = vpop.permute.xlu0 %627
        %629 = vrot.lane.b32.xlu0 %v316, 1
        %v630 = vpop.permute.xlu0 %629
        %631 = vrot.lane.b32.xlu0 %v318, 1
        %v632 = vpop.permute.xlu0 %631
        %633 = vrot.lane.b32.xlu0 %v320, 1
        %v634 = vpop.permute.xlu0 %633
        %635 = vrot.lane.b32.xlu0 %v322, 1
        %v636 = vpop.permute.xlu0 %635
        %637 = vrot.lane.b32.xlu0 %v324, 1
        %v638 = vpop.permute.xlu0 %637
        %639 = vrot.lane.b32.xlu0 %v311, 1
        %v640 = vpop.permute.xlu0 %639
        %641 = vrot.lane.b32.xlu0 %v313, 1
        %v642 = vpop.permute.xlu0 %641
        %643 = vrot.lane.b32.xlu0 %v315, 1
        %v644 = vpop.permute.xlu0 %643
        %645 = vrot.lane.b32.xlu0 %v317, 1
        %v646 = vpop.permute.xlu0 %645
        %647 = vrot.lane.b32.xlu0 %v319, 1
        %v648 = vpop.permute.xlu0 %647
        %649 = vrot.lane.b32.xlu0 %v321, 1
        %v650 = vpop.permute.xlu0 %649
        %651 = vrot.lane.b32.xlu0 %v323, 1
        %v652 = vpop.permute.xlu0 %651
        %653 = vrot.lane.b32.xlu0 %v325, 1
        %v654 = vpop.permute.xlu0 %653
        %vm655 = vcmp.lt.s32.totalorder %v301, 1
        %v656 = vsel %vm655, %v624, %v640
        %v657 = vsel %vm655, %v626, %v642
        %v658 = vsel %vm655, %v628, %v644
        %v659 = vsel %vm655, %v630, %v646
        %v660 = vsel %vm655, %v632, %v648
        %v661 = vsel %vm655, %v634, %v650
        %v662 = vsel %vm655, %v636, %v652
        %v663 = vsel %vm655, %v638, %v654
        %v664 = vsel %vm655, %v640, %v624
        %v665 = vsel %vm655, %v642, %v626
        %v666 = vsel %vm655, %v644, %v628
        %v667 = vsel %vm655, %v646, %v630
        %v668 = vsel %vm655, %v648, %v632
        %v669 = vsel %vm655, %v650, %v634
        %v670 = vsel %vm655, %v652, %v636
        %v671 = vsel %vm655, %v654, %v638
        %vm672 = vcmp.eq.s32.totalorder %v379, 1
        %vm673 = vcmp.eq.s32.totalorder %v383, 1
        %v674 = vsel %vm672, %v664, 0.0
        %v675 = vsel %vm673, %v656, 0.0
        %v676 = vsel %vm672, %v665, 0.0
        %v677 = vsel %vm673, %v657, 0.0
        %v678 = vsel %vm672, %v666, 0.0
        %v679 = vsel %vm673, %v658, 0.0
        %v680 = vsel %vm672, %v667, 0.0
        %v681 = vsel %vm673, %v659, 0.0
        %v682 = vsel %vm672, %v668, 0.0
        %v683 = vsel %vm673, %v660, 0.0
        %v684 = vsel %vm672, %v669, 0.0
        %v685 = vsel %vm673, %v661, 0.0
        %v686 = vsel %vm672, %v670, 0.0
        %v687 = vsel %vm673, %v662, 0.0
        %v688 = vsel %vm672, %v671, 0.0
        %v689 = vsel %vm673, %v663, 0.0
        %v690 = vpack.c.bf16 %v676, %v674
        %v691 = vpack.c.bf16 %v677, %v675
        %v692 = vpack.c.bf16 %v680, %v678
        %v693 = vpack.c.bf16 %v681, %v679
        %v694 = vpack.c.bf16 %v684, %v682
        %v695 = vpack.c.bf16 %v685, %v683
        %v696 = vpack.c.bf16 %v688, %v686
        %v697 = vpack.c.bf16 %v689, %v687
        %698 = vst [vmem:[#allocation2 + $0xc0] sm:$0xff] %v690
        %699 = vst [vmem:[#allocation2 + $0xc8] sm:$0xff] %v691
        %700 = vst [vmem:[#allocation2 + $0xd0] sm:$0xff] %v692
        %701 = vst [vmem:[#allocation2 + $0xd8] sm:$0xff] %v693
        %702 = vst [vmem:[#allocation2 + $0xe0] sm:$0xff] %v694
        %703 = vst [vmem:[#allocation2 + $0xe8] sm:$0xff] %v695
        %704 = vst [vmem:[#allocation2 + $0xf0] sm:$0xff] %v696
        %705 = vst [vmem:[#allocation2 + $0xf8] sm:$0xff] %v697
        %v706 = vpack.c.bf16 %v312, %v310
        %v707 = vpack.c.bf16 %v313, %v311
        %v708 = vpack.c.bf16 %v316, %v314
        %v709 = vpack.c.bf16 %v317, %v315
        %v710 = vpack.c.bf16 %v320, %v318
        %v711 = vpack.c.bf16 %v321, %v319
        %v712 = vpack.c.bf16 %v324, %v322
        %v713 = vpack.c.bf16 %v325, %v323
        %714 = vst [vmem:[#allocation2 + $0x100] sm:$0xff] %v706
        %715 = vst [vmem:[#allocation2 + $0x108] sm:$0xff] %v707
        %716 = vst [vmem:[#allocation2 + $0x110] sm:$0xff] %v708
        %717 = vst [vmem:[#allocation2 + $0x118] sm:$0xff] %v709
        %718 = vst [vmem:[#allocation2 + $0x120] sm:$0xff] %v710
        %719 = vst [vmem:[#allocation2 + $0x128] sm:$0xff] %v711
        %720 = vst [vmem:[#allocation2 + $0x130] sm:$0xff] %v712
        %721 = vst [vmem:[#allocation2 + $0x138] sm:$0xff] %v713
        %722 = vrot.lane.b32.xlu0 %v310, 127
        %v723 = vpop.permute.xlu0 %722
        %724 = vrot.lane.b32.xlu0 %v312, 127
        %v725 = vpop.permute.xlu0 %724
        %726 = vrot.lane.b32.xlu0 %v314, 127
        %v727 = vpop.permute.xlu0 %726
        %728 = vrot.lane.b32.xlu0 %v316, 127
        %v729 = vpop.permute.xlu0 %728
        %730 = vrot.lane.b32.xlu0 %v318, 127
        %v731 = vpop.permute.xlu0 %730
        %732 = vrot.lane.b32.xlu0 %v320, 127
        %v733 = vpop.permute.xlu0 %732
        %734 = vrot.lane.b32.xlu0 %v322, 127
        %v735 = vpop.permute.xlu0 %734
        %736 = vrot.lane.b32.xlu0 %v324, 127
        %v737 = vpop.permute.xlu0 %736
        %738 = vrot.lane.b32.xlu0 %v311, 127
        %v739 = vpop.permute.xlu0 %738
        %740 = vrot.lane.b32.xlu0 %v313, 127
        %v741 = vpop.permute.xlu0 %740
        %742 = vrot.lane.b32.xlu0 %v315, 127
        %v743 = vpop.permute.xlu0 %742
        %744 = vrot.lane.b32.xlu0 %v317, 127
        %v745 = vpop.permute.xlu0 %744
        %746 = vrot.lane.b32.xlu0 %v319, 127
        %v747 = vpop.permute.xlu0 %746
        %748 = vrot.lane.b32.xlu0 %v321, 127
        %v749 = vpop.permute.xlu0 %748
        %750 = vrot.lane.b32.xlu0 %v323, 127
        %v751 = vpop.permute.xlu0 %750
        %752 = vrot.lane.b32.xlu0 %v325, 127
        %v753 = vpop.permute.xlu0 %752
        %vm754 = vcmp.lt.s32.totalorder %v301, 127
        %v755 = vsel %vm754, %v723, %v739
        %v756 = vsel %vm754, %v725, %v741
        %v757 = vsel %vm754, %v727, %v743
        %v758 = vsel %vm754, %v729, %v745
        %v759 = vsel %vm754, %v731, %v747
        %v760 = vsel %vm754, %v733, %v749
        %v761 = vsel %vm754, %v735, %v751
        %v762 = vsel %vm754, %v737, %v753
        %v763 = vsel %vm754, %v739, %v723
        %v764 = vsel %vm754, %v741, %v725
        %v765 = vsel %vm754, %v743, %v727
        %v766 = vsel %vm754, %v745, %v729
        %v767 = vsel %vm754, %v747, %v731
        %v768 = vsel %vm754, %v749, %v733
        %v769 = vsel %vm754, %v751, %v735
        %v770 = vsel %vm754, %v753, %v737
        %vm771 = vcmp.eq.s32.totalorder %v570, 1
        %vm772 = vcmp.eq.s32.totalorder %v574, 1
        %v773 = vsel %vm771, %v755, 0.0
        %v774 = vsel %vm772, %v763, 0.0
        %v775 = vsel %vm771, %v756, 0.0
        %v776 = vsel %vm772, %v764, 0.0
        %v777 = vsel %vm771, %v757, 0.0
        %v778 = vsel %vm772, %v765, 0.0
        %v779 = vsel %vm771, %v758, 0.0
        %v780 = vsel %vm772, %v766, 0.0
        %v781 = vsel %vm771, %v759, 0.0
        %v782 = vsel %vm772, %v767, 0.0
        %v783 = vsel %vm771, %v760, 0.0
        %v784 = vsel %vm772, %v768, 0.0
        %v785 = vsel %vm771, %v761, 0.0
        %v786 = vsel %vm772, %v769, 0.0
        %v787 = vsel %vm771, %v762, 0.0
        %v788 = vsel %vm772, %v770, 0.0
        %v789 = vpack.c.bf16 %v775, %v773
        %v790 = vpack.c.bf16 %v776, %v774
        %v791 = vpack.c.bf16 %v779, %v777
        %v792 = vpack.c.bf16 %v780, %v778
        %v793 = vpack.c.bf16 %v783, %v781
        %v794 = vpack.c.bf16 %v784, %v782
        %v795 = vpack.c.bf16 %v787, %v785
        %v796 = vpack.c.bf16 %v788, %v786
        %797 = vst [vmem:[#allocation2 + $0x140] sm:$0xff] %v789
        %798 = vst [vmem:[#allocation2 + $0x148] sm:$0xff] %v790
        %799 = vst [vmem:[#allocation2 + $0x150] sm:$0xff] %v791
        %800 = vst [vmem:[#allocation2 + $0x158] sm:$0xff] %v792
        %801 = vst [vmem:[#allocation2 + $0x160] sm:$0xff] %v793
        %802 = vst [vmem:[#allocation2 + $0x168] sm:$0xff] %v794
        %803 = vst [vmem:[#allocation2 + $0x170] sm:$0xff] %v795
        %804 = vst [vmem:[#allocation2 + $0x178] sm:$0xff] %v796
        %805 = vrot.lane.b32.xlu0 %v310, 113
        %v806 = vpop.permute.xlu0 %805
        %807 = vrot.lane.b32.xlu0 %v312, 113
        %v808 = vpop.permute.xlu0 %807
        %809 = vrot.lane.b32.xlu0 %v314, 113
        %v810 = vpop.permute.xlu0 %809
        %811 = vrot.lane.b32.xlu0 %v316, 113
        %v812 = vpop.permute.xlu0 %811
        %813 = vrot.lane.b32.xlu0 %v318, 113
        %v814 = vpop.permute.xlu0 %813
        %815 = vrot.lane.b32.xlu0 %v320, 113
        %v816 = vpop.permute.xlu0 %815
        %817 = vrot.lane.b32.xlu0 %v322, 113
        %v818 = vpop.permute.xlu0 %817
        %819 = vrot.lane.b32.xlu0 %v324, 113
        %v820 = vpop.permute.xlu0 %819
        %821 = vrot.lane.b32.xlu0 %v311, 113
        %v822 = vpop.permute.xlu0 %821
        %823 = vrot.lane.b32.xlu0 %v313, 113
        %v824 = vpop.permute.xlu0 %823
        %825 = vrot.lane.b32.xlu0 %v315, 113
        %v826 = vpop.permute.xlu0 %825
        %827 = vrot.lane.b32.xlu0 %v317, 113
        %v828 = vpop.permute.xlu0 %827
        %829 = vrot.lane.b32.xlu0 %v319, 113
        %v830 = vpop.permute.xlu0 %829
        %831 = vrot.lane.b32.xlu0 %v321, 113
        %v832 = vpop.permute.xlu0 %831
        %833 = vrot.lane.b32.xlu0 %v323, 113
        %v834 = vpop.permute.xlu0 %833
        %835 = vrot.lane.b32.xlu0 %v325, 113
        %v836 = vpop.permute.xlu0 %835
        %vm837 = vcmp.lt.s32.totalorder %v301, 113
        %v838 = vsel %vm837, %v806, %v822
        %v839 = vsel %vm837, %v808, %v824
        %v840 = vsel %vm837, %v810, %v826
        %v841 = vsel %vm837, %v812, %v828
        %v842 = vsel %vm837, %v814, %v830
        %v843 = vsel %vm837, %v816, %v832
        %v844 = vsel %vm837, %v818, %v834
        %v845 = vsel %vm837, %v820, %v836
        %v846 = vsel %vm837, %v822, %v806
        %v847 = vsel %vm837, %v824, %v808
        %v848 = vsel %vm837, %v826, %v810
        %v849 = vsel %vm837, %v828, %v812
        %v850 = vsel %vm837, %v830, %v814
        %v851 = vsel %vm837, %v832, %v816
        %v852 = vsel %vm837, %v834, %v818
        %v853 = vsel %vm837, %v836, %v820
        %vm854 = vmand %vm306, %vm384
        %vm855 = vmand %vm307, %vm385
        %v856 = vsel %vm854, 1, 0
        %v857 = vsel %vm855, 1, 0
        %v858 = vlaneseq
        %v859 = vshrl.u32 %v858, 7
        %v860 = vsub.s32 0, %v859
        %v861 = vrot.slane %v856, %v860
        %v862 = vlaneseq
        %v863 = vshrl.u32 %v862, 7
        %v864 = vsub.s32 0, %v863
        %v865 = vrot.slane %v857, %v864
        %vm866 = vcmp.eq.s32.totalorder %v861, 1
        %vm867 = vcmp.eq.s32.totalorder %v865, 1
        %v868 = vsel %vm866, %v838, 0.0
        %v869 = vsel %vm867, %v846, 0.0
        %v870 = vsel %vm866, %v839, 0.0
        %v871 = vsel %vm867, %v847, 0.0
        %v872 = vsel %vm866, %v840, 0.0
        %v873 = vsel %vm867, %v848, 0.0
        %v874 = vsel %vm866, %v841, 0.0
        %v875 = vsel %vm867, %v849, 0.0
        %v876 = vsel %vm866, %v842, 0.0
        %v877 = vsel %vm867, %v850, 0.0
        %v878 = vsel %vm866, %v843, 0.0
        %v879 = vsel %vm867, %v851, 0.0
        %v880 = vsel %vm866, %v844, 0.0
        %v881 = vsel %vm867, %v852, 0.0
        %v882 = vsel %vm866, %v845, 0.0
        %v883 = vsel %vm867, %v853, 0.0
        %v884 = vpack.c.bf16 %v870, %v868
        %v885 = vpack.c.bf16 %v871, %v869
        %v886 = vpack.c.bf16 %v874, %v872
        %v887 = vpack.c.bf16 %v875, %v873
        %v888 = vpack.c.bf16 %v878, %v876
        %v889 = vpack.c.bf16 %v879, %v877
        %v890 = vpack.c.bf16 %v882, %v880
        %v891 = vpack.c.bf16 %v883, %v881
        %892 = vst [vmem:[#allocation2 + $0x180] sm:$0xff] %v884
        %893 = vst [vmem:[#allocation2 + $0x188] sm:$0xff] %v885
        %894 = vst [vmem:[#allocation2 + $0x190] sm:$0xff] %v886
        %895 = vst [vmem:[#allocation2 + $0x198] sm:$0xff] %v887
        %896 = vst [vmem:[#allocation2 + $0x1a0] sm:$0xff] %v888
        %897 = vst [vmem:[#allocation2 + $0x1a8] sm:$0xff] %v889
        %898 = vst [vmem:[#allocation2 + $0x1b0] sm:$0xff] %v890
        %899 = vst [vmem:[#allocation2 + $0x1b8] sm:$0xff] %v891
        %900 = vrot.lane.b32.xlu0 %v310, 112
        %v901 = vpop.permute.xlu0 %900
        %902 = vrot.lane.b32.xlu0 %v312, 112
        %v903 = vpop.permute.xlu0 %902
        %904 = vrot.lane.b32.xlu0 %v314, 112
        %v905 = vpop.permute.xlu0 %904
        %906 = vrot.lane.b32.xlu0 %v316, 112
        %v907 = vpop.permute.xlu0 %906
        %908 = vrot.lane.b32.xlu0 %v318, 112
        %v909 = vpop.permute.xlu0 %908
        %910 = vrot.lane.b32.xlu0 %v320, 112
        %v911 = vpop.permute.xlu0 %910
        %912 = vrot.lane.b32.xlu0 %v322, 112
        %v913 = vpop.permute.xlu0 %912
        %914 = vrot.lane.b32.xlu0 %v324, 112
        %v915 = vpop.permute.xlu0 %914
        %916 = vrot.lane.b32.xlu0 %v311, 112
        %v917 = vpop.permute.xlu0 %916
        %918 = vrot.lane.b32.xlu0 %v313, 112
        %v919 = vpop.permute.xlu0 %918
        %920 = vrot.lane.b32.xlu0 %v315, 112
        %v921 = vpop.permute.xlu0 %920
        %922 = vrot.lane.b32.xlu0 %v317, 112
        %v923 = vpop.permute.xlu0 %922
        %924 = vrot.lane.b32.xlu0 %v319, 112
        %v925 = vpop.permute.xlu0 %924
        %926 = vrot.lane.b32.xlu0 %v321, 112
        %v927 = vpop.permute.xlu0 %926
        %928 = vrot.lane.b32.xlu0 %v323, 112
        %v929 = vpop.permute.xlu0 %928
        %930 = vrot.lane.b32.xlu0 %v325, 112
        %v931 = vpop.permute.xlu0 %930
        %vm932 = vcmp.lt.s32.totalorder %v301, 112
        %v933 = vsel %vm932, %v901, %v917
        %v934 = vsel %vm932, %v903, %v919
        %v935 = vsel %vm932, %v905, %v921
        %v936 = vsel %vm932, %v907, %v923
        %v937 = vsel %vm932, %v909, %v925
        %v938 = vsel %vm932, %v911, %v927
        %v939 = vsel %vm932, %v913, %v929
        %v940 = vsel %vm932, %v915, %v931
        %v941 = vsel %vm932, %v917, %v901
        %v942 = vsel %vm932, %v919, %v903
        %v943 = vsel %vm932, %v921, %v905
        %v944 = vsel %vm932, %v923, %v907
        %v945 = vsel %vm932, %v925, %v909
        %v946 = vsel %vm932, %v927, %v911
        %v947 = vsel %vm932, %v929, %v913
        %v948 = vsel %vm932, %v931, %v915
        %v949 = vsel %vm306, 1, 0
        %v950 = vsel %vm307, 1, 0
        %vm951 = vcmp.eq.s32.totalorder %v949, 1
        %vm952 = vcmp.eq.s32.totalorder %v950, 1
        %v953 = vsel %vm951, %v933, 0.0
        %v954 = vsel %vm952, %v941, 0.0
        %v955 = vsel %vm951, %v934, 0.0
        %v956 = vsel %vm952, %v942, 0.0
        %v957 = vsel %vm951, %v935, 0.0
        %v958 = vsel %vm952, %v943, 0.0
        %v959 = vsel %vm951, %v936, 0.0
        %v960 = vsel %vm952, %v944, 0.0
        %v961 = vsel %vm951, %v937, 0.0
        %v962 = vsel %vm952, %v945, 0.0
        %v963 = vsel %vm951, %v938, 0.0
        %v964 = vsel %vm952, %v946, 0.0
        %v965 = vsel %vm951, %v939, 0.0
        %v966 = vsel %vm952, %v947, 0.0
        %v967 = vsel %vm951, %v940, 0.0
        %v968 = vsel %vm952, %v948, 0.0
        %v969 = vpack.c.bf16 %v955, %v953
        %v970 = vpack.c.bf16 %v956, %v954
        %v971 = vpack.c.bf16 %v959, %v957
        %v972 = vpack.c.bf16 %v960, %v958
        %v973 = vpack.c.bf16 %v963, %v961
        %v974 = vpack.c.bf16 %v964, %v962
        %v975 = vpack.c.bf16 %v967, %v965
        %v976 = vpack.c.bf16 %v968, %v966
        %977 = vst [vmem:[#allocation2 + $0x1c0] sm:$0xff] %v969
        %978 = vst [vmem:[#allocation2 + $0x1c8] sm:$0xff] %v970
        %979 = vst [vmem:[#allocation2 + $0x1d0] sm:$0xff] %v971
        %980 = vst [vmem:[#allocation2 + $0x1d8] sm:$0xff] %v972
        %981 = vst [vmem:[#allocation2 + $0x1e0] sm:$0xff] %v973
        %982 = vst [vmem:[#allocation2 + $0x1e8] sm:$0xff] %v974
        %983 = vst [vmem:[#allocation2 + $0x1f0] sm:$0xff] %v975
        %984 = vst [vmem:[#allocation2 + $0x1f8] sm:$0xff] %v976
        %985 = vrot.lane.b32.xlu0 %v310, 111
        %v986 = vpop.permute.xlu0 %985
        %987 = vrot.lane.b32.xlu0 %v312, 111
        %v988 = vpop.permute.xlu0 %987
        %989 = vrot.lane.b32.xlu0 %v314, 111
        %v990 = vpop.permute.xlu0 %989
        %991 = vrot.lane.b32.xlu0 %v316, 111
        %v992 = vpop.permute.xlu0 %991
        %993 = vrot.lane.b32.xlu0 %v318, 111
        %v994 = vpop.permute.xlu0 %993
        %995 = vrot.lane.b32.xlu0 %v320, 111
        %v996 = vpop.permute.xlu0 %995
        %997 = vrot.lane.b32.xlu0 %v322, 111
        %v998 = vpop.permute.xlu0 %997
        %999 = vrot.lane.b32.xlu0 %v324, 111
        %v1000 = vpop.permute.xlu0 %999
        %1001 = vrot.lane.b32.xlu0 %v311, 111
        %v1002 = vpop.permute.xlu0 %1001
        %1003 = vrot.lane.b32.xlu0 %v313, 111
        %v1004 = vpop.permute.xlu0 %1003
        %1005 = vrot.lane.b32.xlu0 %v315, 111
        %v1006 = vpop.permute.xlu0 %1005
        %1007 = vrot.lane.b32.xlu0 %v317, 111
        %v1008 = vpop.permute.xlu0 %1007
        %1009 = vrot.lane.b32.xlu0 %v319, 111
        %v1010 = vpop.permute.xlu0 %1009
        %1011 = vrot.lane.b32.xlu0 %v321, 111
        %v1012 = vpop.permute.xlu0 %1011
        %1013 = vrot.lane.b32.xlu0 %v323, 111
        %v1014 = vpop.permute.xlu0 %1013
        %1015 = vrot.lane.b32.xlu0 %v325, 111
        %v1016 = vpop.permute.xlu0 %1015
        %vm1017 = vcmp.lt.s32.totalorder %v301, 111
        %v1018 = vsel %vm1017, %v986, %v1002
        %v1019 = vsel %vm1017, %v988, %v1004
        %v1020 = vsel %vm1017, %v990, %v1006
        %v1021 = vsel %vm1017, %v992, %v1008
        %v1022 = vsel %vm1017, %v994, %v1010
        %v1023 = vsel %vm1017, %v996, %v1012
        %v1024 = vsel %vm1017, %v998, %v1014
        %v1025 = vsel %vm1017, %v1000, %v1016
        %v1026 = vsel %vm1017, %v1002, %v986
        %v1027 = vsel %vm1017, %v1004, %v988
        %v1028 = vsel %vm1017, %v1006, %v990
        %v1029 = vsel %vm1017, %v1008, %v992
        %v1030 = vsel %vm1017, %v1010, %v994
        %v1031 = vsel %vm1017, %v1012, %v996
        %v1032 = vsel %vm1017, %v1014, %v998
        %v1033 = vsel %vm1017, %v1016, %v1000
        %vm1034 = vmand %vm306, %vm575
        %vm1035 = vmand %vm307, %vm576
        %v1036 = vsel %vm1034, 1, 0
        %v1037 = vsel %vm1035, 1, 0
        %v1038 = vlaneseq
        %v1039 = vshrl.u32 %v1038, 7
        %v1040 = vsub.s32 0, %v1039
        %v1041 = vrot.slane %v1036, %v1040
        %v1042 = vlaneseq
        %v1043 = vshrl.u32 %v1042, 7
        %v1044 = vsub.s32 0, %v1043
        %v1045 = vrot.slane %v1037, %v1044
        %vm1046 = vcmp.eq.s32.totalorder %v1041, 1
        %vm1047 = vcmp.eq.s32.totalorder %v1045, 1
        %v1048 = vsel %vm1046, %v1018, 0.0
        %v1049 = vsel %vm1047, %v1026, 0.0
        %v1050 = vsel %vm1046, %v1019, 0.0
        %v1051 = vsel %vm1047, %v1027, 0.0
        %v1052 = vsel %vm1046, %v1020, 0.0
        %v1053 = vsel %vm1047, %v1028, 0.0
        %v1054 = vsel %vm1046, %v1021, 0.0
        %v1055 = vsel %vm1047, %v1029, 0.0
        %v1056 = vsel %vm1046, %v1022, 0.0
        %v1057 = vsel %vm1047, %v1030, 0.0
        %v1058 = vsel %vm1046, %v1023, 0.0
        %v1059 = vsel %vm1047, %v1031, 0.0
        %v1060 = vsel %vm1046, %v1024, 0.0
        %v1061 = vsel %vm1047, %v1032, 0.0
        %v1062 = vsel %vm1046, %v1025, 0.0
        %v1063 = vsel %vm1047, %v1033, 0.0
        %v1064 = vpack.c.bf16 %v1050, %v1048
        %v1065 = vpack.c.bf16 %v1051, %v1049
        %v1066 = vpack.c.bf16 %v1054, %v1052
        %v1067 = vpack.c.bf16 %v1055, %v1053
        %v1068 = vpack.c.bf16 %v1058, %v1056
        %v1069 = vpack.c.bf16 %v1059, %v1057
        %v1070 = vpack.c.bf16 %v1062, %v1060
        %v1071 = vpack.c.bf16 %v1063, %v1061
        %1072 = vst [vmem:[#allocation2 + $0x200] sm:$0xff] %v1064
        %1073 = vst [vmem:[#allocation2 + $0x208] sm:$0xff] %v1065
        %1074 = vst [vmem:[#allocation2 + $0x210] sm:$0xff] %v1066
        %1075 = vst [vmem:[#allocation2 + $0x218] sm:$0xff] %v1067
        %1076 = vst [vmem:[#allocation2 + $0x220] sm:$0xff] %v1068
        %1077 = vst [vmem:[#allocation2 + $0x228] sm:$0xff] %v1069
        %1078 = vst [vmem:[#allocation2 + $0x230] sm:$0xff] %v1070
        %1079 = vst [vmem:[#allocation2 + $0x238] sm:$0xff] %v1071
        %v1080 = vld [vmem:[#allocation6] sm:$0xff]
        %v1081 = vld [vmem:[#allocation6 + $0x8] sm:$0xff]
        %v1082 = vld [vmem:[#allocation6 + $0x10] sm:$0xf]
        %v1083 = vld [vmem:[#allocation6 + $0x14] sm:$0xff]
        %v1084 = vld [vmem:[#allocation6 + $0x1c] sm:$0xff]
        %v1085 = vld [vmem:[#allocation6 + $0x24] sm:$0xf]
        %v1086 = vld [vmem:[#allocation6 + $0x28] sm:$0xff]
        %v1087 = vld [vmem:[#allocation6 + $0x30] sm:$0xff]
        %v1088 = vld [vmem:[#allocation6 + $0x38] sm:$0xf]
        %v1089 = vld [vmem:[#allocation6 + $0x3c] sm:$0xff]
        %v1090 = vld [vmem:[#allocation6 + $0x44] sm:$0xff]
        %v1091 = vld [vmem:[#allocation6 + $0x4c] sm:$0xf]
        %v1092 = vld [vmem:[#allocation6 + $0x50] sm:$0xff]
        %v1093 = vld [vmem:[#allocation6 + $0x58] sm:$0xff]
        %v1094 = vld [vmem:[#allocation6 + $0x60] sm:$0xf]
        %v1095 = vld [vmem:[#allocation6 + $0x64] sm:$0xff]
        %v1096 = vld [vmem:[#allocation6 + $0x6c] sm:$0xff]
        %v1097 = vld [vmem:[#allocation6 + $0x74] sm:$0xf]
        %v1098 = vld [vmem:[#allocation6 + $0x78] sm:$0xff]
        %v1099 = vld [vmem:[#allocation6 + $0x80] sm:$0xff]
        %v1100 = vld [vmem:[#allocation6 + $0x88] sm:$0xf]
        %v1101 = vld [vmem:[#allocation6 + $0x8c] sm:$0xff]
        %v1102 = vld [vmem:[#allocation6 + $0x94] sm:$0xff]
        %v1103 = vld [vmem:[#allocation6 + $0x9c] sm:$0xf]
        %v1104 = vld [vmem:[#allocation2] sm:$0xff]
        %v1105 = vld [vmem:[#allocation2 + $0x8] sm:$0xff]
        %v1106 = vld [vmem:[#allocation2 + $0x10] sm:$0xff]
        %v1107 = vld [vmem:[#allocation2 + $0x18] sm:$0xff]
        %v1108 = vld [vmem:[#allocation2 + $0x20] sm:$0xff]
        %v1109 = vld [vmem:[#allocation2 + $0x28] sm:$0xff]
        %v1110 = vld [vmem:[#allocation2 + $0x30] sm:$0xff]
        %v1111 = vld [vmem:[#allocation2 + $0x38] sm:$0xff]
        %v1112 = vld [vmem:[#allocation2 + $0x40] sm:$0xff]
        %v1113 = vld [vmem:[#allocation2 + $0x48] sm:$0xff]
        %v1114 = vld [vmem:[#allocation2 + $0x50] sm:$0xff]
        %v1115 = vld [vmem:[#allocation2 + $0x58] sm:$0xff]
        %v1116 = vld [vmem:[#allocation2 + $0x60] sm:$0xff]
        %v1117 = vld [vmem:[#allocation2 + $0x68] sm:$0xff]
        %v1118 = vld [vmem:[#allocation2 + $0x70] sm:$0xff]
        %v1119 = vld [vmem:[#allocation2 + $0x78] sm:$0xff]
        %v1120 = vld [vmem:[#allocation2 + $0x80] sm:$0xff]
        %v1121 = vld [vmem:[#allocation2 + $0x88] sm:$0xff]
        %v1122 = vld [vmem:[#allocation2 + $0x90] sm:$0xff]
        %v1123 = vld [vmem:[#allocation2 + $0x98] sm:$0xff]
        %v1124 = vld [vmem:[#allocation2 + $0xa0] sm:$0xff]
        %v1125 = vld [vmem:[#allocation2 + $0xa8] sm:$0xff]
        %v1126 = vld [vmem:[#allocation2 + $0xb0] sm:$0xff]
        %v1127 = vld [vmem:[#allocation2 + $0xb8] sm:$0xff]
        %v1128 = vld [vmem:[#allocation2 + $0xc0] sm:$0xff]
        %v1129 = vld [vmem:[#allocation2 + $0xc8] sm:$0xff]
        %v1130 = vld [vmem:[#allocation2 + $0xd0] sm:$0xff]
        %v1131 = vld [vmem:[#allocation2 + $0xd8] sm:$0xff]
        %v1132 = vld [vmem:[#allocation2 + $0xe0] sm:$0xff]
        %v1133 = vld [vmem:[#allocation2 + $0xe8] sm:$0xff]
        %v1134 = vld [vmem:[#allocation2 + $0xf0] sm:$0xff]
        %v1135 = vld [vmem:[#allocation2 + $0xf8] sm:$0xff]
        %v1136 = vld [vmem:[#allocation2 + $0x100] sm:$0xff]
        %v1137 = vld [vmem:[#allocation2 + $0x108] sm:$0xff]
        %v1138 = vld [vmem:[#allocation2 + $0x110] sm:$0xff]
        %v1139 = vld [vmem:[#allocation2 + $0x118] sm:$0xff]
        %v1140 = vld [vmem:[#allocation2 + $0x120] sm:$0xff]
        %v1141 = vld [vmem:[#allocation2 + $0x128] sm:$0xff]
        %v1142 = vld [vmem:[#allocation2 + $0x130] sm:$0xff]
        %v1143 = vld [vmem:[#allocation2 + $0x138] sm:$0xff]
        %v1144 = vld [vmem:[#allocation2 + $0x140] sm:$0xff]
        %v1145 = vld [vmem:[#allocation2 + $0x148] sm:$0xff]
        %v1146 = vld [vmem:[#allocation2 + $0x150] sm:$0xff]
        %v1147 = vld [vmem:[#allocation2 + $0x158] sm:$0xff]
        %v1148 = vld [vmem:[#allocation2 + $0x160] sm:$0xff]
        %v1149 = vld [vmem:[#allocation2 + $0x168] sm:$0xff]
        %v1150 = vld [vmem:[#allocation2 + $0x170] sm:$0xff]
        %v1151 = vld [vmem:[#allocation2 + $0x178] sm:$0xff]
        %v1152 = vld [vmem:[#allocation2 + $0x180] sm:$0xff]
        %v1153 = vld [vmem:[#allocation2 + $0x188] sm:$0xff]
        %v1154 = vld [vmem:[#allocation2 + $0x190] sm:$0xff]
        %v1155 = vld [vmem:[#allocation2 + $0x198] sm:$0xff]
        %v1156 = vld [vmem:[#allocation2 + $0x1a0] sm:$0xff]
        %v1157 = vld [vmem:[#allocation2 + $0x1a8] sm:$0xff]
        %v1158 = vld [vmem:[#allocation2 + $0x1b0] sm:$0xff]
        %v1159 = vld [vmem:[#allocation2 + $0x1b8] sm:$0xff]
        %v1160 = vld [vmem:[#allocation2 + $0x1c0] sm:$0xff]
        %v1161 = vld [vmem:[#allocation2 + $0x1c8] sm:$0xff]
        %v1162 = vld [vmem:[#allocation2 + $0x1d0] sm:$0xff]
        %v1163 = vld [vmem:[#allocation2 + $0x1d8] sm:$0xff]
        %v1164 = vld [vmem:[#allocation2 + $0x1e0] sm:$0xff]
        %v1165 = vld [vmem:[#allocation2 + $0x1e8] sm:$0xff]
        %v1166 = vld [vmem:[#allocation2 + $0x1f0] sm:$0xff]
        %v1167 = vld [vmem:[#allocation2 + $0x1f8] sm:$0xff]
        %v1168 = vld [vmem:[#allocation2 + $0x200] sm:$0xff]
        %v1169 = vld [vmem:[#allocation2 + $0x208] sm:$0xff]
        %v1170 = vld [vmem:[#allocation2 + $0x210] sm:$0xff]
        %v1171 = vld [vmem:[#allocation2 + $0x218] sm:$0xff]
        %v1172 = vld [vmem:[#allocation2 + $0x220] sm:$0xff]
        %v1173 = vld [vmem:[#allocation2 + $0x228] sm:$0xff]
        %v1174 = vld [vmem:[#allocation2 + $0x230] sm:$0xff]
        %v1175 = vld [vmem:[#allocation2 + $0x238] sm:$0xff]
        %v1176 = vld [vmem:[%s3] sm:$0xff]
        %v1177 = vld [vmem:[%s3 + $0x8] sm:$0xff]
        %v1178 = vld [vmem:[%s3 + $0x10] sm:$0xff]
        %v1179 = vld [vmem:[%s3 + $0x18] sm:$0xff]
        %v1180 = vld [vmem:[%s3 + $0x20] sm:$0xff]
        %v1181 = vld [vmem:[%s3 + $0x28] sm:$0xff]
        %v1182 = vld [vmem:[%s3 + $0x30] sm:$0xff]
        %v1183 = vld [vmem:[%s3 + $0x38] sm:$0xff]
        %1185 = vset.pattern.permute.xlu0 0
        %1186 = vperm.xlu0 %1185, %v1176
        %v1187 = vpop.permute.xlu0 %1186
        %1190 = vset.pattern.permute.xlu0 0
        %1191 = vperm.xlu0 %1190, %v1177
        %v1192 = vpop.permute.xlu0 %1191
        %1195 = vset.pattern.permute.xlu0 0
        %1196 = vperm.xlu0 %1195, %v1178
        %v1197 = vpop.permute.xlu0 %1196
        %1200 = vset.pattern.permute.xlu0 0
        %1201 = vperm.xlu0 %1200, %v1179
        %v1202 = vpop.permute.xlu0 %1201
        %1205 = vset.pattern.permute.xlu0 0
        %1206 = vperm.xlu0 %1205, %v1180
        %v1207 = vpop.permute.xlu0 %1206
        %1210 = vset.pattern.permute.xlu0 0
        %1211 = vperm.xlu0 %1210, %v1181
        %v1212 = vpop.permute.xlu0 %1211
        %1215 = vset.pattern.permute.xlu0 0
        %1216 = vperm.xlu0 %1215, %v1182
        %v1217 = vpop.permute.xlu0 %1216
        %1220 = vset.pattern.permute.xlu0 0
        %1221 = vperm.xlu0 %1220, %v1183
        %v1222 = vpop.permute.xlu0 %1221
        %v1248 = vunpack.c.l.b16 %v1080
        %v1249 = vunpack.c.h.b16 %v1080
        %v1250 = vunpack.c.l.b16 %v1081
        %v1251 = vunpack.c.h.b16 %v1081
        %v1252 = vunpack.c.l.b16 %v1082
        %v1253 = vunpack.c.l.b16 %v1083
        %v1254 = vunpack.c.h.b16 %v1083
        %v1255 = vunpack.c.l.b16 %v1084
        %v1256 = vunpack.c.h.b16 %v1084
        %v1257 = vunpack.c.l.b16 %v1085
        %v1258 = vunpack.c.l.b16 %v1086
        %v1259 = vunpack.c.h.b16 %v1086
        %v1260 = vunpack.c.l.b16 %v1087
        %v1261 = vunpack.c.h.b16 %v1087
        %v1262 = vunpack.c.l.b16 %v1088
        %v1263 = vunpack.c.l.b16 %v1089
        %v1264 = vunpack.c.h.b16 %v1089
        %v1265 = vunpack.c.l.b16 %v1090
        %v1266 = vunpack.c.h.b16 %v1090
        %v1267 = vunpack.c.l.b16 %v1091
        %v1268 = vunpack.c.l.b16 %v1092
        %v1269 = vunpack.c.h.b16 %v1092
        %v1270 = vunpack.c.l.b16 %v1093
        %v1271 = vunpack.c.h.b16 %v1093
        %v1272 = vunpack.c.l.b16 %v1094
        %v1273 = vunpack.c.l.b16 %v1095
        %v1274 = vunpack.c.h.b16 %v1095
        %v1275 = vunpack.c.l.b16 %v1096
        %v1276 = vunpack.c.h.b16 %v1096
        %v1277 = vunpack.c.l.b16 %v1097
        %v1278 = vunpack.c.l.b16 %v1098
        %v1279 = vunpack.c.h.b16 %v1098
        %v1280 = vunpack.c.l.b16 %v1099
        %v1281 = vunpack.c.h.b16 %v1099
        %v1282 = vunpack.c.l.b16 %v1100
        %v1283 = vunpack.c.l.b16 %v1101
        %v1284 = vunpack.c.h.b16 %v1101
        %v1285 = vunpack.c.l.b16 %v1102
        %v1286 = vunpack.c.h.b16 %v1102
        %v1287 = vunpack.c.l.b16 %v1103
        %v1288 = vpack.c.b16 %v1253, %v1248
        %v1289 = vpack.c.b16 %v1254, %v1249
        %v1290 = vpack.c.b16 %v1255, %v1250
        %v1291 = vpack.c.b16 %v1256, %v1251
        %v1292 = vpack.c.b16 %v1257, %v1252
        %v1293 = vpack.c.b16 %v1263, %v1258
        %v1294 = vpack.c.b16 %v1264, %v1259
        %v1295 = vpack.c.b16 %v1265, %v1260
        %v1296 = vpack.c.b16 %v1266, %v1261
        %v1297 = vpack.c.b16 %v1267, %v1262
        %v1298 = vpack.c.b16 %v1273, %v1268
        %v1299 = vpack.c.b16 %v1274, %v1269
        %v1300 = vpack.c.b16 %v1275, %v1270
        %v1301 = vpack.c.b16 %v1276, %v1271
        %v1302 = vpack.c.b16 %v1277, %v1272
        %v1303 = vpack.c.b16 %v1283, %v1278
        %v1304 = vpack.c.b16 %v1284, %v1279
        %v1305 = vpack.c.b16 %v1285, %v1280
        %v1306 = vpack.c.b16 %v1286, %v1281
        %v1307 = vpack.c.b16 %v1287, %v1282
        %vm1324 = vcmask 523264
        %v1326 = vsel %vm1324, %v1292, 0
        %v1329 = vsel %vm1324, %v1297, 0
        %v1332 = vsel %vm1324, %v1302, 0
        %v1335 = vsel %vm1324, %v1307, 0
        %1337 = vmatprep.subr.bf16.mxu0 %v1105
        %1338 = vmatpush1.bf16.msra.mxu0 %v1104
        %1339 = vmatprep.subr.bf16.mxu0 %v1107
        %1340 = vmatpush1.bf16.msra.mxu0 %v1106
        %1341 = vmatprep.subr.bf16.mxu0 %v1109
        %1342 = vmatpush1.bf16.msra.mxu0 %v1108
        %1343 = vmatprep.subr.bf16.mxu0 %v1111
        %1344 = vmatpush1.bf16.msra.mxu0 %v1110
        %1345 = vmatprep.subr.bf16.mxu0 %v1113
        %1346 = vmatpush1.bf16.msra.mxu0 %v1112
        %1347 = vmatprep.subr.bf16.mxu0 %v1115
        %1348 = vmatpush1.bf16.msra.mxu0 %v1114
        %1349 = vmatprep.subr.bf16.mxu0 %v1117
        %1350 = vmatpush1.bf16.msra.mxu0 %v1116
        %1351 = vmatprep.subr.bf16.mxu0 %v1119
        %1352 = vmatpush1.bf16.msra.mxu0 %v1118
        %1353 = vmatprep.subr.bf16.mxu0 %v1121
        %1354 = vmatpush1.bf16.msra.mxu0 %v1120
        %1355 = vmatprep.subr.bf16.mxu0 %v1123
        %1356 = vmatpush1.bf16.msra.mxu0 %v1122
        %1357 = vmatprep.subr.bf16.mxu0 %v1125
        %1358 = vmatpush1.bf16.msra.mxu0 %v1124
        %1359 = vmatprep.subr.bf16.mxu0 %v1127
        %1360 = vmatpush1.bf16.msra.mxu0 %v1126
        %1361 = vmatprep.subr.bf16.mxu0 %v1129
        %1362 = vmatpush1.bf16.msra.mxu0 %v1128
        %1363 = vmatprep.subr.bf16.mxu0 %v1131
        %1364 = vmatpush1.bf16.msra.mxu0 %v1130
        %1365 = vmatprep.subr.bf16.mxu0 %v1133
        %1366 = vmatpush1.bf16.msra.mxu0 %v1132
        %1367 = vmatprep.subr.bf16.mxu0 %v1135
        %1368 = vmatpush1.bf16.msra.mxu0 %v1134
        %1369 = vmatprep.mubr.bf16.mxu0 %v1289
        %1370 = vmatmul.mubr.bf16.gmra.mrb[0].mxu0 %v1288
        %v1371 = vpop.f32.mrb[0].mxu0
        %v1372 = vadd.f32 %v1187, %v1371
        %v1373 = vpop.f32.mrb[0].mxu0
        %v1374 = vadd.f32 %v1187, %v1373
        %v1375 = vpop.f32.mrb[0].mxu0
        %v1376 = vadd.f32 %v1192, %v1375
        %v1377 = vpop.f32.mrb[0].mxu0
        %v1378 = vadd.f32 %v1192, %v1377
        %1379 = vmatprep.mubr.bf16.mxu0 %v1294
        %1380 = vmatmul.mubr.bf16.gmra.mrb[0].mxu0 %v1293
        %v1381 = vpop.f32.mrb[0].mxu0
        %v1382 = vadd.f32 %v1197, %v1381
        %v1383 = vpop.f32.mrb[0].mxu0
        %v1384 = vadd.f32 %v1197, %v1383
        %v1385 = vpop.f32.mrb[0].mxu0
        %v1386 = vadd.f32 %v1202, %v1385
        %v1387 = vpop.f32.mrb[0].mxu0
        %v1388 = vadd.f32 %v1202, %v1387
        %1389 = vmatprep.mubr.bf16.mxu0 %v1299
        %1390 = vmatmul.mubr.bf16.gmra.mrb[0].mxu0 %v1298
        %v1391 = vpop.f32.mrb[0].mxu0
        %v1392 = vadd.f32 %v1207, %v1391
        %v1393 = vpop.f32.mrb[0].mxu0
        %v1394 = vadd.f32 %v1207, %v1393
        %v1395 = vpop.f32.mrb[0].mxu0
        %v1396 = vadd.f32 %v1212, %v1395
        %v1397 = vpop.f32.mrb[0].mxu0
        %v1398 = vadd.f32 %v1212, %v1397
        %1399 = vmatprep.mubr.bf16.mxu0 %v1304
        %1400 = vmatmul.mubr.bf16.gmra.mrb[0].mxu0 %v1303
        %v1401 = vpop.f32.mrb[0].mxu0
        %v1402 = vadd.f32 %v1217, %v1401
        %v1403 = vpop.f32.mrb[0].mxu0
        %v1404 = vadd.f32 %v1217, %v1403
        %v1405 = vpop.f32.mrb[0].mxu0
        %v1406 = vadd.f32 %v1222, %v1405
        %v1407 = vpop.f32.mrb[0].mxu0
        %v1408 = vadd.f32 %v1222, %v1407
        %1409 = vdwg.mxu0
        %1410 = vmatprep.subr.bf16.mxu0 %v1137
        %1411 = vmatpush1.bf16.msra.mxu0 %v1136
        %1412 = vmatprep.subr.bf16.mxu0 %v1139
        %1413 = vmatpush1.bf16.msra.mxu0 %v1138
        %1414 = vmatprep.subr.bf16.mxu0 %v1141
        %1415 = vmatpush1.bf16.msra.mxu0 %v1140
        %1416 = vmatprep.subr.bf16.mxu0 %v1143
        %1417 = vmatpush1.bf16.msra.mxu0 %v1142
        %1418 = vmatprep.subr.bf16.mxu0 %v1145
        %1419 = vmatpush1.bf16.msra.mxu0 %v1144
        %1420 = vmatprep.subr.bf16.mxu0 %v1147
        %1421 = vmatpush1.bf16.msra.mxu0 %v1146
        %1422 = vmatprep.subr.bf16.mxu0 %v1149
        %1423 = vmatpush1.bf16.msra.mxu0 %v1148
        %1424 = vmatprep.subr.bf16.mxu0 %v1151
        %1425 = vmatpush1.bf16.msra.mxu0 %v1150
        %1426 = vmatprep.subr.bf16.mxu0 %v1153
        %1427 = vmatpush1.bf16.msra.mxu0 %v1152
        %1428 = vmatprep.subr.bf16.mxu0 %v1155
        %1429 = vmatpush1.bf16.msra.mxu0 %v1154
        %1430 = vmatprep.subr.bf16.mxu0 %v1157
        %1431 = vmatpush1.bf16.msra.mxu0 %v1156
        %1432 = vmatprep.subr.bf16.mxu0 %v1159
        %1433 = vmatpush1.bf16.msra.mxu0 %v1158
        %1434 = vmatprep.subr.bf16.mxu0 %v1161
        %1435 = vmatpush1.bf16.msra.mxu0 %v1160
        %1436 = vmatprep.subr.bf16.mxu0 %v1163
        %1437 = vmatpush1.bf16.msra.mxu0 %v1162
        %1438 = vmatprep.subr.bf16.mxu0 %v1165
        %1439 = vmatpush1.bf16.msra.mxu0 %v1164
        %1440 = vmatprep.subr.bf16.mxu0 %v1167
        %1441 = vmatpush1.bf16.msra.mxu0 %v1166
        %1442 = vmatprep.mubr.bf16.mxu0 %v1291
        %1443 = vmatmul.mubr.bf16.gmra.mrb[0].mxu0 %v1290
        %v1444 = vpop.f32.mrb[0].mxu0
        %v1445 = vadd.f32 %v1372, %v1444
        %v1446 = vpop.f32.mrb[0].mxu0
        %v1447 = vadd.f32 %v1374, %v1446
        %v1448 = vpop.f32.mrb[0].mxu0
        %v1449 = vadd.f32 %v1376, %v1448
        %v1450 = vpop.f32.mrb[0].mxu0
        %v1451 = vadd.f32 %v1378, %v1450
        %1452 = vmatprep.mubr.bf16.mxu0 %v1296
        %1453 = vmatmul.mubr.bf16.gmra.mrb[0].mxu0 %v1295
        %v1454 = vpop.f32.mrb[0].mxu0
        %v1455 = vadd.f32 %v1382, %v1454
        %v1456 = vpop.f32.mrb[0].mxu0
        %v1457 = vadd.f32 %v1384, %v1456
        %v1458 = vpop.f32.mrb[0].mxu0
        %v1459 = vadd.f32 %v1386, %v1458
        %v1460 = vpop.f32.mrb[0].mxu0
        %v1461 = vadd.f32 %v1388, %v1460
        %1462 = vmatprep.mubr.bf16.mxu0 %v1301
        %1463 = vmatmul.mubr.bf16.gmra.mrb[0].mxu0 %v1300
        %v1464 = vpop.f32.mrb[0].mxu0
        %v1465 = vadd.f32 %v1392, %v1464
        %v1466 = vpop.f32.mrb[0].mxu0
        %v1467 = vadd.f32 %v1394, %v1466
        %v1468 = vpop.f32.mrb[0].mxu0
        %v1469 = vadd.f32 %v1396, %v1468
        %v1470 = vpop.f32.mrb[0].mxu0
        %v1471 = vadd.f32 %v1398, %v1470
        %1472 = vmatprep.mubr.bf16.mxu0 %v1306
        %1473 = vmatmul.mubr.bf16.gmra.mrb[0].mxu0 %v1305
        %v1474 = vpop.f32.mrb[0].mxu0
        %v1475 = vadd.f32 %v1402, %v1474
        %v1476 = vpop.f32.mrb[0].mxu0
        %v1477 = vadd.f32 %v1404, %v1476
        %v1478 = vpop.f32.mrb[0].mxu0
        %v1479 = vadd.f32 %v1406, %v1478
        %v1480 = vpop.f32.mrb[0].mxu0
        %v1481 = vadd.f32 %v1408, %v1480
        %1482 = vdwg.mxu0
        %1483 = vmatprep.subr.bf16.mxu0 %v1169
        %1484 = vmatpush1.bf16.msra.mxu0 %v1168
        %1485 = vmatprep.subr.bf16.mxu0 %v1171
        %1486 = vmatpush1.bf16.msra.mxu0 %v1170
        %1487 = vmatprep.subr.bf16.mxu0 %v1173
        %1488 = vmatpush1.bf16.msra.mxu0 %v1172
        %1489 = vmatprep.subr.bf16.mxu0 %v1175
        %1490 = vmatpush1.bf16.msra.mxu0 %v1174
        %1491 = vmatprep.subr.bf16.mxu0 0
        %1492 = vmatpush1.bf16.msra.mxu0 0
        %1493 = vmatprep.subr.bf16.mxu0 0
        %1494 = vmatpush1.bf16.msra.mxu0 0
        %1495 = vmatprep.subr.bf16.mxu0 0
        %1496 = vmatpush1.bf16.msra.mxu0 0
        %1497 = vmatprep.subr.bf16.mxu0 0
        %1498 = vmatpush1.bf16.msra.mxu0 0
        %1499 = vmatprep.subr.bf16.mxu0 0
        %1500 = vmatpush1.bf16.msra.mxu0 0
        %1501 = vmatprep.subr.bf16.mxu0 0
        %1502 = vmatpush1.bf16.msra.mxu0 0
        %1503 = vmatprep.subr.bf16.mxu0 0
        %1504 = vmatpush1.bf16.msra.mxu0 0
        %1505 = vmatprep.subr.bf16.mxu0 0
        %1506 = vmatpush1.bf16.msra.mxu0 0
        %1507 = vmatprep.subr.bf16.mxu0 0
        %1508 = vmatpush1.bf16.msra.mxu0 0
        %1509 = vmatprep.subr.bf16.mxu0 0
        %1510 = vmatpush1.bf16.msra.mxu0 0
        %1511 = vmatprep.subr.bf16.mxu0 0
        %1512 = vmatpush1.bf16.msra.mxu0 0
        %1513 = vmatprep.subr.bf16.mxu0 0
        %1514 = vmatpush1.bf16.msra.mxu0 0
        %1515 = vmatprep.mubr.bf16.mxu0 0
        %1516 = vmatmul.mubr.bf16.gmra.mrb[0].mxu0 %v1326
        %v1517 = vpop.f32.mrb[0].mxu0
        %v1518 = vadd.f32 %v1445, %v1517
        %v1519 = vpop.f32.mrb[0].mxu0
        %v1520 = vadd.f32 %v1447, %v1519
        %v1521 = vpop.f32.mrb[0].mxu0
        %v1522 = vadd.f32 %v1449, %v1521
        %v1523 = vpop.f32.mrb[0].mxu0
        %v1524 = vadd.f32 %v1451, %v1523
        %1525 = vmatprep.mubr.bf16.mxu0 0
        %1526 = vmatmul.mubr.bf16.gmra.mrb[0].mxu0 %v1329
        %v1527 = vpop.f32.mrb[0].mxu0
        %v1528 = vadd.f32 %v1455, %v1527
        %v1529 = vpop.f32.mrb[0].mxu0
        %v1530 = vadd.f32 %v1457, %v1529
        %v1531 = vpop.f32.mrb[0].mxu0
        %v1532 = vadd.f32 %v1459, %v1531
        %v1533 = vpop.f32.mrb[0].mxu0
        %v1534 = vadd.f32 %v1461, %v1533
        %1535 = vmatprep.mubr.bf16.mxu0 0
        %1536 = vmatmul.mubr.bf16.gmra.mrb[0].mxu0 %v1332
        %v1537 = vpop.f32.mrb[0].mxu0
        %v1538 = vadd.f32 %v1465, %v1537
        %v1539 = vpop.f32.mrb[0].mxu0
        %v1540 = vadd.f32 %v1467, %v1539
        %v1541 = vpop.f32.mrb[0].mxu0
        %v1542 = vadd.f32 %v1469, %v1541
        %v1543 = vpop.f32.mrb[0].mxu0
        %v1544 = vadd.f32 %v1471, %v1543
        %1545 = vmatprep.mubr.bf16.mxu0 0
        %1546 = vmatmul.mubr.bf16.gmra.mrb[0].mxu0 %v1335
        %v1547 = vpop.f32.mrb[0].mxu0
        %v1548 = vadd.f32 %v1475, %v1547
        %v1549 = vpop.f32.mrb[0].mxu0
        %v1550 = vadd.f32 %v1477, %v1549
        %v1551 = vpop.f32.mrb[0].mxu0
        %v1552 = vadd.f32 %v1479, %v1551
        %v1553 = vpop.f32.mrb[0].mxu0
        %v1554 = vadd.f32 %v1481, %v1553
        %1555 = vdwg.mxu0
        %v1556 = vmax.f32 %v1518, 0.0
        %v1557 = vmax.f32 %v1520, 0.0
        %v1558 = vmax.f32 %v1522, 0.0
        %v1559 = vmax.f32 %v1524, 0.0
        %v1560 = vmax.f32 %v1528, 0.0
        %v1561 = vmax.f32 %v1530, 0.0
        %v1562 = vmax.f32 %v1532, 0.0
        %v1563 = vmax.f32 %v1534, 0.0
        %v1564 = vmax.f32 %v1538, 0.0
        %v1565 = vmax.f32 %v1540, 0.0
        %v1566 = vmax.f32 %v1542, 0.0
        %v1567 = vmax.f32 %v1544, 0.0
        %v1568 = vmax.f32 %v1548, 0.0
        %v1569 = vmax.f32 %v1550, 0.0
        %v1570 = vmax.f32 %v1552, 0.0
        %v1571 = vmax.f32 %v1554, 0.0
        %1572 = vrot.lane.b32.xlu0 %v1556, 17
        %v1573 = vpop.permute.xlu0 %1572
        %1574 = vrot.lane.b32.xlu0 %v1558, 17
        %v1575 = vpop.permute.xlu0 %1574
        %1576 = vrot.lane.b32.xlu0 %v1560, 17
        %v1577 = vpop.permute.xlu0 %1576
        %1578 = vrot.lane.b32.xlu0 %v1562, 17
        %v1579 = vpop.permute.xlu0 %1578
        %1580 = vrot.lane.b32.xlu0 %v1564, 17
        %v1581 = vpop.permute.xlu0 %1580
        %1582 = vrot.lane.b32.xlu0 %v1566, 17
        %v1583 = vpop.permute.xlu0 %1582
        %1584 = vrot.lane.b32.xlu0 %v1568, 17
        %v1585 = vpop.permute.xlu0 %1584
        %1586 = vrot.lane.b32.xlu0 %v1570, 17
        %v1587 = vpop.permute.xlu0 %1586
        %1588 = vrot.lane.b32.xlu0 %v1557, 17
        %v1589 = vpop.permute.xlu0 %1588
        %1590 = vrot.lane.b32.xlu0 %v1559, 17
        %v1591 = vpop.permute.xlu0 %1590
        %1592 = vrot.lane.b32.xlu0 %v1561, 17
        %v1593 = vpop.permute.xlu0 %1592
        %1594 = vrot.lane.b32.xlu0 %v1563, 17
        %v1595 = vpop.permute.xlu0 %1594
        %1596 = vrot.lane.b32.xlu0 %v1565, 17
        %v1597 = vpop.permute.xlu0 %1596
        %1598 = vrot.lane.b32.xlu0 %v1567, 17
        %v1599 = vpop.permute.xlu0 %1598
        %1600 = vrot.lane.b32.xlu0 %v1569, 17
        %v1601 = vpop.permute.xlu0 %1600
        %1602 = vrot.lane.b32.xlu0 %v1571, 17
        %v1603 = vpop.permute.xlu0 %1602
        %v1604 = vsel %vm358, %v1573, %v1589
        %v1605 = vsel %vm358, %v1575, %v1591
        %v1606 = vsel %vm358, %v1577, %v1593
        %v1607 = vsel %vm358, %v1579, %v1595
        %v1608 = vsel %vm358, %v1581, %v1597
        %v1609 = vsel %vm358, %v1583, %v1599
        %v1610 = vsel %vm358, %v1585, %v1601
        %v1611 = vsel %vm358, %v1587, %v1603
        %v1612 = vsel %vm358, %v1589, %v1573
        %v1613 = vsel %vm358, %v1591, %v1575
        %v1614 = vsel %vm358, %v1593, %v1577
        %v1615 = vsel %vm358, %v1595, %v1579
        %v1616 = vsel %vm358, %v1597, %v1581
        %v1617 = vsel %vm358, %v1599, %v1583
        %v1618 = vsel %vm358, %v1601, %v1585
        %v1619 = vsel %vm358, %v1603, %v1587
        %v1620 = vsel %vm398, %v1612, 0.0
        %v1621 = vsel %vm399, %v1604, 0.0
        %v1622 = vsel %vm398, %v1613, 0.0
        %v1623 = vsel %vm399, %v1605, 0.0
        %v1624 = vsel %vm398, %v1614, 0.0
        %v1625 = vsel %vm399, %v1606, 0.0
        %v1626 = vsel %vm398, %v1615, 0.0
        %v1627 = vsel %vm399, %v1607, 0.0
        %v1628 = vsel %vm398, %v1616, 0.0
        %v1629 = vsel %vm399, %v1608, 0.0
        %v1630 = vsel %vm398, %v1617, 0.0
        %v1631 = vsel %vm399, %v1609, 0.0
        %v1632 = vsel %vm398, %v1618, 0.0
        %v1633 = vsel %vm399, %v1610, 0.0
        %v1634 = vsel %vm398, %v1619, 0.0
        %v1635 = vsel %vm399, %v1611, 0.0
        %v1636 = vpack.c.bf16 %v1622, %v1620
        %v1637 = vpack.c.bf16 %v1623, %v1621
        %v1638 = vpack.c.bf16 %v1626, %v1624
        %v1639 = vpack.c.bf16 %v1627, %v1625
        %v1640 = vpack.c.bf16 %v1630, %v1628
        %v1641 = vpack.c.bf16 %v1631, %v1629
        %v1642 = vpack.c.bf16 %v1634, %v1632
        %v1643 = vpack.c.bf16 %v1635, %v1633
        %1644 = vst [vmem:[#allocation2] sm:$0xff] %v1636
        %1645 = vst [vmem:[#allocation2 + $0x8] sm:$0xff] %v1637
        %1646 = vst [vmem:[#allocation2 + $0x10] sm:$0xff] %v1638
        %1647 = vst [vmem:[#allocation2 + $0x18] sm:$0xff] %v1639
        %1648 = vst [vmem:[#allocation2 + $0x20] sm:$0xff] %v1640
        %1649 = vst [vmem:[#allocation2 + $0x28] sm:$0xff] %v1641
        %1650 = vst [vmem:[#allocation2 + $0x30] sm:$0xff] %v1642
        %1651 = vst [vmem:[#allocation2 + $0x38] sm:$0xff] %v1643
        %1652 = vrot.lane.b32.xlu0 %v1556, 16
        %v1653 = vpop.permute.xlu0 %1652
        %1654 = vrot.lane.b32.xlu0 %v1558, 16
        %v1655 = vpop.permute.xlu0 %1654
        %1656 = vrot.lane.b32.xlu0 %v1560, 16
        %v1657 = vpop.permute.xlu0 %1656
        %1658 = vrot.lane.b32.xlu0 %v1562, 16
        %v1659 = vpop.permute.xlu0 %1658
        %1660 = vrot.lane.b32.xlu0 %v1564, 16
        %v1661 = vpop.permute.xlu0 %1660
        %1662 = vrot.lane.b32.xlu0 %v1566, 16
        %v1663 = vpop.permute.xlu0 %1662
        %1664 = vrot.lane.b32.xlu0 %v1568, 16
        %v1665 = vpop.permute.xlu0 %1664
        %1666 = vrot.lane.b32.xlu0 %v1570, 16
        %v1667 = vpop.permute.xlu0 %1666
        %1668 = vrot.lane.b32.xlu0 %v1557, 16
        %v1669 = vpop.permute.xlu0 %1668
        %1670 = vrot.lane.b32.xlu0 %v1559, 16
        %v1671 = vpop.permute.xlu0 %1670
        %1672 = vrot.lane.b32.xlu0 %v1561, 16
        %v1673 = vpop.permute.xlu0 %1672
        %1674 = vrot.lane.b32.xlu0 %v1563, 16
        %v1675 = vpop.permute.xlu0 %1674
        %1676 = vrot.lane.b32.xlu0 %v1565, 16
        %v1677 = vpop.permute.xlu0 %1676
        %1678 = vrot.lane.b32.xlu0 %v1567, 16
        %v1679 = vpop.permute.xlu0 %1678
        %1680 = vrot.lane.b32.xlu0 %v1569, 16
        %v1681 = vpop.permute.xlu0 %1680
        %1682 = vrot.lane.b32.xlu0 %v1571, 16
        %v1683 = vpop.permute.xlu0 %1682
        %v1684 = vsel %vm464, %v1653, %v1669
        %v1685 = vsel %vm464, %v1655, %v1671
        %v1686 = vsel %vm464, %v1657, %v1673
        %v1687 = vsel %vm464, %v1659, %v1675
        %v1688 = vsel %vm464, %v1661, %v1677
        %v1689 = vsel %vm464, %v1663, %v1679
        %v1690 = vsel %vm464, %v1665, %v1681
        %v1691 = vsel %vm464, %v1667, %v1683
        %v1692 = vsel %vm464, %v1669, %v1653
        %v1693 = vsel %vm464, %v1671, %v1655
        %v1694 = vsel %vm464, %v1673, %v1657
        %v1695 = vsel %vm464, %v1675, %v1659
        %v1696 = vsel %vm464, %v1677, %v1661
        %v1697 = vsel %vm464, %v1679, %v1663
        %v1698 = vsel %vm464, %v1681, %v1665
        %v1699 = vsel %vm464, %v1683, %v1667
        %v1700 = vsel %vm483, %v1692, 0.0
        %v1701 = vsel %vm484, %v1684, 0.0
        %v1702 = vsel %vm483, %v1693, 0.0
        %v1703 = vsel %vm484, %v1685, 0.0
        %v1704 = vsel %vm483, %v1694, 0.0
        %v1705 = vsel %vm484, %v1686, 0.0
        %v1706 = vsel %vm483, %v1695, 0.0
        %v1707 = vsel %vm484, %v1687, 0.0
        %v1708 = vsel %vm483, %v1696, 0.0
        %v1709 = vsel %vm484, %v1688, 0.0
        %v1710 = vsel %vm483, %v1697, 0.0
        %v1711 = vsel %vm484, %v1689, 0.0
        %v1712 = vsel %vm483, %v1698, 0.0
        %v1713 = vsel %vm484, %v1690, 0.0
        %v1714 = vsel %vm483, %v1699, 0.0
        %v1715 = vsel %vm484, %v1691, 0.0
        %v1716 = vpack.c.bf16 %v1702, %v1700
        %v1717 = vpack.c.bf16 %v1703, %v1701
        %v1718 = vpack.c.bf16 %v1706, %v1704
        %v1719 = vpack.c.bf16 %v1707, %v1705
        %v1720 = vpack.c.bf16 %v1710, %v1708
        %v1721 = vpack.c.bf16 %v1711, %v1709
        %v1722 = vpack.c.bf16 %v1714, %v1712
        %v1723 = vpack.c.bf16 %v1715, %v1713
        %1724 = vst [vmem:[#allocation2 + $0x40] sm:$0xff] %v1716
        %1725 = vst [vmem:[#allocation2 + $0x48] sm:$0xff] %v1717
        %1726 = vst [vmem:[#allocation2 + $0x50] sm:$0xff] %v1718
        %1727 = vst [vmem:[#allocation2 + $0x58] sm:$0xff] %v1719
        %1728 = vst [vmem:[#allocation2 + $0x60] sm:$0xff] %v1720
        %1729 = vst [vmem:[#allocation2 + $0x68] sm:$0xff] %v1721
        %1730 = vst [vmem:[#allocation2 + $0x70] sm:$0xff] %v1722
        %1731 = vst [vmem:[#allocation2 + $0x78] sm:$0xff] %v1723
        %1732 = vrot.lane.b32.xlu0 %v1556, 15
        %v1733 = vpop.permute.xlu0 %1732
        %1734 = vrot.lane.b32.xlu0 %v1558, 15
        %v1735 = vpop.permute.xlu0 %1734
        %1736 = vrot.lane.b32.xlu0 %v1560, 15
        %v1737 = vpop.permute.xlu0 %1736
        %1738 = vrot.lane.b32.xlu0 %v1562, 15
        %v1739 = vpop.permute.xlu0 %1738
        %1740 = vrot.lane.b32.xlu0 %v1564, 15
        %v1741 = vpop.permute.xlu0 %1740
        %1742 = vrot.lane.b32.xlu0 %v1566, 15
        %v1743 = vpop.permute.xlu0 %1742
        %1744 = vrot.lane.b32.xlu0 %v1568, 15
        %v1745 = vpop.permute.xlu0 %1744
        %1746 = vrot.lane.b32.xlu0 %v1570, 15
        %v1747 = vpop.permute.xlu0 %1746
        %1748 = vrot.lane.b32.xlu0 %v1557, 15
        %v1749 = vpop.permute.xlu0 %1748
        %1750 = vrot.lane.b32.xlu0 %v1559, 15
        %v1751 = vpop.permute.xlu0 %1750
        %1752 = vrot.lane.b32.xlu0 %v1561, 15
        %v1753 = vpop.permute.xlu0 %1752
        %1754 = vrot.lane.b32.xlu0 %v1563, 15
        %v1755 = vpop.permute.xlu0 %1754
        %1756 = vrot.lane.b32.xlu0 %v1565, 15
        %v1757 = vpop.permute.xlu0 %1756
        %1758 = vrot.lane.b32.xlu0 %v1567, 15
        %v1759 = vpop.permute.xlu0 %1758
        %1760 = vrot.lane.b32.xlu0 %v1569, 15
        %v1761 = vpop.permute.xlu0 %1760
        %1762 = vrot.lane.b32.xlu0 %v1571, 15
        %v1763 = vpop.permute.xlu0 %1762
        %v1764 = vsel %vm549, %v1733, %v1749
        %v1765 = vsel %vm549, %v1735, %v1751
        %v1766 = vsel %vm549, %v1737, %v1753
        %v1767 = vsel %vm549, %v1739, %v1755
        %v1768 = vsel %vm549, %v1741, %v1757
        %v1769 = vsel %vm549, %v1743, %v1759
        %v1770 = vsel %vm549, %v1745, %v1761
        %v1771 = vsel %vm549, %v1747, %v1763
        %v1772 = vsel %vm549, %v1749, %v1733
        %v1773 = vsel %vm549, %v1751, %v1735
        %v1774 = vsel %vm549, %v1753, %v1737
        %v1775 = vsel %vm549, %v1755, %v1739
        %v1776 = vsel %vm549, %v1757, %v1741
        %v1777 = vsel %vm549, %v1759, %v1743
        %v1778 = vsel %vm549, %v1761, %v1745
        %v1779 = vsel %vm549, %v1763, %v1747
        %v1780 = vsel %vm589, %v1772, 0.0
        %v1781 = vsel %vm590, %v1764, 0.0
        %v1782 = vsel %vm589, %v1773, 0.0
        %v1783 = vsel %vm590, %v1765, 0.0
        %v1784 = vsel %vm589, %v1774, 0.0
        %v1785 = vsel %vm590, %v1766, 0.0
        %v1786 = vsel %vm589, %v1775, 0.0
        %v1787 = vsel %vm590, %v1767, 0.0
        %v1788 = vsel %vm589, %v1776, 0.0
        %v1789 = vsel %vm590, %v1768, 0.0
        %v1790 = vsel %vm589, %v1777, 0.0
        %v1791 = vsel %vm590, %v1769, 0.0
        %v1792 = vsel %vm589, %v1778, 0.0
        %v1793 = vsel %vm590, %v1770, 0.0
        %v1794 = vsel %vm589, %v1779, 0.0
        %v1795 = vsel %vm590, %v1771, 0.0
        %v1796 = vpack.c.bf16 %v1782, %v1780
        %v1797 = vpack.c.bf16 %v1783, %v1781
        %v1798 = vpack.c.bf16 %v1786, %v1784
        %v1799 = vpack.c.bf16 %v1787, %v1785
        %v1800 = vpack.c.bf16 %v1790, %v1788
        %v1801 = vpack.c.bf16 %v1791, %v1789
        %v1802 = vpack.c.bf16 %v1794, %v1792
        %v1803 = vpack.c.bf16 %v1795, %v1793
        %1804 = vst [vmem:[#allocation2 + $0x80] sm:$0xff] %v1796
        %1805 = vst [vmem:[#allocation2 + $0x88] sm:$0xff] %v1797
        %1806 = vst [vmem:[#allocation2 + $0x90] sm:$0xff] %v1798
        %1807 = vst [vmem:[#allocation2 + $0x98] sm:$0xff] %v1799
        %1808 = vst [vmem:[#allocation2 + $0xa0] sm:$0xff] %v1800
        %1809 = vst [vmem:[#allocation2 + $0xa8] sm:$0xff] %v1801
        %1810 = vst [vmem:[#allocation2 + $0xb0] sm:$0xff] %v1802
        %1811 = vst [vmem:[#allocation2 + $0xb8] sm:$0xff] %v1803
        %1812 = vrot.lane.b32.xlu0 %v1556, 1
        %v1813 = vpop.permute.xlu0 %1812
        %1814 = vrot.lane.b32.xlu0 %v1558, 1
        %v1815 = vpop.permute.xlu0 %1814
        %1816 = vrot.lane.b32.xlu0 %v1560, 1
        %v1817 = vpop.permute.xlu0 %1816
        %1818 = vrot.lane.b32.xlu0 %v1562, 1
        %v1819 = vpop.permute.xlu0 %1818
        %1820 = vrot.lane.b32.xlu0 %v1564, 1
        %v1821 = vpop.permute.xlu0 %1820
        %1822 = vrot.lane.b32.xlu0 %v1566, 1
        %v1823 = vpop.permute.xlu0 %1822
        %1824 = vrot.lane.b32.xlu0 %v1568, 1
        %v1825 = vpop.permute.xlu0 %1824
        %1826 = vrot.lane.b32.xlu0 %v1570, 1
        %v1827 = vpop.permute.xlu0 %1826
        %1828 = vrot.lane.b32.xlu0 %v1557, 1
        %v1829 = vpop.permute.xlu0 %1828
        %1830 = vrot.lane.b32.xlu0 %v1559, 1
        %v1831 = vpop.permute.xlu0 %1830
        %1832 = vrot.lane.b32.xlu0 %v1561, 1
        %v1833 = vpop.permute.xlu0 %1832
        %1834 = vrot.lane.b32.xlu0 %v1563, 1
        %v1835 = vpop.permute.xlu0 %1834
        %1836 = vrot.lane.b32.xlu0 %v1565, 1
        %v1837 = vpop.permute.xlu0 %1836
        %1838 = vrot.lane.b32.xlu0 %v1567, 1
        %v1839 = vpop.permute.xlu0 %1838
        %1840 = vrot.lane.b32.xlu0 %v1569, 1
        %v1841 = vpop.permute.xlu0 %1840
        %1842 = vrot.lane.b32.xlu0 %v1571, 1
        %v1843 = vpop.permute.xlu0 %1842
        %v1844 = vsel %vm655, %v1813, %v1829
        %v1845 = vsel %vm655, %v1815, %v1831
        %v1846 = vsel %vm655, %v1817, %v1833
        %v1847 = vsel %vm655, %v1819, %v1835
        %v1848 = vsel %vm655, %v1821, %v1837
        %v1849 = vsel %vm655, %v1823, %v1839
        %v1850 = vsel %vm655, %v1825, %v1841
        %v1851 = vsel %vm655, %v1827, %v1843
        %v1852 = vsel %vm655, %v1829, %v1813
        %v1853 = vsel %vm655, %v1831, %v1815
        %v1854 = vsel %vm655, %v1833, %v1817
        %v1855 = vsel %vm655, %v1835, %v1819
        %v1856 = vsel %vm655, %v1837, %v1821
        %v1857 = vsel %vm655, %v1839, %v1823
        %v1858 = vsel %vm655, %v1841, %v1825
        %v1859 = vsel %vm655, %v1843, %v1827
        %v1860 = vsel %vm672, %v1852, 0.0
        %v1861 = vsel %vm673, %v1844, 0.0
        %v1862 = vsel %vm672, %v1853, 0.0
        %v1863 = vsel %vm673, %v1845, 0.0
        %v1864 = vsel %vm672, %v1854, 0.0
        %v1865 = vsel %vm673, %v1846, 0.0
        %v1866 = vsel %vm672, %v1855, 0.0
        %v1867 = vsel %vm673, %v1847, 0.0
        %v1868 = vsel %vm672, %v1856, 0.0
        %v1869 = vsel %vm673, %v1848, 0.0
        %v1870 = vsel %vm672, %v1857, 0.0
        %v1871 = vsel %vm673, %v1849, 0.0
        %v1872 = vsel %vm672, %v1858, 0.0
        %v1873 = vsel %vm673, %v1850, 0.0
        %v1874 = vsel %vm672, %v1859, 0.0
        %v1875 = vsel %vm673, %v1851, 0.0
        %v1876 = vpack.c.bf16 %v1862, %v1860
        %v1877 = vpack.c.bf16 %v1863, %v1861
        %v1878 = vpack.c.bf16 %v1866, %v1864
        %v1879 = vpack.c.bf16 %v1867, %v1865
        %v1880 = vpack.c.bf16 %v1870, %v1868
        %v1881 = vpack.c.bf16 %v1871, %v1869
        %v1882 = vpack.c.bf16 %v1874, %v1872
        %v1883 = vpack.c.bf16 %v1875, %v1873
        %1884 = vst [vmem:[#allocation2 + $0xc0] sm:$0xff] %v1876
        %1885 = vst [vmem:[#allocation2 + $0xc8] sm:$0xff] %v1877
        %1886 = vst [vmem:[#allocation2 + $0xd0] sm:$0xff] %v1878
        %1887 = vst [vmem:[#allocation2 + $0xd8] sm:$0xff] %v1879
        %1888 = vst [vmem:[#allocation2 + $0xe0] sm:$0xff] %v1880
        %1889 = vst [vmem:[#allocation2 + $0xe8] sm:$0xff] %v1881
        %1890 = vst [vmem:[#allocation2 + $0xf0] sm:$0xff] %v1882
        %1891 = vst [vmem:[#allocation2 + $0xf8] sm:$0xff] %v1883
        %v1892 = vpack.c.bf16 %v1558, %v1556
        %v1893 = vpack.c.bf16 %v1559, %v1557
        %v1894 = vpack.c.bf16 %v1562, %v1560
        %v1895 = vpack.c.bf16 %v1563, %v1561
        %v1896 = vpack.c.bf16 %v1566, %v1564
        %v1897 = vpack.c.bf16 %v1567, %v1565
        %v1898 = vpack.c.bf16 %v1570, %v1568
        %v1899 = vpack.c.bf16 %v1571, %v1569
        %1900 = vst [vmem:[#allocation2 + $0x100] sm:$0xff] %v1892
        %1901 = vst [vmem:[#allocation2 + $0x108] sm:$0xff] %v1893
        %1902 = vst [vmem:[#allocation2 + $0x110] sm:$0xff] %v1894
        %1903 = vst [vmem:[#allocation2 + $0x118] sm:$0xff] %v1895
        %1904 = vst [vmem:[#allocation2 + $0x120] sm:$0xff] %v1896
        %1905 = vst [vmem:[#allocation2 + $0x128] sm:$0xff] %v1897
        %1906 = vst [vmem:[#allocation2 + $0x130] sm:$0xff] %v1898
        %1907 = vst [vmem:[#allocation2 + $0x138] sm:$0xff] %v1899
        %1908 = vrot.lane.b32.xlu0 %v1556, 127
        %v1909 = vpop.permute.xlu0 %1908
        %1910 = vrot.lane.b32.xlu0 %v1558, 127
        %v1911 = vpop.permute.xlu0 %1910
        %1912 = vrot.lane.b32.xlu0 %v1560, 127
        %v1913 = vpop.permute.xlu0 %1912
        %1914 = vrot.lane.b32.xlu0 %v1562, 127
        %v1915 = vpop.permute.xlu0 %1914
        %1916 = vrot.lane.b32.xlu0 %v1564, 127
        %v1917 = vpop.permute.xlu0 %1916
        %1918 = vrot.lane.b32.xlu0 %v1566, 127
        %v1919 = vpop.permute.xlu0 %1918
        %1920 = vrot.lane.b32.xlu0 %v1568, 127
        %v1921 = vpop.permute.xlu0 %1920
        %1922 = vrot.lane.b32.xlu0 %v1570, 127
        %v1923 = vpop.permute.xlu0 %1922
        %1924 = vrot.lane.b32.xlu0 %v1557, 127
        %v1925 = vpop.permute.xlu0 %1924
        %1926 = vrot.lane.b32.xlu0 %v1559, 127
        %v1927 = vpop.permute.xlu0 %1926
        %1928 = vrot.lane.b32.xlu0 %v1561, 127
        %v1929 = vpop.permute.xlu0 %1928
        %1930 = vrot.lane.b32.xlu0 %v1563, 127
        %v1931 = vpop.permute.xlu0 %1930
        %1932 = vrot.lane.b32.xlu0 %v1565, 127
        %v1933 = vpop.permute.xlu0 %1932
        %1934 = vrot.lane.b32.xlu0 %v1567, 127
        %v1935 = vpop.permute.xlu0 %1934
        %1936 = vrot.lane.b32.xlu0 %v1569, 127
        %v1937 = vpop.permute.xlu0 %1936
        %1938 = vrot.lane.b32.xlu0 %v1571, 127
        %v1939 = vpop.permute.xlu0 %1938
        %v1940 = vsel %vm754, %v1909, %v1925
        %v1941 = vsel %vm754, %v1911, %v1927
        %v1942 = vsel %vm754, %v1913, %v1929
        %v1943 = vsel %vm754, %v1915, %v1931
        %v1944 = vsel %vm754, %v1917, %v1933
        %v1945 = vsel %vm754, %v1919, %v1935
        %v1946 = vsel %vm754, %v1921, %v1937
        %v1947 = vsel %vm754, %v1923, %v1939
        %v1948 = vsel %vm754, %v1925, %v1909
        %v1949 = vsel %vm754, %v1927, %v1911
        %v1950 = vsel %vm754, %v1929, %v1913
        %v1951 = vsel %vm754, %v1931, %v1915
        %v1952 = vsel %vm754, %v1933, %v1917
        %v1953 = vsel %vm754, %v1935, %v1919
        %v1954 = vsel %vm754, %v1937, %v1921
        %v1955 = vsel %vm754, %v1939, %v1923
        %v1956 = vsel %vm771, %v1940, 0.0
        %v1957 = vsel %vm772, %v1948, 0.0
        %v1958 = vsel %vm771, %v1941, 0.0
        %v1959 = vsel %vm772, %v1949, 0.0
        %v1960 = vsel %vm771, %v1942, 0.0
        %v1961 = vsel %vm772, %v1950, 0.0
        %v1962 = vsel %vm771, %v1943, 0.0
        %v1963 = vsel %vm772, %v1951, 0.0
        %v1964 = vsel %vm771, %v1944, 0.0
        %v1965 = vsel %vm772, %v1952, 0.0
        %v1966 = vsel %vm771, %v1945, 0.0
        %v1967 = vsel %vm772, %v1953, 0.0
        %v1968 = vsel %vm771, %v1946, 0.0
        %v1969 = vsel %vm772, %v1954, 0.0
        %v1970 = vsel %vm771, %v1947, 0.0
        %v1971 = vsel %vm772, %v1955, 0.0
        %v1972 = vpack.c.bf16 %v1958, %v1956
        %v1973 = vpack.c.bf16 %v1959, %v1957
        %v1974 = vpack.c.bf16 %v1962, %v1960
        %v1975 = vpack.c.bf16 %v1963, %v1961
        %v1976 = vpack.c.bf16 %v1966, %v1964
        %v1977 = vpack.c.bf16 %v1967, %v1965
        %v1978 = vpack.c.bf16 %v1970, %v1968
        %v1979 = vpack.c.bf16 %v1971, %v1969
        %1980 = vst [vmem:[#allocation2 + $0x140] sm:$0xff] %v1972
        %1981 = vst [vmem:[#allocation2 + $0x148] sm:$0xff] %v1973
        %1982 = vst [vmem:[#allocation2 + $0x150] sm:$0xff] %v1974
        %1983 = vst [vmem:[#allocation2 + $0x158] sm:$0xff] %v1975
        %1984 = vst [vmem:[#allocation2 + $0x160] sm:$0xff] %v1976
        %1985 = vst [vmem:[#allocation2 + $0x168] sm:$0xff] %v1977
        %1986 = vst [vmem:[#allocation2 + $0x170] sm:$0xff] %v1978
        %1987 = vst [vmem:[#allocation2 + $0x178] sm:$0xff] %v1979
        %1988 = vrot.lane.b32.xlu0 %v1556, 113
        %v1989 = vpop.permute.xlu0 %1988
        %1990 = vrot.lane.b32.xlu0 %v1558, 113
        %v1991 = vpop.permute.xlu0 %1990
        %1992 = vrot.lane.b32.xlu0 %v1560, 113
        %v1993 = vpop.permute.xlu0 %1992
        %1994 = vrot.lane.b32.xlu0 %v1562, 113
        %v1995 = vpop.permute.xlu0 %1994
        %1996 = vrot.lane.b32.xlu0 %v1564, 113
        %v1997 = vpop.permute.xlu0 %1996
        %1998 = vrot.lane.b32.xlu0 %v1566, 113
        %v1999 = vpop.permute.xlu0 %1998
        %2000 = vrot.lane.b32.xlu0 %v1568, 113
        %v2001 = vpop.permute.xlu0 %2000
        %2002 = vrot.lane.b32.xlu0 %v1570, 113
        %v2003 = vpop.permute.xlu0 %2002
        %2004 = vrot.lane.b32.xlu0 %v1557, 113
        %v2005 = vpop.permute.xlu0 %2004
        %2006 = vrot.lane.b32.xlu0 %v1559, 113
        %v2007 = vpop.permute.xlu0 %2006
        %2008 = vrot.lane.b32.xlu0 %v1561, 113
        %v2009 = vpop.permute.xlu0 %2008
        %2010 = vrot.lane.b32.xlu0 %v1563, 113
        %v2011 = vpop.permute.xlu0 %2010
        %2012 = vrot.lane.b32.xlu0 %v1565, 113
        %v2013 = vpop.permute.xlu0 %2012
        %2014 = vrot.lane.b32.xlu0 %v1567, 113
        %v2015 = vpop.permute.xlu0 %2014
        %2016 = vrot.lane.b32.xlu0 %v1569, 113
        %v2017 = vpop.permute.xlu0 %2016
        %2018 = vrot.lane.b32.xlu0 %v1571, 113
        %v2019 = vpop.permute.xlu0 %2018
        %v2020 = vsel %vm837, %v1989, %v2005
        %v2021 = vsel %vm837, %v1991, %v2007
        %v2022 = vsel %vm837, %v1993, %v2009
        %v2023 = vsel %vm837, %v1995, %v2011
        %v2024 = vsel %vm837, %v1997, %v2013
        %v2025 = vsel %vm837, %v1999, %v2015
        %v2026 = vsel %vm837, %v2001, %v2017
        %v2027 = vsel %vm837, %v2003, %v2019
        %v2028 = vsel %vm837, %v2005, %v1989
        %v2029 = vsel %vm837, %v2007, %v1991
        %v2030 = vsel %vm837, %v2009, %v1993
        %v2031 = vsel %vm837, %v2011, %v1995
        %v2032 = vsel %vm837, %v2013, %v1997
        %v2033 = vsel %vm837, %v2015, %v1999
        %v2034 = vsel %vm837, %v2017, %v2001
        %v2035 = vsel %vm837, %v2019, %v2003
        %v2036 = vsel %vm866, %v2020, 0.0
        %v2037 = vsel %vm867, %v2028, 0.0
        %v2038 = vsel %vm866, %v2021, 0.0
        %v2039 = vsel %vm867, %v2029, 0.0
        %v2040 = vsel %vm866, %v2022, 0.0
        %v2041 = vsel %vm867, %v2030, 0.0
        %v2042 = vsel %vm866, %v2023, 0.0
        %v2043 = vsel %vm867, %v2031, 0.0
        %v2044 = vsel %vm866, %v2024, 0.0
        %v2045 = vsel %vm867, %v2032, 0.0
        %v2046 = vsel %vm866, %v2025, 0.0
        %v2047 = vsel %vm867, %v2033, 0.0
        %v2048 = vsel %vm866, %v2026, 0.0
        %v2049 = vsel %vm867, %v2034, 0.0
        %v2050 = vsel %vm866, %v2027, 0.0
        %v2051 = vsel %vm867, %v2035, 0.0
        %v2052 = vpack.c.bf16 %v2038, %v2036
        %v2053 = vpack.c.bf16 %v2039, %v2037
        %v2054 = vpack.c.bf16 %v2042, %v2040
        %v2055 = vpack.c.bf16 %v2043, %v2041
        %v2056 = vpack.c.bf16 %v2046, %v2044
        %v2057 = vpack.c.bf16 %v2047, %v2045
        %v2058 = vpack.c.bf16 %v2050, %v2048
        %v2059 = vpack.c.bf16 %v2051, %v2049
        %2060 = vst [vmem:[#allocation2 + $0x180] sm:$0xff] %v2052
        %2061 = vst [vmem:[#allocation2 + $0x188] sm:$0xff] %v2053
        %2062 = vst [vmem:[#allocation2 + $0x190] sm:$0xff] %v2054
        %2063 = vst [vmem:[#allocation2 + $0x198] sm:$0xff] %v2055
        %2064 = vst [vmem:[#allocation2 + $0x1a0] sm:$0xff] %v2056
        %2065 = vst [vmem:[#allocation2 + $0x1a8] sm:$0xff] %v2057
        %2066 = vst [vmem:[#allocation2 + $0x1b0] sm:$0xff] %v2058
        %2067 = vst [vmem:[#allocation2 + $0x1b8] sm:$0xff] %v2059
        %2068 = vrot.lane.b32.xlu0 %v1556, 112
        %v2069 = vpop.permute.xlu0 %2068
        %2070 = vrot.lane.b32.xlu0 %v1558, 112
        %v2071 = vpop.permute.xlu0 %2070
        %2072 = vrot.lane.b32.xlu0 %v1560, 112
        %v2073 = vpop.permute.xlu0 %2072
        %2074 = vrot.lane.b32.xlu0 %v1562, 112
        %v2075 = vpop.permute.xlu0 %2074
        %2076 = vrot.lane.b32.xlu0 %v1564, 112
        %v2077 = vpop.permute.xlu0 %2076
        %2078 = vrot.lane.b32.xlu0 %v1566, 112
        %v2079 = vpop.permute.xlu0 %2078
        %2080 = vrot.lane.b32.xlu0 %v1568, 112
        %v2081 = vpop.permute.xlu0 %2080
        %2082 = vrot.lane.b32.xlu0 %v1570, 112
        %v2083 = vpop.permute.xlu0 %2082
        %2084 = vrot.lane.b32.xlu0 %v1557, 112
        %v2085 = vpop.permute.xlu0 %2084
        %2086 = vrot.lane.b32.xlu0 %v1559, 112
        %v2087 = vpop.permute.xlu0 %2086
        %2088 = vrot.lane.b32.xlu0 %v1561, 112
        %v2089 = vpop.permute.xlu0 %2088
        %2090 = vrot.lane.b32.xlu0 %v1563, 112
        %v2091 = vpop.permute.xlu0 %2090
        %2092 = vrot.lane.b32.xlu0 %v1565, 112
        %v2093 = vpop.permute.xlu0 %2092
        %2094 = vrot.lane.b32.xlu0 %v1567, 112
        %v2095 = vpop.permute.xlu0 %2094
        %2096 = vrot.lane.b32.xlu0 %v1569, 112
        %v2097 = vpop.permute.xlu0 %2096
        %2098 = vrot.lane.b32.xlu0 %v1571, 112
        %v2099 = vpop.permute.xlu0 %2098
        %v2100 = vsel %vm932, %v2069, %v2085
        %v2101 = vsel %vm932, %v2071, %v2087
        %v2102 = vsel %vm932, %v2073, %v2089
        %v2103 = vsel %vm932, %v2075, %v2091
        %v2104 = vsel %vm932, %v2077, %v2093
        %v2105 = vsel %vm932, %v2079, %v2095
        %v2106 = vsel %vm932, %v2081, %v2097
        %v2107 = vsel %vm932, %v2083, %v2099
        %v2108 = vsel %vm932, %v2085, %v2069
        %v2109 = vsel %vm932, %v2087, %v2071
        %v2110 = vsel %vm932, %v2089, %v2073
        %v2111 = vsel %vm932, %v2091, %v2075
        %v2112 = vsel %vm932, %v2093, %v2077
        %v2113 = vsel %vm932, %v2095, %v2079
        %v2114 = vsel %vm932, %v2097, %v2081
        %v2115 = vsel %vm932, %v2099, %v2083
        %v2116 = vsel %vm951, %v2100, 0.0
        %v2117 = vsel %vm952, %v2108, 0.0
        %v2118 = vsel %vm951, %v2101, 0.0
        %v2119 = vsel %vm952, %v2109, 0.0
        %v2120 = vsel %vm951, %v2102, 0.0
        %v2121 = vsel %vm952, %v2110, 0.0
        %v2122 = vsel %vm951, %v2103, 0.0
        %v2123 = vsel %vm952, %v2111, 0.0
        %v2124 = vsel %vm951, %v2104, 0.0
        %v2125 = vsel %vm952, %v2112, 0.0
        %v2126 = vsel %vm951, %v2105, 0.0
        %v2127 = vsel %vm952, %v2113, 0.0
        %v2128 = vsel %vm951, %v2106, 0.0
        %v2129 = vsel %vm952, %v2114, 0.0
        %v2130 = vsel %vm951, %v2107, 0.0
        %v2131 = vsel %vm952, %v2115, 0.0
        %v2132 = vpack.c.bf16 %v2118, %v2116
        %v2133 = vpack.c.bf16 %v2119, %v2117
        %v2134 = vpack.c.bf16 %v2122, %v2120
        %v2135 = vpack.c.bf16 %v2123, %v2121
        %v2136 = vpack.c.bf16 %v2126, %v2124
        %v2137 = vpack.c.bf16 %v2127, %v2125
        %v2138 = vpack.c.bf16 %v2130, %v2128
        %v2139 = vpack.c.bf16 %v2131, %v2129
        %2140 = vst [vmem:[#allocation2 + $0x1c0] sm:$0xff] %v2132
        %2141 = vst [vmem:[#allocation2 + $0x1c8] sm:$0xff] %v2133
        %2142 = vst [vmem:[#allocation2 + $0x1d0] sm:$0xff] %v2134
        %2143 = vst [vmem:[#allocation2 + $0x1d8] sm:$0xff] %v2135
        %2144 = vst [vmem:[#allocation2 + $0x1e0] sm:$0xff] %v2136
        %2145 = vst [vmem:[#allocation2 + $0x1e8] sm:$0xff] %v2137
        %2146 = vst [vmem:[#allocation2 + $0x1f0] sm:$0xff] %v2138
        %2147 = vst [vmem:[#allocation2 + $0x1f8] sm:$0xff] %v2139
        %2148 = vrot.lane.b32.xlu0 %v1556, 111
        %v2149 = vpop.permute.xlu0 %2148
        %2150 = vrot.lane.b32.xlu0 %v1558, 111
        %v2151 = vpop.permute.xlu0 %2150
        %2152 = vrot.lane.b32.xlu0 %v1560, 111
        %v2153 = vpop.permute.xlu0 %2152
        %2154 = vrot.lane.b32.xlu0 %v1562, 111
        %v2155 = vpop.permute.xlu0 %2154
        %2156 = vrot.lane.b32.xlu0 %v1564, 111
        %v2157 = vpop.permute.xlu0 %2156
        %2158 = vrot.lane.b32.xlu0 %v1566, 111
        %v2159 = vpop.permute.xlu0 %2158
        %2160 = vrot.lane.b32.xlu0 %v1568, 111
        %v2161 = vpop.permute.xlu0 %2160
        %2162 = vrot.lane.b32.xlu0 %v1570, 111
        %v2163 = vpop.permute.xlu0 %2162
        %2164 = vrot.lane.b32.xlu0 %v1557, 111
        %v2165 = vpop.permute.xlu0 %2164
        %2166 = vrot.lane.b32.xlu0 %v1559, 111
        %v2167 = vpop.permute.xlu0 %2166
        %2168 = vrot.lane.b32.xlu0 %v1561, 111
        %v2169 = vpop.permute.xlu0 %2168
        %2170 = vrot.lane.b32.xlu0 %v1563, 111
        %v2171 = vpop.permute.xlu0 %2170
        %2172 = vrot.lane.b32.xlu0 %v1565, 111
        %v2173 = vpop.permute.xlu0 %2172
        %2174 = vrot.lane.b32.xlu0 %v1567, 111
        %v2175 = vpop.permute.xlu0 %2174
        %2176 = vrot.lane.b32.xlu0 %v1569, 111
        %v2177 = vpop.permute.xlu0 %2176
        %2178 = vrot.lane.b32.xlu0 %v1571, 111
        %v2179 = vpop.permute.xlu0 %2178
        %v2180 = vsel %vm1017, %v2149, %v2165
        %v2181 = vsel %vm1017, %v2151, %v2167
        %v2182 = vsel %vm1017, %v2153, %v2169
        %v2183 = vsel %vm1017, %v2155, %v2171
        %v2184 = vsel %vm1017, %v2157, %v2173
        %v2185 = vsel %vm1017, %v2159, %v2175
        %v2186 = vsel %vm1017, %v2161, %v2177
        %v2187 = vsel %vm1017, %v2163, %v2179
        %v2188 = vsel %vm1017, %v2165, %v2149
        %v2189 = vsel %vm1017, %v2167, %v2151
        %v2190 = vsel %vm1017, %v2169, %v2153
        %v2191 = vsel %vm1017, %v2171, %v2155
        %v2192 = vsel %vm1017, %v2173, %v2157
        %v2193 = vsel %vm1017, %v2175, %v2159
        %v2194 = vsel %vm1017, %v2177, %v2161
        %v2195 = vsel %vm1017, %v2179, %v2163
        %v2196 = vsel %vm1046, %v2180, 0.0
        %v2197 = vsel %vm1047, %v2188, 0.0
        %v2198 = vsel %vm1046, %v2181, 0.0
        %v2199 = vsel %vm1047, %v2189, 0.0
        %v2200 = vsel %vm1046, %v2182, 0.0
        %v2201 = vsel %vm1047, %v2190, 0.0
        %v2202 = vsel %vm1046, %v2183, 0.0
        %v2203 = vsel %vm1047, %v2191, 0.0
        %v2204 = vsel %vm1046, %v2184, 0.0
        %v2205 = vsel %vm1047, %v2192, 0.0
        %v2206 = vsel %vm1046, %v2185, 0.0
        %v2207 = vsel %vm1047, %v2193, 0.0
        %v2208 = vsel %vm1046, %v2186, 0.0
        %v2209 = vsel %vm1047, %v2194, 0.0
        %v2210 = vsel %vm1046, %v2187, 0.0
        %v2211 = vsel %vm1047, %v2195, 0.0
        %v2212 = vpack.c.bf16 %v2198, %v2196
        %v2213 = vpack.c.bf16 %v2199, %v2197
        %v2214 = vpack.c.bf16 %v2202, %v2200
        %v2215 = vpack.c.bf16 %v2203, %v2201
        %v2216 = vpack.c.bf16 %v2206, %v2204
        %v2217 = vpack.c.bf16 %v2207, %v2205
        %v2218 = vpack.c.bf16 %v2210, %v2208
        %v2219 = vpack.c.bf16 %v2211, %v2209
        %2220 = vst [vmem:[#allocation2 + $0x200] sm:$0xff] %v2212
        %2221 = vst [vmem:[#allocation2 + $0x208] sm:$0xff] %v2213
        %2222 = vst [vmem:[#allocation2 + $0x210] sm:$0xff] %v2214
        %2223 = vst [vmem:[#allocation2 + $0x218] sm:$0xff] %v2215
        %2224 = vst [vmem:[#allocation2 + $0x220] sm:$0xff] %v2216
        %2225 = vst [vmem:[#allocation2 + $0x228] sm:$0xff] %v2217
        %2226 = vst [vmem:[#allocation2 + $0x230] sm:$0xff] %v2218
        %2227 = vst [vmem:[#allocation2 + $0x238] sm:$0xff] %v2219
        %v2228 = vld [vmem:[#allocation8] sm:$0xff]
        %v2229 = vld [vmem:[#allocation8 + $0x8] sm:$0xff]
        %v2230 = vld [vmem:[#allocation8 + $0x10] sm:$0xf]
        %v2231 = vld [vmem:[#allocation8 + $0x14] sm:$0xff]
        %v2232 = vld [vmem:[#allocation8 + $0x1c] sm:$0xff]
        %v2233 = vld [vmem:[#allocation8 + $0x24] sm:$0xf]
        %v2234 = vld [vmem:[#allocation8 + $0x28] sm:$0xff]
        %v2235 = vld [vmem:[#allocation8 + $0x30] sm:$0xff]
        %v2236 = vld [vmem:[#allocation8 + $0x38] sm:$0xf]
        %v2237 = vld [vmem:[#allocation8 + $0x3c] sm:$0xff]
        %v2238 = vld [vmem:[#allocation8 + $0x44] sm:$0xff]
        %v2239 = vld [vmem:[#allocation8 + $0x4c] sm:$0xf]
        %v2240 = vld [vmem:[#allocation8 + $0x50] sm:$0xff]
        %v2241 = vld [vmem:[#allocation8 + $0x58] sm:$0xff]
        %v2242 = vld [vmem:[#allocation8 + $0x60] sm:$0xf]
        %v2243 = vld [vmem:[#allocation8 + $0x64] sm:$0xff]
        %v2244 = vld [vmem:[#allocation8 + $0x6c] sm:$0xff]
        %v2245 = vld [vmem:[#allocation8 + $0x74] sm:$0xf]
        %v2246 = vld [vmem:[#allocation8 + $0x78] sm:$0xff]
        %v2247 = vld [vmem:[#allocation8 + $0x80] sm:$0xff]
        %v2248 = vld [vmem:[#allocation8 + $0x88] sm:$0xf]
        %v2249 = vld [vmem:[#allocation8 + $0x8c] sm:$0xff]
        %v2250 = vld [vmem:[#allocation8 + $0x94] sm:$0xff]
        %v2251 = vld [vmem:[#allocation8 + $0x9c] sm:$0xf]
        %v2252 = vld [vmem:[#allocation2] sm:$0xff]
        %v2253 = vld [vmem:[#allocation2 + $0x8] sm:$0xff]
        %v2254 = vld [vmem:[#allocation2 + $0x10] sm:$0xff]
        %v2255 = vld [vmem:[#allocation2 + $0x18] sm:$0xff]
        %v2256 = vld [vmem:[#allocation2 + $0x20] sm:$0xff]
        %v2257 = vld [vmem:[#allocation2 + $0x28] sm:$0xff]
        %v2258 = vld [vmem:[#allocation2 + $0x30] sm:$0xff]
        %v2259 = vld [vmem:[#allocation2 + $0x38] sm:$0xff]
        %v2260 = vld [vmem:[#allocation2 + $0x40] sm:$0xff]
        %v2261 = vld [vmem:[#allocation2 + $0x48] sm:$0xff]
        %v2262 = vld [vmem:[#allocation2 + $0x50] sm:$0xff]
        %v2263 = vld [vmem:[#allocation2 + $0x58] sm:$0xff]
        %v2264 = vld [vmem:[#allocation2 + $0x60] sm:$0xff]
        %v2265 = vld [vmem:[#allocation2 + $0x68] sm:$0xff]
        %v2266 = vld [vmem:[#allocation2 + $0x70] sm:$0xff]
        %v2267 = vld [vmem:[#allocation2 + $0x78] sm:$0xff]
        %v2268 = vld [vmem:[#allocation2 + $0x80] sm:$0xff]
        %v2269 = vld [vmem:[#allocation2 + $0x88] sm:$0xff]
        %v2270 = vld [vmem:[#allocation2 + $0x90] sm:$0xff]
        %v2271 = vld [vmem:[#allocation2 + $0x98] sm:$0xff]
        %v2272 = vld [vmem:[#allocation2 + $0xa0] sm:$0xff]
        %v2273 = vld [vmem:[#allocation2 + $0xa8] sm:$0xff]
        %v2274 = vld [vmem:[#allocation2 + $0xb0] sm:$0xff]
        %v2275 = vld [vmem:[#allocation2 + $0xb8] sm:$0xff]
        %v2276 = vld [vmem:[#allocation2 + $0xc0] sm:$0xff]
        %v2277 = vld [vmem:[#allocation2 + $0xc8] sm:$0xff]
        %v2278 = vld [vmem:[#allocation2 + $0xd0] sm:$0xff]
        %v2279 = vld [vmem:[#allocation2 + $0xd8] sm:$0xff]
        %v2280 = vld [vmem:[#allocation2 + $0xe0] sm:$0xff]
        %v2281 = vld [vmem:[#allocation2 + $0xe8] sm:$0xff]
        %v2282 = vld [vmem:[#allocation2 + $0xf0] sm:$0xff]
        %v2283 = vld [vmem:[#allocation2 + $0xf8] sm:$0xff]
        %v2284 = vld [vmem:[#allocation2 + $0x100] sm:$0xff]
        %v2285 = vld [vmem:[#allocation2 + $0x108] sm:$0xff]
        %v2286 = vld [vmem:[#allocation2 + $0x110] sm:$0xff]
        %v2287 = vld [vmem:[#allocation2 + $0x118] sm:$0xff]
        %v2288 = vld [vmem:[#allocation2 + $0x120] sm:$0xff]
        %v2289 = vld [vmem:[#allocation2 + $0x128] sm:$0xff]
        %v2290 = vld [vmem:[#allocation2 + $0x130] sm:$0xff]
        %v2291 = vld [vmem:[#allocation2 + $0x138] sm:$0xff]
        %v2292 = vld [vmem:[#allocation2 + $0x140] sm:$0xff]
        %v2293 = vld [vmem:[#allocation2 + $0x148] sm:$0xff]
        %v2294 = vld [vmem:[#allocation2 + $0x150] sm:$0xff]
        %v2295 = vld [vmem:[#allocation2 + $0x158] sm:$0xff]
        %v2296 = vld [vmem:[#allocation2 + $0x160] sm:$0xff]
        %v2297 = vld [vmem:[#allocation2 + $0x168] sm:$0xff]
        %v2298 = vld [vmem:[#allocation2 + $0x170] sm:$0xff]
        %v2299 = vld [vmem:[#allocation2 + $0x178] sm:$0xff]
        %v2300 = vld [vmem:[#allocation2 + $0x180] sm:$0xff]
        %v2301 = vld [vmem:[#allocation2 + $0x188] sm:$0xff]
        %v2302 = vld [vmem:[#allocation2 + $0x190] sm:$0xff]
        %v2303 = vld [vmem:[#allocation2 + $0x198] sm:$0xff]
        %v2304 = vld [vmem:[#allocation2 + $0x1a0] sm:$0xff]
        %v2305 = vld [vmem:[#allocation2 + $0x1a8] sm:$0xff]
        %v2306 = vld [vmem:[#allocation2 + $0x1b0] sm:$0xff]
        %v2307 = vld [vmem:[#allocation2 + $0x1b8] sm:$0xff]
        %v2308 = vld [vmem:[#allocation2 + $0x1c0] sm:$0xff]
        %v2309 = vld [vmem:[#allocation2 + $0x1c8] sm:$0xff]
        %v2310 = vld [vmem:[#allocation2 + $0x1d0] sm:$0xff]
        %v2311 = vld [vmem:[#allocation2 + $0x1d8] sm:$0xff]
        %v2312 = vld [vmem:[#allocation2 + $0x1e0] sm:$0xff]
        %v2313 = vld [vmem:[#allocation2 + $0x1e8] sm:$0xff]
        %v2314 = vld [vmem:[#allocation2 + $0x1f0] sm:$0xff]
        %v2315 = vld [vmem:[#allocation2 + $0x1f8] sm:$0xff]
        %v2316 = vld [vmem:[#allocation2 + $0x200] sm:$0xff]
        %v2317 = vld [vmem:[#allocation2 + $0x208] sm:$0xff]
        %v2318 = vld [vmem:[#allocation2 + $0x210] sm:$0xff]
        %v2319 = vld [vmem:[#allocation2 + $0x218] sm:$0xff]
        %v2320 = vld [vmem:[#allocation2 + $0x220] sm:$0xff]
        %v2321 = vld [vmem:[#allocation2 + $0x228] sm:$0xff]
        %v2322 = vld [vmem:[#allocation2 + $0x230] sm:$0xff]
        %v2323 = vld [vmem:[#allocation2 + $0x238] sm:$0xff]
        %v2324 = vld [vmem:[%s5] sm:$0xff]
        %v2325 = vld [vmem:[%s5 + $0x8] sm:$0xff]
        %v2326 = vld [vmem:[%s5 + $0x10] sm:$0xff]
        %v2327 = vld [vmem:[%s5 + $0x18] sm:$0xff]
        %v2328 = vld [vmem:[%s5 + $0x20] sm:$0xff]
        %v2329 = vld [vmem:[%s5 + $0x28] sm:$0xff]
        %v2330 = vld [vmem:[%s5 + $0x30] sm:$0xff]
        %v2331 = vld [vmem:[%s5 + $0x38] sm:$0xff]
        %2333 = vset.pattern.permute.xlu0 0
        %2334 = vperm.xlu0 %2333, %v2324
        %v2335 = vpop.permute.xlu0 %2334
        %2338 = vset.pattern.permute.xlu0 0
        %2339 = vperm.xlu0 %2338, %v2325
        %v2340 = vpop.permute.xlu0 %2339
        %2343 = vset.pattern.permute.xlu0 0
        %2344 = vperm.xlu0 %2343, %v2326
        %v2345 = vpop.permute.xlu0 %2344
        %2348 = vset.pattern.permute.xlu0 0
        %2349 = vperm.xlu0 %2348, %v2327
        %v2350 = vpop.permute.xlu0 %2349
        %2353 = vset.pattern.permute.xlu0 0
        %2354 = vperm.xlu0 %2353, %v2328
        %v2355 = vpop.permute.xlu0 %2354
        %2358 = vset.pattern.permute.xlu0 0
        %2359 = vperm.xlu0 %2358, %v2329
        %v2360 = vpop.permute.xlu0 %2359
        %2363 = vset.pattern.permute.xlu0 0
        %2364 = vperm.xlu0 %2363, %v2330
        %v2365 = vpop.permute.xlu0 %2364
        %2368 = vset.pattern.permute.xlu0 0
        %2369 = vperm.xlu0 %2368, %v2331
        %v2370 = vpop.permute.xlu0 %2369
        %v2396 = vunpack.c.l.b16 %v2228
        %v2397 = vunpack.c.h.b16 %v2228
        %v2398 = vunpack.c.l.b16 %v2229
        %v2399 = vunpack.c.h.b16 %v2229
        %v2400 = vunpack.c.l.b16 %v2230
        %v2401 = vunpack.c.l.b16 %v2231
        %v2402 = vunpack.c.h.b16 %v2231
        %v2403 = vunpack.c.l.b16 %v2232
        %v2404 = vunpack.c.h.b16 %v2232
        %v2405 = vunpack.c.l.b16 %v2233
        %v2406 = vunpack.c.l.b16 %v2234
        %v2407 = vunpack.c.h.b16 %v2234
        %v2408 = vunpack.c.l.b16 %v2235
        %v2409 = vunpack.c.h.b16 %v2235
        %v2410 = vunpack.c.l.b16 %v2236
        %v2411 = vunpack.c.l.b16 %v2237
        %v2412 = vunpack.c.h.b16 %v2237
        %v2413 = vunpack.c.l.b16 %v2238
        %v2414 = vunpack.c.h.b16 %v2238
        %v2415 = vunpack.c.l.b16 %v2239
        %v2416 = vunpack.c.l.b16 %v2240
        %v2417 = vunpack.c.h.b16 %v2240
        %v2418 = vunpack.c.l.b16 %v2241
        %v2419 = vunpack.c.h.b16 %v2241
        %v2420 = vunpack.c.l.b16 %v2242
        %v2421 = vunpack.c.l.b16 %v2243
        %v2422 = vunpack.c.h.b16 %v2243
        %v2423 = vunpack.c.l.b16 %v2244
        %v2424 = vunpack.c.h.b16 %v2244
        %v2425 = vunpack.c.l.b16 %v2245
        %v2426 = vunpack.c.l.b16 %v2246
        %v2427 = vunpack.c.h.b16 %v2246
        %v2428 = vunpack.c.l.b16 %v2247
        %v2429 = vunpack.c.h.b16 %v2247
        %v2430 = vunpack.c.l.b16 %v2248
        %v2431 = vunpack.c.l.b16 %v2249
        %v2432 = vunpack.c.h.b16 %v2249
        %v2433 = vunpack.c.l.b16 %v2250
        %v2434 = vunpack.c.h.b16 %v2250
        %v2435 = vunpack.c.l.b16 %v2251
        %v2436 = vpack.c.b16 %v2401, %v2396
        %v2437 = vpack.c.b16 %v2402, %v2397
        %v2438 = vpack.c.b16 %v2403, %v2398
        %v2439 = vpack.c.b16 %v2404, %v2399
        %v2440 = vpack.c.b16 %v2405, %v2400
        %v2441 = vpack.c.b16 %v2411, %v2406
        %v2442 = vpack.c.b16 %v2412, %v2407
        %v2443 = vpack.c.b16 %v2413, %v2408
        %v2444 = vpack.c.b16 %v2414, %v2409
        %v2445 = vpack.c.b16 %v2415, %v2410
        %v2446 = vpack.c.b16 %v2421, %v2416
        %v2447 = vpack.c.b16 %v2422, %v2417
        %v2448 = vpack.c.b16 %v2423, %v2418
        %v2449 = vpack.c.b16 %v2424, %v2419
        %v2450 = vpack.c.b16 %v2425, %v2420
        %v2451 = vpack.c.b16 %v2431, %v2426
        %v2452 = vpack.c.b16 %v2432, %v2427
        %v2453 = vpack.c.b16 %v2433, %v2428
        %v2454 = vpack.c.b16 %v2434, %v2429
        %v2455 = vpack.c.b16 %v2435, %v2430
        %v2473 = vsel %vm1324, %v2440, 0
        %v2476 = vsel %vm1324, %v2445, 0
        %v2479 = vsel %vm1324, %v2450, 0
        %v2482 = vsel %vm1324, %v2455, 0
        %2484 = vmatprep.subr.bf16.mxu0 %v2253
        %2485 = vmatpush1.bf16.msra.mxu0 %v2252
        %2486 = vmatprep.subr.bf16.mxu0 %v2255
        %2487 = vmatpush1.bf16.msra.mxu0 %v2254
        %2488 = vmatprep.subr.bf16.mxu0 %v2257
        %2489 = vmatpush1.bf16.msra.mxu0 %v2256
        %2490 = vmatprep.subr.bf16.mxu0 %v2259
        %2491 = vmatpush1.bf16.msra.mxu0 %v2258
        %2492 = vmatprep.subr.bf16.mxu0 %v2261
        %2493 = vmatpush1.bf16.msra.mxu0 %v2260
        %2494 = vmatprep.subr.bf16.mxu0 %v2263
        %2495 = vmatpush1.bf16.msra.mxu0 %v2262
        %2496 = vmatprep.subr.bf16.mxu0 %v2265
        %2497 = vmatpush1.bf16.msra.mxu0 %v2264
        %2498 = vmatprep.subr.bf16.mxu0 %v2267
        %2499 = vmatpush1.bf16.msra.mxu0 %v2266
        %2500 = vmatprep.subr.bf16.mxu0 %v2269
        %2501 = vmatpush1.bf16.msra.mxu0 %v2268
        %2502 = vmatprep.subr.bf16.mxu0 %v2271
        %2503 = vmatpush1.bf16.msra.mxu0 %v2270
        %2504 = vmatprep.subr.bf16.mxu0 %v2273
        %2505 = vmatpush1.bf16.msra.mxu0 %v2272
        %2506 = vmatprep.subr.bf16.mxu0 %v2275
        %2507 = vmatpush1.bf16.msra.mxu0 %v2274
        %2508 = vmatprep.subr.bf16.mxu0 %v2277
        %2509 = vmatpush1.bf16.msra.mxu0 %v2276
        %2510 = vmatprep.subr.bf16.mxu0 %v2279
        %2511 = vmatpush1.bf16.msra.mxu0 %v2278
        %2512 = vmatprep.subr.bf16.mxu0 %v2281
        %2513 = vmatpush1.bf16.msra.mxu0 %v2280
        %2514 = vmatprep.subr.bf16.mxu0 %v2283
        %2515 = vmatpush1.bf16.msra.mxu0 %v2282
        %2516 = vmatprep.mubr.bf16.mxu0 %v2437
        %2517 = vmatmul.mubr.bf16.gmra.mrb[0].mxu0 %v2436
        %v2518 = vpop.f32.mrb[0].mxu0
        %v2519 = vadd.f32 %v2335, %v2518
        %v2520 = vpop.f32.mrb[0].mxu0
        %v2521 = vadd.f32 %v2335, %v2520
        %v2522 = vpop.f32.mrb[0].mxu0
        %v2523 = vadd.f32 %v2340, %v2522
        %v2524 = vpop.f32.mrb[0].mxu0
        %v2525 = vadd.f32 %v2340, %v2524
        %2526 = vmatprep.mubr.bf16.mxu0 %v2442
        %2527 = vmatmul.mubr.bf16.gmra.mrb[0].mxu0 %v2441
        %v2528 = vpop.f32.mrb[0].mxu0
        %v2529 = vadd.f32 %v2345, %v2528
        %v2530 = vpop.f32.mrb[0].mxu0
        %v2531 = vadd.f32 %v2345, %v2530
        %v2532 = vpop.f32.mrb[0].mxu0
        %v2533 = vadd.f32 %v2350, %v2532
        %v2534 = vpop.f32.mrb[0].mxu0
        %v2535 = vadd.f32 %v2350, %v2534
        %2536 = vmatprep.mubr.bf16.mxu0 %v2447
        %2537 = vmatmul.mubr.bf16.gmra.mrb[0].mxu0 %v2446
        %v2538 = vpop.f32.mrb[0].mxu0
        %v2539 = vadd.f32 %v2355, %v2538
        %v2540 = vpop.f32.mrb[0].mxu0
        %v2541 = vadd.f32 %v2355, %v2540
        %v2542 = vpop.f32.mrb[0].mxu0
        %v2543 = vadd.f32 %v2360, %v2542
        %v2544 = vpop.f32.mrb[0].mxu0
        %v2545 = vadd.f32 %v2360, %v2544
        %2546 = vmatprep.mubr.bf16.mxu0 %v2452
        %2547 = vmatmul.mubr.bf16.gmra.mrb[0].mxu0 %v2451
        %v2548 = vpop.f32.mrb[0].mxu0
        %v2549 = vadd.f32 %v2365, %v2548
        %v2550 = vpop.f32.mrb[0].mxu0
        %v2551 = vadd.f32 %v2365, %v2550
        %v2552 = vpop.f32.mrb[0].mxu0
        %v2553 = vadd.f32 %v2370, %v2552
        %v2554 = vpop.f32.mrb[0].mxu0
        %v2555 = vadd.f32 %v2370, %v2554
        %2556 = vdwg.mxu0
        %2557 = vmatprep.subr.bf16.mxu0 %v2285
        %2558 = vmatpush1.bf16.msra.mxu0 %v2284
        %2559 = vmatprep.subr.bf16.mxu0 %v2287
        %2560 = vmatpush1.bf16.msra.mxu0 %v2286
        %2561 = vmatprep.subr.bf16.mxu0 %v2289
        %2562 = vmatpush1.bf16.msra.mxu0 %v2288
        %2563 = vmatprep.subr.bf16.mxu0 %v2291
        %2564 = vmatpush1.bf16.msra.mxu0 %v2290
        %2565 = vmatprep.subr.bf16.mxu0 %v2293
        %2566 = vmatpush1.bf16.msra.mxu0 %v2292
        %2567 = vmatprep.subr.bf16.mxu0 %v2295
        %2568 = vmatpush1.bf16.msra.mxu0 %v2294
        %2569 = vmatprep.subr.bf16.mxu0 %v2297
        %2570 = vmatpush1.bf16.msra.mxu0 %v2296
        %2571 = vmatprep.subr.bf16.mxu0 %v2299
        %2572 = vmatpush1.bf16.msra.mxu0 %v2298
        %2573 = vmatprep.subr.bf16.mxu0 %v2301
        %2574 = vmatpush1.bf16.msra.mxu0 %v2300
        %2575 = vmatprep.subr.bf16.mxu0 %v2303
        %2576 = vmatpush1.bf16.msra.mxu0 %v2302
        %2577 = vmatprep.subr.bf16.mxu0 %v2305
        %2578 = vmatpush1.bf16.msra.mxu0 %v2304
        %2579 = vmatprep.subr.bf16.mxu0 %v2307
        %2580 = vmatpush1.bf16.msra.mxu0 %v2306
        %2581 = vmatprep.subr.bf16.mxu0 %v2309
        %2582 = vmatpush1.bf16.msra.mxu0 %v2308
        %2583 = vmatprep.subr.bf16.mxu0 %v2311
        %2584 = vmatpush1.bf16.msra.mxu0 %v2310
        %2585 = vmatprep.subr.bf16.mxu0 %v2313
        %2586 = vmatpush1.bf16.msra.mxu0 %v2312
        %2587 = vmatprep.subr.bf16.mxu0 %v2315
        %2588 = vmatpush1.bf16.msra.mxu0 %v2314
        %2589 = vmatprep.mubr.bf16.mxu0 %v2439
        %2590 = vmatmul.mubr.bf16.gmra.mrb[0].mxu0 %v2438
        %v2591 = vpop.f32.mrb[0].mxu0
        %v2592 = vadd.f32 %v2519, %v2591
        %v2593 = vpop.f32.mrb[0].mxu0
        %v2594 = vadd.f32 %v2521, %v2593
        %v2595 = vpop.f32.mrb[0].mxu0
        %v2596 = vadd.f32 %v2523, %v2595
        %v2597 = vpop.f32.mrb[0].mxu0
        %v2598 = vadd.f32 %v2525, %v2597
        %2599 = vmatprep.mubr.bf16.mxu0 %v2444
        %2600 = vmatmul.mubr.bf16.gmra.mrb[0].mxu0 %v2443
        %v2601 = vpop.f32.mrb[0].mxu0
        %v2602 = vadd.f32 %v2529, %v2601
        %v2603 = vpop.f32.mrb[0].mxu0
        %v2604 = vadd.f32 %v2531, %v2603
        %v2605 = vpop.f32.mrb[0].mxu0
        %v2606 = vadd.f32 %v2533, %v2605
        %v2607 = vpop.f32.mrb[0].mxu0
        %v2608 = vadd.f32 %v2535, %v2607
        %2609 = vmatprep.mubr.bf16.mxu0 %v2449
        %2610 = vmatmul.mubr.bf16.gmra.mrb[0].mxu0 %v2448
        %v2611 = vpop.f32.mrb[0].mxu0
        %v2612 = vadd.f32 %v2539, %v2611
        %v2613 = vpop.f32.mrb[0].mxu0
        %v2614 = vadd.f32 %v2541, %v2613
        %v2615 = vpop.f32.mrb[0].mxu0
        %v2616 = vadd.f32 %v2543, %v2615
        %v2617 = vpop.f32.mrb[0].mxu0
        %v2618 = vadd.f32 %v2545, %v2617
        %2619 = vmatprep.mubr.bf16.mxu0 %v2454
        %2620 = vmatmul.mubr.bf16.gmra.mrb[0].mxu0 %v2453
        %v2621 = vpop.f32.mrb[0].mxu0
        %v2622 = vadd.f32 %v2549, %v2621
        %v2623 = vpop.f32.mrb[0].mxu0
        %v2624 = vadd.f32 %v2551, %v2623
        %v2625 = vpop.f32.mrb[0].mxu0
        %v2626 = vadd.f32 %v2553, %v2625
        %v2627 = vpop.f32.mrb[0].mxu0
        %v2628 = vadd.f32 %v2555, %v2627
        %2629 = vdwg.mxu0
        %2630 = vmatprep.subr.bf16.mxu0 %v2317
        %2631 = vmatpush1.bf16.msra.mxu0 %v2316
        %2632 = vmatprep.subr.bf16.mxu0 %v2319
        %2633 = vmatpush1.bf16.msra.mxu0 %v2318
        %2634 = vmatprep.subr.bf16.mxu0 %v2321
        %2635 = vmatpush1.bf16.msra.mxu0 %v2320
        %2636 = vmatprep.subr.bf16.mxu0 %v2323
        %2637 = vmatpush1.bf16.msra.mxu0 %v2322
        %2638 = vmatprep.subr.bf16.mxu0 0
        %2639 = vmatpush1.bf16.msra.mxu0 0
        %2640 = vmatprep.subr.bf16.mxu0 0
        %2641 = vmatpush1.bf16.msra.mxu0 0
        %2642 = vmatprep.subr.bf16.mxu0 0
        %2643 = vmatpush1.bf16.msra.mxu0 0
        %2644 = vmatprep.subr.bf16.mxu0 0
        %2645 = vmatpush1.bf16.msra.mxu0 0
        %2646 = vmatprep.subr.bf16.mxu0 0
        %2647 = vmatpush1.bf16.msra.mxu0 0
        %2648 = vmatprep.subr.bf16.mxu0 0
        %2649 = vmatpush1.bf16.msra.mxu0 0
        %2650 = vmatprep.subr.bf16.mxu0 0
        %2651 = vmatpush1.bf16.msra.mxu0 0
        %2652 = vmatprep.subr.bf16.mxu0 0
        %2653 = vmatpush1.bf16.msra.mxu0 0
        %2654 = vmatprep.subr.bf16.mxu0 0
        %2655 = vmatpush1.bf16.msra.mxu0 0
        %2656 = vmatprep.subr.bf16.mxu0 0
        %2657 = vmatpush1.bf16.msra.mxu0 0
        %2658 = vmatprep.subr.bf16.mxu0 0
        %2659 = vmatpush1.bf16.msra.mxu0 0
        %2660 = vmatprep.subr.bf16.mxu0 0
        %2661 = vmatpush1.bf16.msra.mxu0 0
        %2662 = vmatprep.mubr.bf16.mxu0 0
        %2663 = vmatmul.mubr.bf16.gmra.mrb[0].mxu0 %v2473
        %v2664 = vpop.f32.mrb[0].mxu0
        %v2665 = vadd.f32 %v2592, %v2664
        %v2666 = vpop.f32.mrb[0].mxu0
        %v2667 = vadd.f32 %v2594, %v2666
        %v2668 = vpop.f32.mrb[0].mxu0
        %v2669 = vadd.f32 %v2596, %v2668
        %v2670 = vpop.f32.mrb[0].mxu0
        %v2671 = vadd.f32 %v2598, %v2670
        %2672 = vmatprep.mubr.bf16.mxu0 0
        %2673 = vmatmul.mubr.bf16.gmra.mrb[0].mxu0 %v2476
        %v2674 = vpop.f32.mrb[0].mxu0
        %v2675 = vadd.f32 %v2602, %v2674
        %v2676 = vpop.f32.mrb[0].mxu0
        %v2677 = vadd.f32 %v2604, %v2676
        %v2678 = vpop.f32.mrb[0].mxu0
        %v2679 = vadd.f32 %v2606, %v2678
        %v2680 = vpop.f32.mrb[0].mxu0
        %v2681 = vadd.f32 %v2608, %v2680
        %2682 = vmatprep.mubr.bf16.mxu0 0
        %2683 = vmatmul.mubr.bf16.gmra.mrb[0].mxu0 %v2479
        %v2684 = vpop.f32.mrb[0].mxu0
        %v2685 = vadd.f32 %v2612, %v2684
        %v2686 = vpop.f32.mrb[0].mxu0
        %v2687 = vadd.f32 %v2614, %v2686
        %v2688 = vpop.f32.mrb[0].mxu0
        %v2689 = vadd.f32 %v2616, %v2688
        %v2690 = vpop.f32.mrb[0].mxu0
        %v2691 = vadd.f32 %v2618, %v2690
        %2692 = vmatprep.mubr.bf16.mxu0 0
        %2693 = vmatmul.mubr.bf16.gmra.mrb[0].mxu0 %v2482
        %v2694 = vpop.f32.mrb[0].mxu0
        %v2695 = vadd.f32 %v2622, %v2694
        %v2696 = vpop.f32.mrb[0].mxu0
        %v2697 = vadd.f32 %v2624, %v2696
        %v2698 = vpop.f32.mrb[0].mxu0
        %v2699 = vadd.f32 %v2626, %v2698
        %v2700 = vpop.f32.mrb[0].mxu0
        %v2701 = vadd.f32 %v2628, %v2700
        %2702 = vdwg.mxu0
        %v2703 = vld [vmem:[%s262] sm:$0xff]
        %v2704 = vld [vmem:[%s262 + $0x8] sm:$0xff]
        %v2705 = vld [vmem:[%s262 + $0x10] sm:$0xff]
        %v2706 = vld [vmem:[%s262 + $0x18] sm:$0xff]
        %v2707 = vld [vmem:[%s262 + $0x20] sm:$0xff]
        %v2708 = vld [vmem:[%s262 + $0x28] sm:$0xff]
        %v2709 = vld [vmem:[%s262 + $0x30] sm:$0xff]
        %v2710 = vld [vmem:[%s262 + $0x38] sm:$0xff]
        %v2711 = vld [vmem:[%s262 + $0x40] sm:$0xff]
        %v2712 = vld [vmem:[%s262 + $0x48] sm:$0xff]
        %v2713 = vld [vmem:[%s262 + $0x50] sm:$0xff]
        %v2714 = vld [vmem:[%s262 + $0x58] sm:$0xff]
        %v2715 = vld [vmem:[%s262 + $0x60] sm:$0xff]
        %v2716 = vld [vmem:[%s262 + $0x68] sm:$0xff]
        %v2717 = vld [vmem:[%s262 + $0x70] sm:$0xff]
        %v2718 = vld [vmem:[%s262 + $0x78] sm:$0xff]
        %v2719 = vadd.f32 %v2703, %v2665
        %v2720 = vadd.f32 %v2704, %v2667
        %v2721 = vadd.f32 %v2705, %v2669
        %v2722 = vadd.f32 %v2706, %v2671
        %v2723 = vadd.f32 %v2707, %v2675
        %v2724 = vadd.f32 %v2708, %v2677
        %v2725 = vadd.f32 %v2709, %v2679
        %v2726 = vadd.f32 %v2710, %v2681
        %v2727 = vadd.f32 %v2711, %v2685
        %v2728 = vadd.f32 %v2712, %v2687
        %v2729 = vadd.f32 %v2713, %v2689
        %v2730 = vadd.f32 %v2714, %v2691
        %v2731 = vadd.f32 %v2715, %v2695
        %v2732 = vadd.f32 %v2716, %v2697
        %v2733 = vadd.f32 %v2717, %v2699
        %v2734 = vadd.f32 %v2718, %v2701
        %2735 = vst [vmem:[%s298] sm:$0xff] %v2719
        %2736 = vst [vmem:[%s298 + $0x8] sm:$0xff] %v2720
        %2737 = vst [vmem:[%s298 + $0x10] sm:$0xff] %v2721
        %2738 = vst [vmem:[%s298 + $0x18] sm:$0xff] %v2722
        %2739 = vst [vmem:[%s298 + $0x20] sm:$0xff] %v2723
        %2740 = vst [vmem:[%s298 + $0x28] sm:$0xff] %v2724
        %2741 = vst [vmem:[%s298 + $0x30] sm:$0xff] %v2725
        %2742 = vst [vmem:[%s298 + $0x38] sm:$0xff] %v2726
        %2743 = vst [vmem:[%s298 + $0x40] sm:$0xff] %v2727
        %2744 = vst [vmem:[%s298 + $0x48] sm:$0xff] %v2728
        %2745 = vst [vmem:[%s298 + $0x50] sm:$0xff] %v2729
        %2746 = vst [vmem:[%s298 + $0x58] sm:$0xff] %v2730
        %2747 = vst [vmem:[%s298 + $0x60] sm:$0xff] %v2731
        %2748 = vst [vmem:[%s298 + $0x68] sm:$0xff] %v2732
        %2749 = vst [vmem:[%s298 + $0x70] sm:$0xff] %v2733
        %2750 = vst [vmem:[%s298 + $0x78] sm:$0xff] %v2734
        %s2751 = sand.u32 %s163, 1
        %s2752 = scalar_lea.sflag [#allocation5], %s2751
        %s2753 = sand.u32 %s163, 1
        %s2754 = smul.addr %s2753, 128
        %s2755 = scalar_lea.vmem [#allocation9], %s2754
        // Predicated region
        $region57: #{tpu_custom_call.1} parent=43 // pred_check
          %p2756 = pneg %p173
        $region58: #{tpu_custom_call.1} parent=43 // pred_check_branch
          %2758 = sbr.rel (%p2756) target = $region60
        $region59: #{tpu_custom_call.1} parent=43 // pred_region
          %s2760 = ssub.s32 2048, 2048
          %2761 = vsyncadd %s2752, %s2760
          %s2762 = smul.addr %s24, 16
          %s2763 = smul.addr %s2762, 128
          %s2764 = scalar_lea.hbm %s6, %s2763
          %s2765 = sshll.u32 %s2755, 4
          %s2766 = int_to_ptr.vmem [resolvable:$true] %s2765
          %2771 = dma.vmem_to_hbm [thread:$0]  %s2766, 2048, %s2764, %s2752, 256, 256, 16
        $region60: #{tpu_custom_call.1} parent=43 // pred_fallthru
          _
      $region44: #{tpu_custom_call.1} parent=5 // pred_fallthru
        _
      %p2772 = scmp.le.s32.totalorder 2, %s19
      // Predicated region
      $region61: #{tpu_custom_call.1} parent=5 // pred_check
        %p2773 = pneg %p2772
      $region62: #{tpu_custom_call.1} parent=5 // pred_check_branch
        %2775 = sbr.rel (%p2773) target = $region64
      $region63: #{tpu_custom_call.1} parent=5 // pred_region
        %s2776 = ssub.s32 %s19, 2
        // Predicated region
        $region65: #{tpu_custom_call.1} parent=63 // pred_check
          %p2777 = pneg %p179
        $region66: #{tpu_custom_call.1} parent=63 // pred_check_branch
          %2779 = sbr.rel (%p2777) target = $region68
        $region67: #{tpu_custom_call.1} parent=63 // pred_region
          %s2780 = sand.u32 %s164, 1
          %s2781 = scalar_lea.sflag [#allocation5], %s2780
          %s2782 = sand.u32 %s164, 1
          %s2783 = smul.addr %s2782, 128
          %s2784 = scalar_lea.vmem [#allocation9], %s2783
          %2785 = dma.done %s2781, 2048
        $region68: #{tpu_custom_call.1} parent=63 // pred_fallthru
          _
      $region64: #{tpu_custom_call.1} parent=5 // pred_fallthru
        _
    $region6: #{tpu_custom_call.1} parent=1 // loop_footer
      %s23 = sadd.s32 1, %s19
    $region7: #{tpu_custom_call.1} parent=1 // loop_footer_branch
      %18 = sbr.rel target = $region3
    $region8: #{tpu_custom_call.1} parent=1 // loop_exit
      _
    %2786 = vsyncpa [#allocation4], 1
    %s2787 = scalar_lea.sflag [#allocation4], 1
    %2788 = vsyncpa %s2787, 1
    %2789 = vsyncpa [#allocation7], 1
    %2790 = vsyncpa [#allocation5], 1
    %s2791 = scalar_lea.sflag [#allocation5], 1
    %2792 = vsyncpa %s2791, 1

</llo_original>
